<compile_context>
chip_gen: v7x
topology: tpu7x:2x2x1
jax: 0.10.0
libtpu: 0.0.40
codegen_flags: <defaults>
</compile_context>

<pallas_src>
import functools

import jax
import jax.numpy as jnp
from jax import lax
from jax.experimental import pallas as pl
from jax.experimental.pallas import tpu as pltpu

BN_EPS = 1e-5


def _round_up(x, m):
    return ((x + m - 1) // m) * m


# ---------------------------------------------------------------------------
# Kernel 1: [producer BN affine + ReLU] -> sub-pixel deconv -> raw output
#           + per-image BN partial stats of THIS layer's output.
# ---------------------------------------------------------------------------
def _deconv_kernel(x_ref, w_ref, s_ref, b_ref, y_ref, stats_ref, st_ref, *, relu):
    # x_ref : (H+1, W+1, Cin) bf16  raw (pre-BN) input, zero halo bottom/right
    # w_ref : (4, Cin, Np)    bf16  phase weights (shift-major rows)
    # s_ref : (1, Cin) f32          producer BN scale (identity for layer 0)
    # b_ref : (1, Cin) f32          producer BN bias
    # y_ref : (H, W, Np)      bf16  raw deconv output (pre-BN, phase-major cols)
    # stats_ref : (1, 2, Np)  f32   per-image [sum, sumsq] of the raw output
    # st_ref    : (2, Np)     f32   VMEM scratch
    H, W = y_ref.shape[0], y_ref.shape[1]
    Wp1 = x_ref.shape[1]

    st_ref[...] = jnp.zeros_like(st_ref)
    colmask = lax.broadcasted_iota(jnp.int32, (Wp1, 1), 0) < W

    def act(raw, rowvalid):
        a = raw.astype(jnp.float32) * s_ref[...] + b_ref[...]
        if relu:
            a = jnp.maximum(a, 0.0)
        # Zero the halo column / invalid row AFTER the affine, so the deconv
        # sees the activated input zero-padded (ConvTranspose semantics).
        a = jnp.where(jnp.logical_and(colmask, rowvalid), a, 0.0)
        return a.astype(jnp.bfloat16)

    def body(h, carry):
        r0 = act(x_ref[h], True)
        r1 = act(x_ref[h + 1], (h + 1) < H)
        row = (jnp.dot(r0[:W], w_ref[0], preferred_element_type=jnp.float32)
               + jnp.dot(r0[1:], w_ref[1], preferred_element_type=jnp.float32)
               + jnp.dot(r1[:W], w_ref[2], preferred_element_type=jnp.float32)
               + jnp.dot(r1[1:], w_ref[3], preferred_element_type=jnp.float32))
        y_ref[h] = row.astype(y_ref.dtype)
        st_ref[0:1, :] += jnp.sum(row, axis=0, keepdims=True)
        st_ref[1:2, :] += jnp.sum(row * row, axis=0, keepdims=True)
        return carry

    lax.fori_loop(0, H, body, 0)
    stats_ref[0] = st_ref[...]


# ---------------------------------------------------------------------------
# Kernel 2: [producer BN affine + ReLU] -> 7x7 conv (49 in-VMEM taps)
#           -> + bias -> tanh (bf16 lane-dense output).
# ---------------------------------------------------------------------------
def _conv7_kernel(x_ref, w_ref, s_ref, b_ref, cb_ref, o_ref, *, relu):
    # x_ref : (H+6, W+6, Cin) bf16  reflection-padded raw (pre-BN) activation
    # w_ref : (7, 7, Cin, Np) bf16  conv taps, Np = pad(Cout, 128)
    # s_ref, b_ref : (1, Cin) f32   producer BN scale / bias
    # cb_ref : (1, Np) f32          conv bias
    # o_ref : (H, W, Np)      bf16  tanh output
    OH, OW, Np = o_ref.shape

    def body(h, carry):
        acc = jnp.zeros((OW, Np), jnp.float32)
        for ki in range(7):
            r = x_ref[h + ki].astype(jnp.float32) * s_ref[...] + b_ref[...]
            if relu:
                r = jnp.maximum(r, 0.0)
            r = r.astype(jnp.bfloat16)
            for kj in range(7):
                acc = acc + jnp.dot(r[kj:kj + OW], w_ref[ki, kj],
                                    preferred_element_type=jnp.float32)
        o_ref[h] = jnp.tanh(acc + cb_ref[...]).astype(o_ref.dtype)
        return carry

    lax.fori_loop(0, OH, body, 0)


# ---------------------------------------------------------------------------
# Layer wrappers
# ---------------------------------------------------------------------------
def deconv_bn_relu_layer(x_raw, w_t, gamma, beta, scale_in, bias_in, relu_in):
    """ConvTranspose2d(k=3,s=2,p=1,op=1,bias=False) + BatchNorm2d + ReLU.

    `x_raw` is the *pre-activation* NHWC input (bf16); the producer layer's
    BN affine + ReLU (scale_in/bias_in/relu_in) is folded into the A loads.
    Returns (raw pixel-shuffled output, this layer's BN scale, BN bias)."""
    N, H, W, Cin = x_raw.shape
    Cout = w_t.shape[1]
    Np = _round_up(4 * Cout, 128)

    # Regular-conv-equivalent kernel (spatial flip + in/out swap), then the
    # four sub-pixel phase filters: shift-major rows, phase-major columns.
    wc = jnp.transpose(w_t[:, :, ::-1, ::-1], (2, 3, 0, 1)).astype(jnp.float32)
    Z = jnp.zeros((Cin, Cout), jnp.float32)
    w_phase = jnp.stack([
        jnp.concatenate([wc[1, 1], wc[1, 0], wc[0, 1], wc[0, 0]], axis=1),
        jnp.concatenate([Z,        wc[1, 2], Z,        wc[0, 2]], axis=1),
        jnp.concatenate([Z,        Z,        wc[2, 1], wc[2, 0]], axis=1),
        jnp.concatenate([Z,        Z,        Z,        wc[2, 2]], axis=1),
    ], axis=0)                                                  # (4, Cin, 4*Cout)
    w_phase = jnp.pad(w_phase, ((0, 0), (0, 0), (0, Np - 4 * Cout))
                      ).astype(jnp.bfloat16)

    # 1-element bottom/right halo so the kernel can read rows h,h+1 and
    # columns w,w+1 unconditionally (halo is masked post-affine in-kernel).
    xp = jnp.pad(x_raw.astype(jnp.bfloat16), ((0, 0), (0, 1), (0, 1), (0, 0)))
    xp = xp.reshape(N * (H + 1), W + 1, Cin)

    y, stats = pl.pallas_call(
        functools.partial(_deconv_kernel, relu=relu_in),
        out_shape=(jax.ShapeDtypeStruct((N * H, W, Np), jnp.bfloat16),
                   jax.ShapeDtypeStruct((N, 2, Np), jnp.float32)),
        grid=(N,),
        in_specs=[
            pl.BlockSpec((H + 1, W + 1, Cin), lambda n: (n, 0, 0)),
            pl.BlockSpec((4, Cin, Np), lambda n: (0, 0, 0)),
            pl.BlockSpec((1, Cin), lambda n: (0, 0)),
            pl.BlockSpec((1, Cin), lambda n: (0, 0)),
        ],
        out_specs=(
            pl.BlockSpec((H, W, Np), lambda n: (n, 0, 0)),
            pl.BlockSpec((1, 2, Np), lambda n: (n, 0, 0)),
        ),
        scratch_shapes=[pltpu.VMEM((2, Np), jnp.float32)],
        compiler_params=pltpu.CompilerParams(
            dimension_semantics=("parallel",)),
    )(xp, w_phase, scale_in, bias_in)

    # Batch statistics of THIS layer's output (fold the 4 phases per channel).
    s = jnp.sum(stats[:, 0, :4 * Cout], axis=0).reshape(4, Cout).sum(axis=0)
    ssq = jnp.sum(stats[:, 1, :4 * Cout], axis=0).reshape(4, Cout).sum(axis=0)
    cnt = 4.0 * N * H * W                                  # = N * 2H * 2W
    mean = s / cnt
    var = jnp.maximum(ssq / cnt - mean * mean, 0.0)        # guard cancellation
    scale_out = gamma / jnp.sqrt(var + BN_EPS)
    bias_out = beta - mean * scale_out

    # Pixel-shuffle the RAW output into NHWC for the next consumer (BN+ReLU
    # of this layer is applied lazily by that consumer).
    a = y[:, :, :4 * Cout].reshape(N, H, W, 2, 2, Cout)
    a = jnp.transpose(a, (0, 1, 3, 2, 4, 5)).reshape(N, 2 * H, 2 * W, Cout)
    return a, scale_out.reshape(1, Cout), bias_out.reshape(1, Cout)


def reflectpad_conv7_tanh(x_raw, w, b, scale_in, bias_in, relu_in):
    """ReflectionPad2d(3) + Conv2d(k=7) + Tanh, with the producer's BN affine
    + ReLU folded into the tap loads (reflection commutes with pointwise)."""
    N, H, W, Cin = x_raw.shape
    Cout = w.shape[0]
    Np = _round_up(Cout, 128)

    xp = jnp.pad(x_raw.astype(jnp.bfloat16),
                 ((0, 0), (3, 3), (3, 3), (0, 0)), mode="reflect")
    xp = xp.reshape(N * (H + 6), W + 6, Cin)

    w_taps = jnp.transpose(w, (2, 3, 1, 0))                    # (7,7,Cin,Cout)
    w_taps = jnp.pad(w_taps, ((0, 0), (0, 0), (0, 0), (0, Np - Cout))
                     ).astype(jnp.bfloat16)
    cbias = jnp.pad(b.astype(jnp.float32), (0, Np - Cout)).reshape(1, Np)

    o = pl.pallas_call(
        functools.partial(_conv7_kernel, relu=relu_in),
        out_shape=jax.ShapeDtypeStruct((N * H, W, Np), jnp.bfloat16),
        grid=(N,),
        in_specs=[
            pl.BlockSpec((H + 6, W + 6, Cin), lambda n: (n, 0, 0)),
            pl.BlockSpec((7, 7, Cin, Np), lambda n: (0, 0, 0, 0)),
            pl.BlockSpec((1, Cin), lambda n: (0, 0)),
            pl.BlockSpec((1, Cin), lambda n: (0, 0)),
            pl.BlockSpec((1, Np), lambda n: (0, 0)),
        ],
        out_specs=pl.BlockSpec((H, W, Np), lambda n: (n, 0, 0)),
        compiler_params=pltpu.CompilerParams(
            dimension_semantics=("parallel",)),
    )(xp, w_taps, scale_in, bias_in, cbias)

    return o[:, :, :Cout].reshape(N, H, W, Cout)


def decoder_forward(x_nchw, layer_params, final_params):
    x = jnp.transpose(x_nchw, (0, 2, 3, 1)).astype(jnp.bfloat16)   # NCHW->NHWC
    scale = jnp.ones((1, x.shape[-1]), jnp.float32)                # identity
    bias = jnp.zeros((1, x.shape[-1]), jnp.float32)
    relu = False
    for p in layer_params:
        x, scale, bias = deconv_bn_relu_layer(
            x, p["w"], p["gamma"], p["beta"], scale, bias, relu)
        relu = True
    y = reflectpad_conv7_tanh(x, final_params["w"], final_params["b"],
                              scale, bias, relu)
    return jnp.transpose(y, (0, 3, 1, 2)).astype(jnp.float32)      # NHWC->NCHW


# ---------------------------------------------------------------------------
# Deterministic parameter init (synthetic — matches module's shapes)
# ---------------------------------------------------------------------------
def init_params(key, out_channels, ndf, n_downsampling):
    layer_params = []
    for i in range(n_downsampling):
        mult = 2 ** (n_downsampling - i)
        cin, cout = ndf * mult, ndf * mult // 2
        key, kw = jax.random.split(key)
        layer_params.append({
            "w": jax.random.normal(kw, (cin, cout, 3, 3), jnp.float32) * 0.05,
            "gamma": jnp.ones((cout,), jnp.float32),
            "beta": jnp.zeros((cout,), jnp.float32),
        })
    key, kw, kb = jax.random.split(key, 3)
    final_params = {
        "w": jax.random.normal(kw, (out_channels, ndf, 7, 7), jnp.float32) * 0.05,
        "b": jax.random.normal(kb, (out_channels,), jnp.float32) * 0.05,
    }
    return layer_params, final_params


# ---------------------------------------------------------------------------
# Pure-JAX reference (lax.conv_general_dilated).  Conv operands are cast to
# bf16 with f32 accumulation to mirror the kernel's MXU precision.
# ---------------------------------------------------------------------------
def reference_forward(x_nchw, layer_params, final_params):
    x = x_nchw
    for p in layer_params:
        w_t = p["w"]                                             # (Cin, Cout, 3, 3)
        w_conv = jnp.transpose(w_t, (1, 0, 2, 3))[:, :, ::-1, ::-1]
        y = jax.lax.conv_general_dilated(
            x.astype(jnp.bfloat16), w_conv.astype(jnp.bfloat16),
            window_strides=(1, 1), padding=((1, 2), (1, 2)), lhs_dilation=(2, 2),
            dimension_numbers=("NCHW", "OIHW", "NCHW"),
            preferred_element_type=jnp.float32)
        mean = jnp.mean(y, axis=(0, 2, 3), keepdims=True)
        var = jnp.var(y, axis=(0, 2, 3), keepdims=True)
        y = (y - mean) / jnp.sqrt(var + BN_EPS)
        y = y * p["gamma"][None, :, None, None] + p["beta"][None, :, None, None]
        x = jnp.maximum(y, 0.0)
    x = jnp.pad(x, ((0, 0), (0, 0), (3, 3), (3, 3)), mode="reflect")
    y = jax.lax.conv_general_dilated(
        x.astype(jnp.bfloat16), final_params["w"].astype(jnp.bfloat16),
        window_strides=(1, 1), padding="VALID",
        dimension_numbers=("NCHW", "OIHW", "NCHW"),
        preferred_element_type=jnp.float32)
    return jnp.tanh(y + final_params["b"][None, :, None, None])


# ---------------------------------------------------------------------------
if __name__ == "__main__":
    # Small config consistent with the module: ndf=8, n_downsampling=2,
    # out_channels=3  ->  input channels = ndf * 2**n_downsampling = 32.
    out_channels, ndf, n_downsampling = 3, 8, 2
    N, H, W = 2, 4, 4
    cin0 = ndf * (2 ** n_downsampling)

    key = jax.random.PRNGKey(0)
    key, kx = jax.random.split(key)
    x = jax.random.normal(kx, (N, cin0, H, W), jnp.float32)

    layer_params, final_params = init_params(key, out_channels, ndf, n_downsampling)

    fwd = jax.jit(lambda xx: decoder_forward(xx, layer_params, final_params))
    out = jax.block_until_ready(fwd(x))

    expected_shape = (N, out_channels, H * 2 ** n_downsampling, W * 2 ** n_downsampling)
    assert out.shape == expected_shape, (out.shape, expected_shape)

    ref = jax.block_until_ready(reference_forward(x, layer_params, final_params))
    err = float(jnp.max(jnp.abs(out - ref)))
    assert jnp.allclose(out, ref, atol=2e-2, rtol=2e-2), err

    print("KERNEL_OK")
</pallas_src>

<mosaic_0001>
module attributes {stable_mosaic.version = 11 : i64} {
  func.func @_deconv_kernel(%arg0: i32, %arg1: memref<5x5x32xbf16, #tpu.memory_space<vmem>>, %arg2: memref<4x32x128xbf16, #tpu.memory_space<vmem>>, %arg3: memref<1x32xf32, #tpu.memory_space<vmem>>, %arg4: memref<1x32xf32, #tpu.memory_space<vmem>>, %arg5: memref<4x4x128xbf16, #tpu.memory_space<vmem>>, %arg6: memref<1x2x128xf32, #tpu.memory_space<vmem>>, %arg7: memref<2x128xf32, #tpu.memory_space<vmem>>) attributes {dimension_semantics = [#tpu.dimension_semantics<parallel>], iteration_bounds = array<i64: 2>, scalar_prefetch = 0 : i64, scratch_operands = 1 : i64, tpu.core_type = #tpu.core_type<tc>, window_params = [{transform_indices = @transform_0, window_bounds = array<i64: 5, 5, 32>}, {pipeline_mode = #tpu.pipeline_mode<synchronous>, transform_indices = @transform_1, window_bounds = array<i64: 4, 32, 128>}, {pipeline_mode = #tpu.pipeline_mode<synchronous>, transform_indices = @transform_2, window_bounds = array<i64: 1, 32>}, {pipeline_mode = #tpu.pipeline_mode<synchronous>, transform_indices = @transform_3, window_bounds = array<i64: 1, 32>}, {transform_indices = @transform_4, window_bounds = array<i64: 4, 4, 128>}, {transform_indices = @transform_5, window_bounds = array<i64: 1, 2, 128>}]} {
    %cst = arith.constant 0.000000e+00 : f32
    %0 = vector.broadcast %cst : f32 to vector<2x128xf32>
    %c0 = arith.constant 0 : index
    %c0_0 = arith.constant 0 : index
    %1 = vector.load %arg7[%c0, %c0_0] : memref<2x128xf32, #tpu.memory_space<vmem>>, vector<2x128xf32>
    tpu.vector_store %arg7[%c0, %c0_0], %0 {strides = array<i32>} : memref<2x128xf32, #tpu.memory_space<vmem>>, vector<2x128xf32>,
    %2 = tpu.iota {dimensions = array<i32: 0>} : vector<5x1xi32>
    %c4_i32 = arith.constant 4 : i32
    %3 = vector.broadcast %c4_i32 : i32 to vector<5x1xi32>
    %4 = arith.cmpi slt, %2, %3 : vector<5x1xi32>
    %c0_i32 = arith.constant 0 : i32
    %c4_i32_1 = arith.constant 4 : i32
    %5 = arith.addi %c0_i32, %c4_i32_1 : i32
    %c1_i32 = arith.constant 1 : i32
    scf.for %arg8 = %c0_i32 to %5 step %c1_i32  : i32 {
      %10 = arith.index_cast %arg8 : i32 to index
      %c0_8 = arith.constant 0 : index
      %c0_9 = arith.constant 0 : index
      %11 = vector.load %arg1[%10, %c0_8, %c0_9] : memref<5x5x32xbf16, #tpu.memory_space<vmem>>, vector<1x5x32xbf16>
      %12 = vector.shape_cast %11 : vector<1x5x32xbf16> to vector<5x32xbf16>
      %13 = arith.extf %12 : vector<5x32xbf16> to vector<5x32xf32>
      %c0_10 = arith.constant 0 : index
      %c0_11 = arith.constant 0 : index
      %14 = vector.load %arg3[%c0_10, %c0_11] : memref<1x32xf32, #tpu.memory_space<vmem>>, vector<1x32xf32>
      %15 = vector.broadcast %14 : vector<1x32xf32> to vector<5x32xf32>
      %16 = arith.mulf %13, %15 : vector<5x32xf32>
      %c0_12 = arith.constant 0 : index
      %c0_13 = arith.constant 0 : index
      %17 = vector.load %arg4[%c0_12, %c0_13] : memref<1x32xf32, #tpu.memory_space<vmem>>, vector<1x32xf32>
      %18 = vector.broadcast %17 : vector<1x32xf32> to vector<5x32xf32>
      %19 = arith.addf %16, %18 : vector<5x32xf32>
      %true = arith.constant true
      %20 = vector.broadcast %true : i1 to vector<5x1xi1>
      %21 = arith.andi %4, %20 : vector<5x1xi1>
      %cst_14 = arith.constant 0.000000e+00 : f32
      %22 = vector.shape_cast %21 : vector<5x1xi1> to vector<5x1xi1>
      %23 = vector.broadcast %22 : vector<5x1xi1> to vector<5x32xi1>
      %24 = vector.broadcast %cst_14 : f32 to vector<5x32xf32>
      %25 = arith.select %23, %19, %24 : vector<5x32xi1>, vector<5x32xf32>
      %26 = arith.truncf %25 : vector<5x32xf32> to vector<5x32xbf16>
      %c1_i32_15 = arith.constant 1 : i32
      %27 = arith.addi %arg8, %c1_i32_15 : i32
      %28 = arith.index_cast %27 : i32 to index
      %c0_16 = arith.constant 0 : index
      %c0_17 = arith.constant 0 : index
      %29 = vector.load %arg1[%28, %c0_16, %c0_17] : memref<5x5x32xbf16, #tpu.memory_space<vmem>>, vector<1x5x32xbf16>
      %30 = vector.shape_cast %29 : vector<1x5x32xbf16> to vector<5x32xbf16>
      %c1_i32_18 = arith.constant 1 : i32
      %31 = arith.addi %arg8, %c1_i32_18 : i32
      %c4_i32_19 = arith.constant 4 : i32
      %32 = arith.cmpi slt, %31, %c4_i32_19 : i32
      %33 = arith.extf %30 : vector<5x32xbf16> to vector<5x32xf32>
      %c0_20 = arith.constant 0 : index
      %c0_21 = arith.constant 0 : index
      %34 = vector.load %arg3[%c0_20, %c0_21] : memref<1x32xf32, #tpu.memory_space<vmem>>, vector<1x32xf32>
      %35 = vector.broadcast %34 : vector<1x32xf32> to vector<5x32xf32>
      %36 = arith.mulf %33, %35 : vector<5x32xf32>
      %c0_22 = arith.constant 0 : index
      %c0_23 = arith.constant 0 : index
      %37 = vector.load %arg4[%c0_22, %c0_23] : memref<1x32xf32, #tpu.memory_space<vmem>>, vector<1x32xf32>
      %38 = vector.broadcast %37 : vector<1x32xf32> to vector<5x32xf32>
      %39 = arith.addf %36, %38 : vector<5x32xf32>
      %40 = vector.broadcast %32 : i1 to vector<5x1xi1>
      %41 = arith.andi %4, %40 : vector<5x1xi1>
      %cst_24 = arith.constant 0.000000e+00 : f32
      %42 = vector.shape_cast %41 : vector<5x1xi1> to vector<5x1xi1>
      %43 = vector.broadcast %42 : vector<5x1xi1> to vector<5x32xi1>
      %44 = vector.broadcast %cst_24 : f32 to vector<5x32xf32>
      %45 = arith.select %43, %39, %44 : vector<5x32xi1>, vector<5x32xf32>
      %46 = arith.truncf %45 : vector<5x32xf32> to vector<5x32xbf16>
      %47 = vector.extract_strided_slice %26 {offsets = [0, 0], sizes = [4, 32], strides = [1, 1]} : vector<5x32xbf16> to vector<4x32xbf16>
      %c0_25 = arith.constant 0 : index
      %c0_26 = arith.constant 0 : index
      %c0_27 = arith.constant 0 : index
      %48 = vector.load %arg2[%c0_25, %c0_26, %c0_27] : memref<4x32x128xbf16, #tpu.memory_space<vmem>>, vector<1x32x128xbf16>
      %49 = vector.shape_cast %48 : vector<1x32x128xbf16> to vector<32x128xbf16>
      %cst_28 = arith.constant dense<0.000000e+00> : vector<4x128xf32>
      %50 = tpu.matmul %47, %49, %cst_28 {dimension_numbers = #tpu.dot_dimension_numbers<[1], [0], [0], [1], [0, 0, 1, 1], [], []>} : vector<4x32xbf16>, vector<32x128xbf16>, vector<4x128xf32> -> vector<4x128xf32>
      %51 = vector.extract_strided_slice %26 {offsets = [1, 0], sizes = [4, 32], strides = [1, 1]} : vector<5x32xbf16> to vector<4x32xbf16>
      %c1 = arith.constant 1 : index
      %c0_29 = arith.constant 0 : index
      %c0_30 = arith.constant 0 : index
      %52 = vector.load %arg2[%c1, %c0_29, %c0_30] : memref<4x32x128xbf16, #tpu.memory_space<vmem>>, vector<1x32x128xbf16>
      %53 = vector.shape_cast %52 : vector<1x32x128xbf16> to vector<32x128xbf16>
      %cst_31 = arith.constant dense<0.000000e+00> : vector<4x128xf32>
      %54 = tpu.matmul %51, %53, %cst_31 {dimension_numbers = #tpu.dot_dimension_numbers<[1], [0], [0], [1], [0, 0, 1, 1], [], []>} : vector<4x32xbf16>, vector<32x128xbf16>, vector<4x128xf32> -> vector<4x128xf32>
      %55 = arith.addf %50, %54 : vector<4x128xf32>
      %56 = vector.extract_strided_slice %46 {offsets = [0, 0], sizes = [4, 32], strides = [1, 1]} : vector<5x32xbf16> to vector<4x32xbf16>
      %c2 = arith.constant 2 : index
      %c0_32 = arith.constant 0 : index
      %c0_33 = arith.constant 0 : index
      %57 = vector.load %arg2[%c2, %c0_32, %c0_33] : memref<4x32x128xbf16, #tpu.memory_space<vmem>>, vector<1x32x128xbf16>
      %58 = vector.shape_cast %57 : vector<1x32x128xbf16> to vector<32x128xbf16>
      %cst_34 = arith.constant dense<0.000000e+00> : vector<4x128xf32>
      %59 = tpu.matmul %56, %58, %cst_34 {dimension_numbers = #tpu.dot_dimension_numbers<[1], [0], [0], [1], [0, 0, 1, 1], [], []>} : vector<4x32xbf16>, vector<32x128xbf16>, vector<4x128xf32> -> vector<4x128xf32>
      %60 = arith.addf %55, %59 : vector<4x128xf32>
      %61 = vector.extract_strided_slice %46 {offsets = [1, 0], sizes = [4, 32], strides = [1, 1]} : vector<5x32xbf16> to vector<4x32xbf16>
      %c3 = arith.constant 3 : index
      %c0_35 = arith.constant 0 : index
      %c0_36 = arith.constant 0 : index
      %62 = vector.load %arg2[%c3, %c0_35, %c0_36] : memref<4x32x128xbf16, #tpu.memory_space<vmem>>, vector<1x32x128xbf16>
      %63 = vector.shape_cast %62 : vector<1x32x128xbf16> to vector<32x128xbf16>
      %cst_37 = arith.constant dense<0.000000e+00> : vector<4x128xf32>
      %64 = tpu.matmul %61, %63, %cst_37 {dimension_numbers = #tpu.dot_dimension_numbers<[1], [0], [0], [1], [0, 0, 1, 1], [], []>} : vector<4x32xbf16>, vector<32x128xbf16>, vector<4x128xf32> -> vector<4x128xf32>
      %65 = arith.addf %60, %64 : vector<4x128xf32>
      %66 = arith.truncf %65 : vector<4x128xf32> to vector<4x128xbf16>
      %67 = arith.index_cast %arg8 : i32 to index
      %c0_38 = arith.constant 0 : index
      %c0_39 = arith.constant 0 : index
      %68 = vector.load %arg5[%67, %c0_38, %c0_39] : memref<4x4x128xbf16, #tpu.memory_space<vmem>>, vector<1x4x128xbf16>
      %69 = vector.shape_cast %68 : vector<1x4x128xbf16> to vector<4x128xbf16>
      %70 = vector.shape_cast %66 : vector<4x128xbf16> to vector<1x4x128xbf16>
      tpu.vector_store %arg5[%67, %c0_38, %c0_39], %70 {strides = array<i32>} : memref<4x4x128xbf16, #tpu.memory_space<vmem>>, vector<1x4x128xbf16>,
      %c0_40 = arith.constant 0 : index
      %c0_41 = arith.constant 0 : index
      %71 = vector.load %arg7[%c0_40, %c0_41] : memref<2x128xf32, #tpu.memory_space<vmem>>, vector<1x128xf32>
      %cst_42 = arith.constant dense<0.000000e+00> : vector<128xf32>
      %72 = vector.multi_reduction <add>, %65, %cst_42 [0] : vector<4x128xf32> to vector<128xf32>
      %73 = vector.shape_cast %72 : vector<128xf32> to vector<1x128xf32>
      %74 = arith.addf %71, %73 : vector<1x128xf32>
      %c0_43 = arith.constant 0 : index
      %c0_44 = arith.constant 0 : index
      %75 = vector.load %arg7[%c0_43, %c0_44] : memref<2x128xf32, #tpu.memory_space<vmem>>, vector<1x128xf32>
      tpu.vector_store %arg7[%c0_43, %c0_44], %74 {strides = array<i32>} : memref<2x128xf32, #tpu.memory_space<vmem>>, vector<1x128xf32>,
      %c1_45 = arith.constant 1 : index
      %c0_46 = arith.constant 0 : index
      %76 = vector.load %arg7[%c1_45, %c0_46] : memref<2x128xf32, #tpu.memory_space<vmem>>, vector<1x128xf32>
      %77 = arith.mulf %65, %65 : vector<4x128xf32>
      %cst_47 = arith.constant dense<0.000000e+00> : vector<128xf32>
      %78 = vector.multi_reduction <add>, %77, %cst_47 [0] : vector<4x128xf32> to vector<128xf32>
      %79 = vector.shape_cast %78 : vector<128xf32> to vector<1x128xf32>
      %80 = arith.addf %76, %79 : vector<1x128xf32>
      %c1_48 = arith.constant 1 : index
      %c0_49 = arith.constant 0 : index
      %81 = vector.load %arg7[%c1_48, %c0_49] : memref<2x128xf32, #tpu.memory_space<vmem>>, vector<1x128xf32>
      tpu.vector_store %arg7[%c1_48, %c0_49], %80 {strides = array<i32>} : memref<2x128xf32, #tpu.memory_space<vmem>>, vector<1x128xf32>,
    }
    %c4_i32_2 = arith.constant 4 : i32
    %c0_3 = arith.constant 0 : index
    %c0_4 = arith.constant 0 : index
    %6 = vector.load %arg7[%c0_3, %c0_4] : memref<2x128xf32, #tpu.memory_space<vmem>>, vector<2x128xf32>
    %c0_5 = arith.constant 0 : index
    %c0_6 = arith.constant 0 : index
    %c0_7 = arith.constant 0 : index
    %7 = vector.load %arg6[%c0_5, %c0_6, %c0_7] : memref<1x2x128xf32, #tpu.memory_space<vmem>>, vector<1x2x128xf32>
    %8 = vector.shape_cast %7 : vector<1x2x128xf32> to vector<2x128xf32>
    %9 = vector.shape_cast %6 : vector<2x128xf32> to vector<1x2x128xf32>
    tpu.vector_store %arg6[%c0_5, %c0_6, %c0_7], %9 {strides = array<i32>} : memref<1x2x128xf32, #tpu.memory_space<vmem>>, vector<1x2x128xf32>,
    return
  }
  func.func @transform_0(%arg0: i32) -> (i32, i32, i32) {
    %c0_i32 = arith.constant 0 : i32
    %c0_i32_0 = arith.constant 0 : i32
    %c0_i32_1 = arith.constant 0 : i32
    return %arg0, %c0_i32, %c0_i32_0 : i32, i32, i32
  }
  func.func @transform_1(%arg0: i32) -> (i32, i32, i32) {
    %c0_i32 = arith.constant 0 : i32
    %c0_i32_0 = arith.constant 0 : i32
    %c0_i32_1 = arith.constant 0 : i32
    %c0_i32_2 = arith.constant 0 : i32
    return %c0_i32, %c0_i32_0, %c0_i32_1 : i32, i32, i32
  }
  func.func @transform_2(%arg0: i32) -> (i32, i32) {
    %c0_i32 = arith.constant 0 : i32
    %c0_i32_0 = arith.constant 0 : i32
    %c0_i32_1 = arith.constant 0 : i32
    return %c0_i32, %c0_i32_0 : i32, i32
  }
  func.func @transform_3(%arg0: i32) -> (i32, i32) {
    %c0_i32 = arith.constant 0 : i32
    %c0_i32_0 = arith.constant 0 : i32
    %c0_i32_1 = arith.constant 0 : i32
    return %c0_i32, %c0_i32_0 : i32, i32
  }
  func.func @transform_4(%arg0: i32) -> (i32, i32, i32) {
    %c0_i32 = arith.constant 0 : i32
    %c0_i32_0 = arith.constant 0 : i32
    %c0_i32_1 = arith.constant 0 : i32
    return %arg0, %c0_i32, %c0_i32_0 : i32, i32, i32
  }
  func.func @transform_5(%arg0: i32) -> (i32, i32, i32) {
    %c0_i32 = arith.constant 0 : i32
    %c0_i32_0 = arith.constant 0 : i32
    %c0_i32_1 = arith.constant 0 : i32
    return %arg0, %c0_i32, %c0_i32_0 : i32, i32, i32
  }
}

module attributes {stable_mosaic.version = 11 : i64} {
  func.func @_deconv_kernel(%arg0: i32, %arg1: memref<9x9x16xbf16, #tpu.memory_space<vmem>>, %arg2: memref<4x16x128xbf16, #tpu.memory_space<vmem>>, %arg3: memref<1x16xf32, #tpu.memory_space<vmem>>, %arg4: memref<1x16xf32, #tpu.memory_space<vmem>>, %arg5: memref<8x8x128xbf16, #tpu.memory_space<vmem>>, %arg6: memref<1x2x128xf32, #tpu.memory_space<vmem>>, %arg7: memref<2x128xf32, #tpu.memory_space<vmem>>) attributes {dimension_semantics = [#tpu.dimension_semantics<parallel>], iteration_bounds = array<i64: 2>, scalar_prefetch = 0 : i64, scratch_operands = 1 : i64, tpu.core_type = #tpu.core_type<tc>, window_params = [{transform_indices = @transform_0, window_bounds = array<i64: 9, 9, 16>}, {pipeline_mode = #tpu.pipeline_mode<synchronous>, transform_indices = @transform_1, window_bounds = array<i64: 4, 16, 128>}, {pipeline_mode = #tpu.pipeline_mode<synchronous>, transform_indices = @transform_2, window_bounds = array<i64: 1, 16>}, {pipeline_mode = #tpu.pipeline_mode<synchronous>, transform_indices = @transform_3, window_bounds = array<i64: 1, 16>}, {transform_indices = @transform_4, window_bounds = array<i64: 8, 8, 128>}, {transform_indices = @transform_5, window_bounds = array<i64: 1, 2, 128>}]} {
    %cst = arith.constant 0.000000e+00 : f32
    %0 = vector.broadcast %cst : f32 to vector<2x128xf32>
    %c0 = arith.constant 0 : index
    %c0_0 = arith.constant 0 : index
    %1 = vector.load %arg7[%c0, %c0_0] : memref<2x128xf32, #tpu.memory_space<vmem>>, vector<2x128xf32>
    tpu.vector_store %arg7[%c0, %c0_0], %0 {strides = array<i32>} : memref<2x128xf32, #tpu.memory_space<vmem>>, vector<2x128xf32>,
    %2 = tpu.iota {dimensions = array<i32: 0>} : vector<9x1xi32>
    %c8_i32 = arith.constant 8 : i32
    %3 = vector.broadcast %c8_i32 : i32 to vector<9x1xi32>
    %4 = arith.cmpi slt, %2, %3 : vector<9x1xi32>
    %c0_i32 = arith.constant 0 : i32
    %c8_i32_1 = arith.constant 8 : i32
    %5 = arith.addi %c0_i32, %c8_i32_1 : i32
    %c1_i32 = arith.constant 1 : i32
    scf.for %arg8 = %c0_i32 to %5 step %c1_i32  : i32 {
      %10 = arith.index_cast %arg8 : i32 to index
      %c0_8 = arith.constant 0 : index
      %c0_9 = arith.constant 0 : index
      %11 = vector.load %arg1[%10, %c0_8, %c0_9] : memref<9x9x16xbf16, #tpu.memory_space<vmem>>, vector<1x9x16xbf16>
      %12 = vector.shape_cast %11 : vector<1x9x16xbf16> to vector<9x16xbf16>
      %13 = arith.extf %12 : vector<9x16xbf16> to vector<9x16xf32>
      %c0_10 = arith.constant 0 : index
      %c0_11 = arith.constant 0 : index
      %14 = vector.load %arg3[%c0_10, %c0_11] : memref<1x16xf32, #tpu.memory_space<vmem>>, vector<1x16xf32>
      %15 = vector.broadcast %14 : vector<1x16xf32> to vector<9x16xf32>
      %16 = arith.mulf %13, %15 : vector<9x16xf32>
      %c0_12 = arith.constant 0 : index
      %c0_13 = arith.constant 0 : index
      %17 = vector.load %arg4[%c0_12, %c0_13] : memref<1x16xf32, #tpu.memory_space<vmem>>, vector<1x16xf32>
      %18 = vector.broadcast %17 : vector<1x16xf32> to vector<9x16xf32>
      %19 = arith.addf %16, %18 : vector<9x16xf32>
      %cst_14 = arith.constant 0.000000e+00 : f32
      %20 = vector.broadcast %cst_14 : f32 to vector<9x16xf32>
      %21 = arith.maximumf %19, %20 : vector<9x16xf32>
      %true = arith.constant true
      %22 = vector.broadcast %true : i1 to vector<9x1xi1>
      %23 = arith.andi %4, %22 : vector<9x1xi1>
      %cst_15 = arith.constant 0.000000e+00 : f32
      %24 = vector.shape_cast %23 : vector<9x1xi1> to vector<9x1xi1>
      %25 = vector.broadcast %24 : vector<9x1xi1> to vector<9x16xi1>
      %26 = vector.broadcast %cst_15 : f32 to vector<9x16xf32>
      %27 = arith.select %25, %21, %26 : vector<9x16xi1>, vector<9x16xf32>
      %28 = arith.truncf %27 : vector<9x16xf32> to vector<9x16xbf16>
      %c1_i32_16 = arith.constant 1 : i32
      %29 = arith.addi %arg8, %c1_i32_16 : i32
      %30 = arith.index_cast %29 : i32 to index
      %c0_17 = arith.constant 0 : index
      %c0_18 = arith.constant 0 : index
      %31 = vector.load %arg1[%30, %c0_17, %c0_18] : memref<9x9x16xbf16, #tpu.memory_space<vmem>>, vector<1x9x16xbf16>
      %32 = vector.shape_cast %31 : vector<1x9x16xbf16> to vector<9x16xbf16>
      %c1_i32_19 = arith.constant 1 : i32
      %33 = arith.addi %arg8, %c1_i32_19 : i32
      %c8_i32_20 = arith.constant 8 : i32
      %34 = arith.cmpi slt, %33, %c8_i32_20 : i32
      %35 = arith.extf %32 : vector<9x16xbf16> to vector<9x16xf32>
      %c0_21 = arith.constant 0 : index
      %c0_22 = arith.constant 0 : index
      %36 = vector.load %arg3[%c0_21, %c0_22] : memref<1x16xf32, #tpu.memory_space<vmem>>, vector<1x16xf32>
      %37 = vector.broadcast %36 : vector<1x16xf32> to vector<9x16xf32>
      %38 = arith.mulf %35, %37 : vector<9x16xf32>
      %c0_23 = arith.constant 0 : index
      %c0_24 = arith.constant 0 : index
      %39 = vector.load %arg4[%c0_23, %c0_24] : memref<1x16xf32, #tpu.memory_space<vmem>>, vector<1x16xf32>
      %40 = vector.broadcast %39 : vector<1x16xf32> to vector<9x16xf32>
      %41 = arith.addf %38, %40 : vector<9x16xf32>
      %cst_25 = arith.constant 0.000000e+00 : f32
      %42 = vector.broadcast %cst_25 : f32 to vector<9x16xf32>
      %43 = arith.maximumf %41, %42 : vector<9x16xf32>
      %44 = vector.broadcast %34 : i1 to vector<9x1xi1>
      %45 = arith.andi %4, %44 : vector<9x1xi1>
      %cst_26 = arith.constant 0.000000e+00 : f32
      %46 = vector.shape_cast %45 : vector<9x1xi1> to vector<9x1xi1>
      %47 = vector.broadcast %46 : vector<9x1xi1> to vector<9x16xi1>
      %48 = vector.broadcast %cst_26 : f32 to vector<9x16xf32>
      %49 = arith.select %47, %43, %48 : vector<9x16xi1>, vector<9x16xf32>
      %50 = arith.truncf %49 : vector<9x16xf32> to vector<9x16xbf16>
      %51 = vector.extract_strided_slice %28 {offsets = [0, 0], sizes = [8, 16], strides = [1, 1]} : vector<9x16xbf16> to vector<8x16xbf16>
      %c0_27 = arith.constant 0 : index
      %c0_28 = arith.constant 0 : index
      %c0_29 = arith.constant 0 : index
      %52 = vector.load %arg2[%c0_27, %c0_28, %c0_29] : memref<4x16x128xbf16, #tpu.memory_space<vmem>>, vector<1x16x128xbf16>
      %53 = vector.shape_cast %52 : vector<1x16x128xbf16> to vector<16x128xbf16>
      %cst_30 = arith.constant dense<0.000000e+00> : vector<8x128xf32>
      %54 = tpu.matmul %51, %53, %cst_30 {dimension_numbers = #tpu.dot_dimension_numbers<[1], [0], [0], [1], [0, 0, 1, 1], [], []>} : vector<8x16xbf16>, vector<16x128xbf16>, vector<8x128xf32> -> vector<8x128xf32>
      %55 = vector.extract_strided_slice %28 {offsets = [1, 0], sizes = [8, 16], strides = [1, 1]} : vector<9x16xbf16> to vector<8x16xbf16>
      %c1 = arith.constant 1 : index
      %c0_31 = arith.constant 0 : index
      %c0_32 = arith.constant 0 : index
      %56 = vector.load %arg2[%c1, %c0_31, %c0_32] : memref<4x16x128xbf16, #tpu.memory_space<vmem>>, vector<1x16x128xbf16>
      %57 = vector.shape_cast %56 : vector<1x16x128xbf16> to vector<16x128xbf16>
      %cst_33 = arith.constant dense<0.000000e+00> : vector<8x128xf32>
      %58 = tpu.matmul %55, %57, %cst_33 {dimension_numbers = #tpu.dot_dimension_numbers<[1], [0], [0], [1], [0, 0, 1, 1], [], []>} : vector<8x16xbf16>, vector<16x128xbf16>, vector<8x128xf32> -> vector<8x128xf32>
      %59 = arith.addf %54, %58 : vector<8x128xf32>
      %60 = vector.extract_strided_slice %50 {offsets = [0, 0], sizes = [8, 16], strides = [1, 1]} : vector<9x16xbf16> to vector<8x16xbf16>
      %c2 = arith.constant 2 : index
      %c0_34 = arith.constant 0 : index
      %c0_35 = arith.constant 0 : index
      %61 = vector.load %arg2[%c2, %c0_34, %c0_35] : memref<4x16x128xbf16, #tpu.memory_space<vmem>>, vector<1x16x128xbf16>
      %62 = vector.shape_cast %61 : vector<1x16x128xbf16> to vector<16x128xbf16>
      %cst_36 = arith.constant dense<0.000000e+00> : vector<8x128xf32>
      %63 = tpu.matmul %60, %62, %cst_36 {dimension_numbers = #tpu.dot_dimension_numbers<[1], [0], [0], [1], [0, 0, 1, 1], [], []>} : vector<8x16xbf16>, vector<16x128xbf16>, vector<8x128xf32> -> vector<8x128xf32>
      %64 = arith.addf %59, %63 : vector<8x128xf32>
      %65 = vector.extract_strided_slice %50 {offsets = [1, 0], sizes = [8, 16], strides = [1, 1]} : vector<9x16xbf16> to vector<8x16xbf16>
      %c3 = arith.constant 3 : index
      %c0_37 = arith.constant 0 : index
      %c0_38 = arith.constant 0 : index
      %66 = vector.load %arg2[%c3, %c0_37, %c0_38] : memref<4x16x128xbf16, #tpu.memory_space<vmem>>, vector<1x16x128xbf16>
      %67 = vector.shape_cast %66 : vector<1x16x128xbf16> to vector<16x128xbf16>
      %cst_39 = arith.constant dense<0.000000e+00> : vector<8x128xf32>
      %68 = tpu.matmul %65, %67, %cst_39 {dimension_numbers = #tpu.dot_dimension_numbers<[1], [0], [0], [1], [0, 0, 1, 1], [], []>} : vector<8x16xbf16>, vector<16x128xbf16>, vector<8x128xf32> -> vector<8x128xf32>
      %69 = arith.addf %64, %68 : vector<8x128xf32>
      %70 = arith.truncf %69 : vector<8x128xf32> to vector<8x128xbf16>
      %71 = arith.index_cast %arg8 : i32 to index
      %c0_40 = arith.constant 0 : index
      %c0_41 = arith.constant 0 : index
      %72 = vector.load %arg5[%71, %c0_40, %c0_41] : memref<8x8x128xbf16, #tpu.memory_space<vmem>>, vector<1x8x128xbf16>
      %73 = vector.shape_cast %72 : vector<1x8x128xbf16> to vector<8x128xbf16>
      %74 = vector.shape_cast %70 : vector<8x128xbf16> to vector<1x8x128xbf16>
      tpu.vector_store %arg5[%71, %c0_40, %c0_41], %74 {strides = array<i32>} : memref<8x8x128xbf16, #tpu.memory_space<vmem>>, vector<1x8x128xbf16>,
      %c0_42 = arith.constant 0 : index
      %c0_43 = arith.constant 0 : index
      %75 = vector.load %arg7[%c0_42, %c0_43] : memref<2x128xf32, #tpu.memory_space<vmem>>, vector<1x128xf32>
      %cst_44 = arith.constant dense<0.000000e+00> : vector<128xf32>
      %76 = vector.multi_reduction <add>, %69, %cst_44 [0] : vector<8x128xf32> to vector<128xf32>
      %77 = vector.shape_cast %76 : vector<128xf32> to vector<1x128xf32>
      %78 = arith.addf %75, %77 : vector<1x128xf32>
      %c0_45 = arith.constant 0 : index
      %c0_46 = arith.constant 0 : index
      %79 = vector.load %arg7[%c0_45, %c0_46] : memref<2x128xf32, #tpu.memory_space<vmem>>, vector<1x128xf32>
      tpu.vector_store %arg7[%c0_45, %c0_46], %78 {strides = array<i32>} : memref<2x128xf32, #tpu.memory_space<vmem>>, vector<1x128xf32>,
      %c1_47 = arith.constant 1 : index
      %c0_48 = arith.constant 0 : index
      %80 = vector.load %arg7[%c1_47, %c0_48] : memref<2x128xf32, #tpu.memory_space<vmem>>, vector<1x128xf32>
      %81 = arith.mulf %69, %69 : vector<8x128xf32>
      %cst_49 = arith.constant dense<0.000000e+00> : vector<128xf32>
      %82 = vector.multi_reduction <add>, %81, %cst_49 [0] : vector<8x128xf32> to vector<128xf32>
      %83 = vector.shape_cast %82 : vector<128xf32> to vector<1x128xf32>
      %84 = arith.addf %80, %83 : vector<1x128xf32>
      %c1_50 = arith.constant 1 : index
      %c0_51 = arith.constant 0 : index
      %85 = vector.load %arg7[%c1_50, %c0_51] : memref<2x128xf32, #tpu.memory_space<vmem>>, vector<1x128xf32>
      tpu.vector_store %arg7[%c1_50, %c0_51], %84 {strides = array<i32>} : memref<2x128xf32, #tpu.memory_space<vmem>>, vector<1x128xf32>,
    }
    %c8_i32_2 = arith.constant 8 : i32
    %c0_3 = arith.constant 0 : index
    %c0_4 = arith.constant 0 : index
    %6 = vector.load %arg7[%c0_3, %c0_4] : memref<2x128xf32, #tpu.memory_space<vmem>>, vector<2x128xf32>
    %c0_5 = arith.constant 0 : index
    %c0_6 = arith.constant 0 : index
    %c0_7 = arith.constant 0 : index
    %7 = vector.load %arg6[%c0_5, %c0_6, %c0_7] : memref<1x2x128xf32, #tpu.memory_space<vmem>>, vector<1x2x128xf32>
    %8 = vector.shape_cast %7 : vector<1x2x128xf32> to vector<2x128xf32>
    %9 = vector.shape_cast %6 : vector<2x128xf32> to vector<1x2x128xf32>
    tpu.vector_store %arg6[%c0_5, %c0_6, %c0_7], %9 {strides = array<i32>} : memref<1x2x128xf32, #tpu.memory_space<vmem>>, vector<1x2x128xf32>,
    return
  }
  func.func @transform_0(%arg0: i32) -> (i32, i32, i32) {
    %c0_i32 = arith.constant 0 : i32
    %c0_i32_0 = arith.constant 0 : i32
    %c0_i32_1 = arith.constant 0 : i32
    return %arg0, %c0_i32, %c0_i32_0 : i32, i32, i32
  }
  func.func @transform_1(%arg0: i32) -> (i32, i32, i32) {
    %c0_i32 = arith.constant 0 : i32
    %c0_i32_0 = arith.constant 0 : i32
    %c0_i32_1 = arith.constant 0 : i32
    %c0_i32_2 = arith.constant 0 : i32
    return %c0_i32, %c0_i32_0, %c0_i32_1 : i32, i32, i32
  }
  func.func @transform_2(%arg0: i32) -> (i32, i32) {
    %c0_i32 = arith.constant 0 : i32
    %c0_i32_0 = arith.constant 0 : i32
    %c0_i32_1 = arith.constant 0 : i32
    return %c0_i32, %c0_i32_0 : i32, i32
  }
  func.func @transform_3(%arg0: i32) -> (i32, i32) {
    %c0_i32 = arith.constant 0 : i32
    %c0_i32_0 = arith.constant 0 : i32
    %c0_i32_1 = arith.constant 0 : i32
    return %c0_i32, %c0_i32_0 : i32, i32
  }
  func.func @transform_4(%arg0: i32) -> (i32, i32, i32) {
    %c0_i32 = arith.constant 0 : i32
    %c0_i32_0 = arith.constant 0 : i32
    %c0_i32_1 = arith.constant 0 : i32
    return %arg0, %c0_i32, %c0_i32_0 : i32, i32, i32
  }
  func.func @transform_5(%arg0: i32) -> (i32, i32, i32) {
    %c0_i32 = arith.constant 0 : i32
    %c0_i32_0 = arith.constant 0 : i32
    %c0_i32_1 = arith.constant 0 : i32
    return %arg0, %c0_i32, %c0_i32_0 : i32, i32, i32
  }
}

module attributes {stable_mosaic.version = 11 : i64} {
  func.func @_conv7_kernel(%arg0: i32, %arg1: memref<22x22x8xbf16, #tpu.memory_space<vmem>>, %arg2: memref<7x7x8x128xbf16, #tpu.memory_space<vmem>>, %arg3: memref<1x8xf32, #tpu.memory_space<vmem>>, %arg4: memref<1x8xf32, #tpu.memory_space<vmem>>, %arg5: memref<1x128xf32, #tpu.memory_space<vmem>>, %arg6: memref<16x16x128xbf16, #tpu.memory_space<vmem>>) attributes {dimension_semantics = [#tpu.dimension_semantics<parallel>], iteration_bounds = array<i64: 2>, scalar_prefetch = 0 : i64, scratch_operands = 0 : i64, tpu.core_type = #tpu.core_type<tc>, window_params = [{transform_indices = @transform_0, window_bounds = array<i64: 22, 22, 8>}, {pipeline_mode = #tpu.pipeline_mode<synchronous>, transform_indices = @transform_1, window_bounds = array<i64: 7, 7, 8, 128>}, {pipeline_mode = #tpu.pipeline_mode<synchronous>, transform_indices = @transform_2, window_bounds = array<i64: 1, 8>}, {pipeline_mode = #tpu.pipeline_mode<synchronous>, transform_indices = @transform_3, window_bounds = array<i64: 1, 8>}, {pipeline_mode = #tpu.pipeline_mode<synchronous>, transform_indices = @transform_4, window_bounds = array<i64: 1, 128>}, {transform_indices = @transform_5, window_bounds = array<i64: 16, 16, 128>}]} {
    %c0_i32 = arith.constant 0 : i32
    %c16_i32 = arith.constant 16 : i32
    %0 = arith.addi %c0_i32, %c16_i32 : i32
    %c1_i32 = arith.constant 1 : i32
    scf.for %arg7 = %c0_i32 to %0 step %c1_i32  : i32 {
      %cst = arith.constant 0.000000e+00 : f32
      %1 = vector.broadcast %cst : f32 to vector<16x128xf32>
      %c0_i32_1 = arith.constant 0 : i32
      %2 = arith.addi %arg7, %c0_i32_1 : i32
      %3 = arith.index_cast %2 : i32 to index
      %c0 = arith.constant 0 : index
      %c0_2 = arith.constant 0 : index
      %4 = vector.load %arg1[%3, %c0, %c0_2] : memref<22x22x8xbf16, #tpu.memory_space<vmem>>, vector<1x22x8xbf16>
      %5 = vector.shape_cast %4 : vector<1x22x8xbf16> to vector<22x8xbf16>
      %6 = arith.extf %5 : vector<22x8xbf16> to vector<22x8xf32>
      %c0_3 = arith.constant 0 : index
      %c0_4 = arith.constant 0 : index
      %7 = vector.load %arg3[%c0_3, %c0_4] : memref<1x8xf32, #tpu.memory_space<vmem>>, vector<1x8xf32>
      %8 = vector.broadcast %7 : vector<1x8xf32> to vector<22x8xf32>
      %9 = arith.mulf %6, %8 : vector<22x8xf32>
      %c0_5 = arith.constant 0 : index
      %c0_6 = arith.constant 0 : index
      %10 = vector.load %arg4[%c0_5, %c0_6] : memref<1x8xf32, #tpu.memory_space<vmem>>, vector<1x8xf32>
      %11 = vector.broadcast %10 : vector<1x8xf32> to vector<22x8xf32>
      %12 = arith.addf %9, %11 : vector<22x8xf32>
      %cst_7 = arith.constant 0.000000e+00 : f32
      %13 = vector.broadcast %cst_7 : f32 to vector<22x8xf32>
      %14 = arith.maximumf %12, %13 : vector<22x8xf32>
      %15 = arith.truncf %14 : vector<22x8xf32> to vector<22x8xbf16>
      %16 = vector.extract_strided_slice %15 {offsets = [0, 0], sizes = [16, 8], strides = [1, 1]} : vector<22x8xbf16> to vector<16x8xbf16>
      %c0_8 = arith.constant 0 : index
      %c0_9 = arith.constant 0 : index
      %c0_10 = arith.constant 0 : index
      %c0_11 = arith.constant 0 : index
      %17 = vector.load %arg2[%c0_8, %c0_9, %c0_10, %c0_11] : memref<7x7x8x128xbf16, #tpu.memory_space<vmem>>, vector<1x1x8x128xbf16>
      %18 = vector.shape_cast %17 : vector<1x1x8x128xbf16> to vector<8x128xbf16>
      %cst_12 = arith.constant dense<0.000000e+00> : vector<16x128xf32>
      %19 = tpu.matmul %16, %18, %cst_12 {dimension_numbers = #tpu.dot_dimension_numbers<[1], [0], [0], [1], [0, 0, 1, 1], [], []>} : vector<16x8xbf16>, vector<8x128xbf16>, vector<16x128xf32> -> vector<16x128xf32>
      %20 = arith.addf %1, %19 : vector<16x128xf32>
      %21 = vector.extract_strided_slice %15 {offsets = [1, 0], sizes = [16, 8], strides = [1, 1]} : vector<22x8xbf16> to vector<16x8xbf16>
      %c0_13 = arith.constant 0 : index
      %c1 = arith.constant 1 : index
      %c0_14 = arith.constant 0 : index
      %c0_15 = arith.constant 0 : index
      %22 = vector.load %arg2[%c0_13, %c1, %c0_14, %c0_15] : memref<7x7x8x128xbf16, #tpu.memory_space<vmem>>, vector<1x1x8x128xbf16>
      %23 = vector.shape_cast %22 : vector<1x1x8x128xbf16> to vector<8x128xbf16>
      %cst_16 = arith.constant dense<0.000000e+00> : vector<16x128xf32>
      %24 = tpu.matmul %21, %23, %cst_16 {dimension_numbers = #tpu.dot_dimension_numbers<[1], [0], [0], [1], [0, 0, 1, 1], [], []>} : vector<16x8xbf16>, vector<8x128xbf16>, vector<16x128xf32> -> vector<16x128xf32>
      %25 = arith.addf %20, %24 : vector<16x128xf32>
      %26 = vector.extract_strided_slice %15 {offsets = [2, 0], sizes = [16, 8], strides = [1, 1]} : vector<22x8xbf16> to vector<16x8xbf16>
      %c0_17 = arith.constant 0 : index
      %c2 = arith.constant 2 : index
      %c0_18 = arith.constant 0 : index
      %c0_19 = arith.constant 0 : index
      %27 = vector.load %arg2[%c0_17, %c2, %c0_18, %c0_19] : memref<7x7x8x128xbf16, #tpu.memory_space<vmem>>, vector<1x1x8x128xbf16>
      %28 = vector.shape_cast %27 : vector<1x1x8x128xbf16> to vector<8x128xbf16>
      %cst_20 = arith.constant dense<0.000000e+00> : vector<16x128xf32>
      %29 = tpu.matmul %26, %28, %cst_20 {dimension_numbers = #tpu.dot_dimension_numbers<[1], [0], [0], [1], [0, 0, 1, 1], [], []>} : vector<16x8xbf16>, vector<8x128xbf16>, vector<16x128xf32> -> vector<16x128xf32>
      %30 = arith.addf %25, %29 : vector<16x128xf32>
      %31 = vector.extract_strided_slice %15 {offsets = [3, 0], sizes = [16, 8], strides = [1, 1]} : vector<22x8xbf16> to vector<16x8xbf16>
      %c0_21 = arith.constant 0 : index
      %c3 = arith.constant 3 : index
      %c0_22 = arith.constant 0 : index
      %c0_23 = arith.constant 0 : index
      %32 = vector.load %arg2[%c0_21, %c3, %c0_22, %c0_23] : memref<7x7x8x128xbf16, #tpu.memory_space<vmem>>, vector<1x1x8x128xbf16>
      %33 = vector.shape_cast %32 : vector<1x1x8x128xbf16> to vector<8x128xbf16>
      %cst_24 = arith.constant dense<0.000000e+00> : vector<16x128xf32>
      %34 = tpu.matmul %31, %33, %cst_24 {dimension_numbers = #tpu.dot_dimension_numbers<[1], [0], [0], [1], [0, 0, 1, 1], [], []>} : vector<16x8xbf16>, vector<8x128xbf16>, vector<16x128xf32> -> vector<16x128xf32>
      %35 = arith.addf %30, %34 : vector<16x128xf32>
      %36 = vector.extract_strided_slice %15 {offsets = [4, 0], sizes = [16, 8], strides = [1, 1]} : vector<22x8xbf16> to vector<16x8xbf16>
      %c0_25 = arith.constant 0 : index
      %c4 = arith.constant 4 : index
      %c0_26 = arith.constant 0 : index
      %c0_27 = arith.constant 0 : index
      %37 = vector.load %arg2[%c0_25, %c4, %c0_26, %c0_27] : memref<7x7x8x128xbf16, #tpu.memory_space<vmem>>, vector<1x1x8x128xbf16>
      %38 = vector.shape_cast %37 : vector<1x1x8x128xbf16> to vector<8x128xbf16>
      %cst_28 = arith.constant dense<0.000000e+00> : vector<16x128xf32>
      %39 = tpu.matmul %36, %38, %cst_28 {dimension_numbers = #tpu.dot_dimension_numbers<[1], [0], [0], [1], [0, 0, 1, 1], [], []>} : vector<16x8xbf16>, vector<8x128xbf16>, vector<16x128xf32> -> vector<16x128xf32>
      %40 = arith.addf %35, %39 : vector<16x128xf32>
      %41 = vector.extract_strided_slice %15 {offsets = [5, 0], sizes = [16, 8], strides = [1, 1]} : vector<22x8xbf16> to vector<16x8xbf16>
      %c0_29 = arith.constant 0 : index
      %c5 = arith.constant 5 : index
      %c0_30 = arith.constant 0 : index
      %c0_31 = arith.constant 0 : index
      %42 = vector.load %arg2[%c0_29, %c5, %c0_30, %c0_31] : memref<7x7x8x128xbf16, #tpu.memory_space<vmem>>, vector<1x1x8x128xbf16>
      %43 = vector.shape_cast %42 : vector<1x1x8x128xbf16> to vector<8x128xbf16>
      %cst_32 = arith.constant dense<0.000000e+00> : vector<16x128xf32>
      %44 = tpu.matmul %41, %43, %cst_32 {dimension_numbers = #tpu.dot_dimension_numbers<[1], [0], [0], [1], [0, 0, 1, 1], [], []>} : vector<16x8xbf16>, vector<8x128xbf16>, vector<16x128xf32> -> vector<16x128xf32>
      %45 = arith.addf %40, %44 : vector<16x128xf32>
      %46 = vector.extract_strided_slice %15 {offsets = [6, 0], sizes = [16, 8], strides = [1, 1]} : vector<22x8xbf16> to vector<16x8xbf16>
      %c0_33 = arith.constant 0 : index
      %c6 = arith.constant 6 : index
      %c0_34 = arith.constant 0 : index
      %c0_35 = arith.constant 0 : index
      %47 = vector.load %arg2[%c0_33, %c6, %c0_34, %c0_35] : memref<7x7x8x128xbf16, #tpu.memory_space<vmem>>, vector<1x1x8x128xbf16>
      %48 = vector.shape_cast %47 : vector<1x1x8x128xbf16> to vector<8x128xbf16>
      %cst_36 = arith.constant dense<0.000000e+00> : vector<16x128xf32>
      %49 = tpu.matmul %46, %48, %cst_36 {dimension_numbers = #tpu.dot_dimension_numbers<[1], [0], [0], [1], [0, 0, 1, 1], [], []>} : vector<16x8xbf16>, vector<8x128xbf16>, vector<16x128xf32> -> vector<16x128xf32>
      %50 = arith.addf %45, %49 : vector<16x128xf32>
      %c1_i32_37 = arith.constant 1 : i32
      %51 = arith.addi %arg7, %c1_i32_37 : i32
      %52 = arith.index_cast %51 : i32 to index
      %c0_38 = arith.constant 0 : index
      %c0_39 = arith.constant 0 : index
      %53 = vector.load %arg1[%52, %c0_38, %c0_39] : memref<22x22x8xbf16, #tpu.memory_space<vmem>>, vector<1x22x8xbf16>
      %54 = vector.shape_cast %53 : vector<1x22x8xbf16> to vector<22x8xbf16>
      %55 = arith.extf %54 : vector<22x8xbf16> to vector<22x8xf32>
      %c0_40 = arith.constant 0 : index
      %c0_41 = arith.constant 0 : index
      %56 = vector.load %arg3[%c0_40, %c0_41] : memref<1x8xf32, #tpu.memory_space<vmem>>, vector<1x8xf32>
      %57 = vector.broadcast %56 : vector<1x8xf32> to vector<22x8xf32>
      %58 = arith.mulf %55, %57 : vector<22x8xf32>
      %c0_42 = arith.constant 0 : index
      %c0_43 = arith.constant 0 : index
      %59 = vector.load %arg4[%c0_42, %c0_43] : memref<1x8xf32, #tpu.memory_space<vmem>>, vector<1x8xf32>
      %60 = vector.broadcast %59 : vector<1x8xf32> to vector<22x8xf32>
      %61 = arith.addf %58, %60 : vector<22x8xf32>
      %cst_44 = arith.constant 0.000000e+00 : f32
      %62 = vector.broadcast %cst_44 : f32 to vector<22x8xf32>
      %63 = arith.maximumf %61, %62 : vector<22x8xf32>
      %64 = arith.truncf %63 : vector<22x8xf32> to vector<22x8xbf16>
      %65 = vector.extract_strided_slice %64 {offsets = [0, 0], sizes = [16, 8], strides = [1, 1]} : vector<22x8xbf16> to vector<16x8xbf16>
      %c1_45 = arith.constant 1 : index
      %c0_46 = arith.constant 0 : index
      %c0_47 = arith.constant 0 : index
      %c0_48 = arith.constant 0 : index
      %66 = vector.load %arg2[%c1_45, %c0_46, %c0_47, %c0_48] : memref<7x7x8x128xbf16, #tpu.memory_space<vmem>>, vector<1x1x8x128xbf16>
      %67 = vector.shape_cast %66 : vector<1x1x8x128xbf16> to vector<8x128xbf16>
      %cst_49 = arith.constant dense<0.000000e+00> : vector<16x128xf32>
      %68 = tpu.matmul %65, %67, %cst_49 {dimension_numbers = #tpu.dot_dimension_numbers<[1], [0], [0], [1], [0, 0, 1, 1], [], []>} : vector<16x8xbf16>, vector<8x128xbf16>, vector<16x128xf32> -> vector<16x128xf32>
      %69 = arith.addf %50, %68 : vector<16x128xf32>
      %70 = vector.extract_strided_slice %64 {offsets = [1, 0], sizes = [16, 8], strides = [1, 1]} : vector<22x8xbf16> to vector<16x8xbf16>
      %c1_50 = arith.constant 1 : index
      %c1_51 = arith.constant 1 : index
      %c0_52 = arith.constant 0 : index
      %c0_53 = arith.constant 0 : index
      %71 = vector.load %arg2[%c1_50, %c1_51, %c0_52, %c0_53] : memref<7x7x8x128xbf16, #tpu.memory_space<vmem>>, vector<1x1x8x128xbf16>
      %72 = vector.shape_cast %71 : vector<1x1x8x128xbf16> to vector<8x128xbf16>
      %cst_54 = arith.constant dense<0.000000e+00> : vector<16x128xf32>
      %73 = tpu.matmul %70, %72, %cst_54 {dimension_numbers = #tpu.dot_dimension_numbers<[1], [0], [0], [1], [0, 0, 1, 1], [], []>} : vector<16x8xbf16>, vector<8x128xbf16>, vector<16x128xf32> -> vector<16x128xf32>
      %74 = arith.addf %69, %73 : vector<16x128xf32>
      %75 = vector.extract_strided_slice %64 {offsets = [2, 0], sizes = [16, 8], strides = [1, 1]} : vector<22x8xbf16> to vector<16x8xbf16>
      %c1_55 = arith.constant 1 : index
      %c2_56 = arith.constant 2 : index
      %c0_57 = arith.constant 0 : index
      %c0_58 = arith.constant 0 : index
      %76 = vector.load %arg2[%c1_55, %c2_56, %c0_57, %c0_58] : memref<7x7x8x128xbf16, #tpu.memory_space<vmem>>, vector<1x1x8x128xbf16>
      %77 = vector.shape_cast %76 : vector<1x1x8x128xbf16> to vector<8x128xbf16>
      %cst_59 = arith.constant dense<0.000000e+00> : vector<16x128xf32>
      %78 = tpu.matmul %75, %77, %cst_59 {dimension_numbers = #tpu.dot_dimension_numbers<[1], [0], [0], [1], [0, 0, 1, 1], [], []>} : vector<16x8xbf16>, vector<8x128xbf16>, vector<16x128xf32> -> vector<16x128xf32>
      %79 = arith.addf %74, %78 : vector<16x128xf32>
      %80 = vector.extract_strided_slice %64 {offsets = [3, 0], sizes = [16, 8], strides = [1, 1]} : vector<22x8xbf16> to vector<16x8xbf16>
      %c1_60 = arith.constant 1 : index
      %c3_61 = arith.constant 3 : index
      %c0_62 = arith.constant 0 : index
      %c0_63 = arith.constant 0 : index
      %81 = vector.load %arg2[%c1_60, %c3_61, %c0_62, %c0_63] : memref<7x7x8x128xbf16, #tpu.memory_space<vmem>>, vector<1x1x8x128xbf16>
      %82 = vector.shape_cast %81 : vector<1x1x8x128xbf16> to vector<8x128xbf16>
      %cst_64 = arith.constant dense<0.000000e+00> : vector<16x128xf32>
      %83 = tpu.matmul %80, %82, %cst_64 {dimension_numbers = #tpu.dot_dimension_numbers<[1], [0], [0], [1], [0, 0, 1, 1], [], []>} : vector<16x8xbf16>, vector<8x128xbf16>, vector<16x128xf32> -> vector<16x128xf32>
      %84 = arith.addf %79, %83 : vector<16x128xf32>
      %85 = vector.extract_strided_slice %64 {offsets = [4, 0], sizes = [16, 8], strides = [1, 1]} : vector<22x8xbf16> to vector<16x8xbf16>
      %c1_65 = arith.constant 1 : index
      %c4_66 = arith.constant 4 : index
      %c0_67 = arith.constant 0 : index
      %c0_68 = arith.constant 0 : index
      %86 = vector.load %arg2[%c1_65, %c4_66, %c0_67, %c0_68] : memref<7x7x8x128xbf16, #tpu.memory_space<vmem>>, vector<1x1x8x128xbf16>
      %87 = vector.shape_cast %86 : vector<1x1x8x128xbf16> to vector<8x128xbf16>
      %cst_69 = arith.constant dense<0.000000e+00> : vector<16x128xf32>
      %88 = tpu.matmul %85, %87, %cst_69 {dimension_numbers = #tpu.dot_dimension_numbers<[1], [0], [0], [1], [0, 0, 1, 1], [], []>} : vector<16x8xbf16>, vector<8x128xbf16>, vector<16x128xf32> -> vector<16x128xf32>
      %89 = arith.addf %84, %88 : vector<16x128xf32>
      %90 = vector.extract_strided_slice %64 {offsets = [5, 0], sizes = [16, 8], strides = [1, 1]} : vector<22x8xbf16> to vector<16x8xbf16>
      %c1_70 = arith.constant 1 : index
      %c5_71 = arith.constant 5 : index
      %c0_72 = arith.constant 0 : index
      %c0_73 = arith.constant 0 : index
      %91 = vector.load %arg2[%c1_70, %c5_71, %c0_72, %c0_73] : memref<7x7x8x128xbf16, #tpu.memory_space<vmem>>, vector<1x1x8x128xbf16>
      %92 = vector.shape_cast %91 : vector<1x1x8x128xbf16> to vector<8x128xbf16>
      %cst_74 = arith.constant dense<0.000000e+00> : vector<16x128xf32>
      %93 = tpu.matmul %90, %92, %cst_74 {dimension_numbers = #tpu.dot_dimension_numbers<[1], [0], [0], [1], [0, 0, 1, 1], [], []>} : vector<16x8xbf16>, vector<8x128xbf16>, vector<16x128xf32> -> vector<16x128xf32>
      %94 = arith.addf %89, %93 : vector<16x128xf32>
      %95 = vector.extract_strided_slice %64 {offsets = [6, 0], sizes = [16, 8], strides = [1, 1]} : vector<22x8xbf16> to vector<16x8xbf16>
      %c1_75 = arith.constant 1 : index
      %c6_76 = arith.constant 6 : index
      %c0_77 = arith.constant 0 : index
      %c0_78 = arith.constant 0 : index
      %96 = vector.load %arg2[%c1_75, %c6_76, %c0_77, %c0_78] : memref<7x7x8x128xbf16, #tpu.memory_space<vmem>>, vector<1x1x8x128xbf16>
      %97 = vector.shape_cast %96 : vector<1x1x8x128xbf16> to vector<8x128xbf16>
      %cst_79 = arith.constant dense<0.000000e+00> : vector<16x128xf32>
      %98 = tpu.matmul %95, %97, %cst_79 {dimension_numbers = #tpu.dot_dimension_numbers<[1], [0], [0], [1], [0, 0, 1, 1], [], []>} : vector<16x8xbf16>, vector<8x128xbf16>, vector<16x128xf32> -> vector<16x128xf32>
      %99 = arith.addf %94, %98 : vector<16x128xf32>
      %c2_i32 = arith.constant 2 : i32
      %100 = arith.addi %arg7, %c2_i32 : i32
      %101 = arith.index_cast %100 : i32 to index
      %c0_80 = arith.constant 0 : index
      %c0_81 = arith.constant 0 : index
      %102 = vector.load %arg1[%101, %c0_80, %c0_81] : memref<22x22x8xbf16, #tpu.memory_space<vmem>>, vector<1x22x8xbf16>
      %103 = vector.shape_cast %102 : vector<1x22x8xbf16> to vector<22x8xbf16>
      %104 = arith.extf %103 : vector<22x8xbf16> to vector<22x8xf32>
      %c0_82 = arith.constant 0 : index
      %c0_83 = arith.constant 0 : index
      %105 = vector.load %arg3[%c0_82, %c0_83] : memref<1x8xf32, #tpu.memory_space<vmem>>, vector<1x8xf32>
      %106 = vector.broadcast %105 : vector<1x8xf32> to vector<22x8xf32>
      %107 = arith.mulf %104, %106 : vector<22x8xf32>
      %c0_84 = arith.constant 0 : index
      %c0_85 = arith.constant 0 : index
      %108 = vector.load %arg4[%c0_84, %c0_85] : memref<1x8xf32, #tpu.memory_space<vmem>>, vector<1x8xf32>
      %109 = vector.broadcast %108 : vector<1x8xf32> to vector<22x8xf32>
      %110 = arith.addf %107, %109 : vector<22x8xf32>
      %cst_86 = arith.constant 0.000000e+00 : f32
      %111 = vector.broadcast %cst_86 : f32 to vector<22x8xf32>
      %112 = arith.maximumf %110, %111 : vector<22x8xf32>
      %113 = arith.truncf %112 : vector<22x8xf32> to vector<22x8xbf16>
      %114 = vector.extract_strided_slice %113 {offsets = [0, 0], sizes = [16, 8], strides = [1, 1]} : vector<22x8xbf16> to vector<16x8xbf16>
      %c2_87 = arith.constant 2 : index
      %c0_88 = arith.constant 0 : index
      %c0_89 = arith.constant 0 : index
      %c0_90 = arith.constant 0 : index
      %115 = vector.load %arg2[%c2_87, %c0_88, %c0_89, %c0_90] : memref<7x7x8x128xbf16, #tpu.memory_space<vmem>>, vector<1x1x8x128xbf16>
      %116 = vector.shape_cast %115 : vector<1x1x8x128xbf16> to vector<8x128xbf16>
      %cst_91 = arith.constant dense<0.000000e+00> : vector<16x128xf32>
      %117 = tpu.matmul %114, %116, %cst_91 {dimension_numbers = #tpu.dot_dimension_numbers<[1], [0], [0], [1], [0, 0, 1, 1], [], []>} : vector<16x8xbf16>, vector<8x128xbf16>, vector<16x128xf32> -> vector<16x128xf32>
      %118 = arith.addf %99, %117 : vector<16x128xf32>
      %119 = vector.extract_strided_slice %113 {offsets = [1, 0], sizes = [16, 8], strides = [1, 1]} : vector<22x8xbf16> to vector<16x8xbf16>
      %c2_92 = arith.constant 2 : index
      %c1_93 = arith.constant 1 : index
      %c0_94 = arith.constant 0 : index
      %c0_95 = arith.constant 0 : index
      %120 = vector.load %arg2[%c2_92, %c1_93, %c0_94, %c0_95] : memref<7x7x8x128xbf16, #tpu.memory_space<vmem>>, vector<1x1x8x128xbf16>
      %121 = vector.shape_cast %120 : vector<1x1x8x128xbf16> to vector<8x128xbf16>
      %cst_96 = arith.constant dense<0.000000e+00> : vector<16x128xf32>
      %122 = tpu.matmul %119, %121, %cst_96 {dimension_numbers = #tpu.dot_dimension_numbers<[1], [0], [0], [1], [0, 0, 1, 1], [], []>} : vector<16x8xbf16>, vector<8x128xbf16>, vector<16x128xf32> -> vector<16x128xf32>
      %123 = arith.addf %118, %122 : vector<16x128xf32>
      %124 = vector.extract_strided_slice %113 {offsets = [2, 0], sizes = [16, 8], strides = [1, 1]} : vector<22x8xbf16> to vector<16x8xbf16>
      %c2_97 = arith.constant 2 : index
      %c2_98 = arith.constant 2 : index
      %c0_99 = arith.constant 0 : index
      %c0_100 = arith.constant 0 : index
      %125 = vector.load %arg2[%c2_97, %c2_98, %c0_99, %c0_100] : memref<7x7x8x128xbf16, #tpu.memory_space<vmem>>, vector<1x1x8x128xbf16>
      %126 = vector.shape_cast %125 : vector<1x1x8x128xbf16> to vector<8x128xbf16>
      %cst_101 = arith.constant dense<0.000000e+00> : vector<16x128xf32>
      %127 = tpu.matmul %124, %126, %cst_101 {dimension_numbers = #tpu.dot_dimension_numbers<[1], [0], [0], [1], [0, 0, 1, 1], [], []>} : vector<16x8xbf16>, vector<8x128xbf16>, vector<16x128xf32> -> vector<16x128xf32>
      %128 = arith.addf %123, %127 : vector<16x128xf32>
      %129 = vector.extract_strided_slice %113 {offsets = [3, 0], sizes = [16, 8], strides = [1, 1]} : vector<22x8xbf16> to vector<16x8xbf16>
      %c2_102 = arith.constant 2 : index
      %c3_103 = arith.constant 3 : index
      %c0_104 = arith.constant 0 : index
      %c0_105 = arith.constant 0 : index
      %130 = vector.load %arg2[%c2_102, %c3_103, %c0_104, %c0_105] : memref<7x7x8x128xbf16, #tpu.memory_space<vmem>>, vector<1x1x8x128xbf16>
      %131 = vector.shape_cast %130 : vector<1x1x8x128xbf16> to vector<8x128xbf16>
      %cst_106 = arith.constant dense<0.000000e+00> : vector<16x128xf32>
      %132 = tpu.matmul %129, %131, %cst_106 {dimension_numbers = #tpu.dot_dimension_numbers<[1], [0], [0], [1], [0, 0, 1, 1], [], []>} : vector<16x8xbf16>, vector<8x128xbf16>, vector<16x128xf32> -> vector<16x128xf32>
      %133 = arith.addf %128, %132 : vector<16x128xf32>
      %134 = vector.extract_strided_slice %113 {offsets = [4, 0], sizes = [16, 8], strides = [1, 1]} : vector<22x8xbf16> to vector<16x8xbf16>
      %c2_107 = arith.constant 2 : index
      %c4_108 = arith.constant 4 : index
      %c0_109 = arith.constant 0 : index
      %c0_110 = arith.constant 0 : index
      %135 = vector.load %arg2[%c2_107, %c4_108, %c0_109, %c0_110] : memref<7x7x8x128xbf16, #tpu.memory_space<vmem>>, vector<1x1x8x128xbf16>
      %136 = vector.shape_cast %135 : vector<1x1x8x128xbf16> to vector<8x128xbf16>
      %cst_111 = arith.constant dense<0.000000e+00> : vector<16x128xf32>
      %137 = tpu.matmul %134, %136, %cst_111 {dimension_numbers = #tpu.dot_dimension_numbers<[1], [0], [0], [1], [0, 0, 1, 1], [], []>} : vector<16x8xbf16>, vector<8x128xbf16>, vector<16x128xf32> -> vector<16x128xf32>
      %138 = arith.addf %133, %137 : vector<16x128xf32>
      %139 = vector.extract_strided_slice %113 {offsets = [5, 0], sizes = [16, 8], strides = [1, 1]} : vector<22x8xbf16> to vector<16x8xbf16>
      %c2_112 = arith.constant 2 : index
      %c5_113 = arith.constant 5 : index
      %c0_114 = arith.constant 0 : index
      %c0_115 = arith.constant 0 : index
      %140 = vector.load %arg2[%c2_112, %c5_113, %c0_114, %c0_115] : memref<7x7x8x128xbf16, #tpu.memory_space<vmem>>, vector<1x1x8x128xbf16>
      %141 = vector.shape_cast %140 : vector<1x1x8x128xbf16> to vector<8x128xbf16>
      %cst_116 = arith.constant dense<0.000000e+00> : vector<16x128xf32>
      %142 = tpu.matmul %139, %141, %cst_116 {dimension_numbers = #tpu.dot_dimension_numbers<[1], [0], [0], [1], [0, 0, 1, 1], [], []>} : vector<16x8xbf16>, vector<8x128xbf16>, vector<16x128xf32> -> vector<16x128xf32>
      %143 = arith.addf %138, %142 : vector<16x128xf32>
      %144 = vector.extract_strided_slice %113 {offsets = [6, 0], sizes = [16, 8], strides = [1, 1]} : vector<22x8xbf16> to vector<16x8xbf16>
      %c2_117 = arith.constant 2 : index
      %c6_118 = arith.constant 6 : index
      %c0_119 = arith.constant 0 : index
      %c0_120 = arith.constant 0 : index
      %145 = vector.load %arg2[%c2_117, %c6_118, %c0_119, %c0_120] : memref<7x7x8x128xbf16, #tpu.memory_space<vmem>>, vector<1x1x8x128xbf16>
      %146 = vector.shape_cast %145 : vector<1x1x8x128xbf16> to vector<8x128xbf16>
      %cst_121 = arith.constant dense<0.000000e+00> : vector<16x128xf32>
      %147 = tpu.matmul %144, %146, %cst_121 {dimension_numbers = #tpu.dot_dimension_numbers<[1], [0], [0], [1], [0, 0, 1, 1], [], []>} : vector<16x8xbf16>, vector<8x128xbf16>, vector<16x128xf32> -> vector<16x128xf32>
      %148 = arith.addf %143, %147 : vector<16x128xf32>
      %c3_i32 = arith.constant 3 : i32
      %149 = arith.addi %arg7, %c3_i32 : i32
      %150 = arith.index_cast %149 : i32 to index
      %c0_122 = arith.constant 0 : index
      %c0_123 = arith.constant 0 : index
      %151 = vector.load %arg1[%150, %c0_122, %c0_123] : memref<22x22x8xbf16, #tpu.memory_space<vmem>>, vector<1x22x8xbf16>
      %152 = vector.shape_cast %151 : vector<1x22x8xbf16> to vector<22x8xbf16>
      %153 = arith.extf %152 : vector<22x8xbf16> to vector<22x8xf32>
      %c0_124 = arith.constant 0 : index
      %c0_125 = arith.constant 0 : index
      %154 = vector.load %arg3[%c0_124, %c0_125] : memref<1x8xf32, #tpu.memory_space<vmem>>, vector<1x8xf32>
      %155 = vector.broadcast %154 : vector<1x8xf32> to vector<22x8xf32>
      %156 = arith.mulf %153, %155 : vector<22x8xf32>
      %c0_126 = arith.constant 0 : index
      %c0_127 = arith.constant 0 : index
      %157 = vector.load %arg4[%c0_126, %c0_127] : memref<1x8xf32, #tpu.memory_space<vmem>>, vector<1x8xf32>
      %158 = vector.broadcast %157 : vector<1x8xf32> to vector<22x8xf32>
      %159 = arith.addf %156, %158 : vector<22x8xf32>
      %cst_128 = arith.constant 0.000000e+00 : f32
      %160 = vector.broadcast %cst_128 : f32 to vector<22x8xf32>
      %161 = arith.maximumf %159, %160 : vector<22x8xf32>
      %162 = arith.truncf %161 : vector<22x8xf32> to vector<22x8xbf16>
      %163 = vector.extract_strided_slice %162 {offsets = [0, 0], sizes = [16, 8], strides = [1, 1]} : vector<22x8xbf16> to vector<16x8xbf16>
      %c3_129 = arith.constant 3 : index
      %c0_130 = arith.constant 0 : index
      %c0_131 = arith.constant 0 : index
      %c0_132 = arith.constant 0 : index
      %164 = vector.load %arg2[%c3_129, %c0_130, %c0_131, %c0_132] : memref<7x7x8x128xbf16, #tpu.memory_space<vmem>>, vector<1x1x8x128xbf16>
      %165 = vector.shape_cast %164 : vector<1x1x8x128xbf16> to vector<8x128xbf16>
      %cst_133 = arith.constant dense<0.000000e+00> : vector<16x128xf32>
      %166 = tpu.matmul %163, %165, %cst_133 {dimension_numbers = #tpu.dot_dimension_numbers<[1], [0], [0], [1], [0, 0, 1, 1], [], []>} : vector<16x8xbf16>, vector<8x128xbf16>, vector<16x128xf32> -> vector<16x128xf32>
      %167 = arith.addf %148, %166 : vector<16x128xf32>
      %168 = vector.extract_strided_slice %162 {offsets = [1, 0], sizes = [16, 8], strides = [1, 1]} : vector<22x8xbf16> to vector<16x8xbf16>
      %c3_134 = arith.constant 3 : index
      %c1_135 = arith.constant 1 : index
      %c0_136 = arith.constant 0 : index
      %c0_137 = arith.constant 0 : index
      %169 = vector.load %arg2[%c3_134, %c1_135, %c0_136, %c0_137] : memref<7x7x8x128xbf16, #tpu.memory_space<vmem>>, vector<1x1x8x128xbf16>
      %170 = vector.shape_cast %169 : vector<1x1x8x128xbf16> to vector<8x128xbf16>
      %cst_138 = arith.constant dense<0.000000e+00> : vector<16x128xf32>
      %171 = tpu.matmul %168, %170, %cst_138 {dimension_numbers = #tpu.dot_dimension_numbers<[1], [0], [0], [1], [0, 0, 1, 1], [], []>} : vector<16x8xbf16>, vector<8x128xbf16>, vector<16x128xf32> -> vector<16x128xf32>
      %172 = arith.addf %167, %171 : vector<16x128xf32>
      %173 = vector.extract_strided_slice %162 {offsets = [2, 0], sizes = [16, 8], strides = [1, 1]} : vector<22x8xbf16> to vector<16x8xbf16>
      %c3_139 = arith.constant 3 : index
      %c2_140 = arith.constant 2 : index
      %c0_141 = arith.constant 0 : index
      %c0_142 = arith.constant 0 : index
      %174 = vector.load %arg2[%c3_139, %c2_140, %c0_141, %c0_142] : memref<7x7x8x128xbf16, #tpu.memory_space<vmem>>, vector<1x1x8x128xbf16>
      %175 = vector.shape_cast %174 : vector<1x1x8x128xbf16> to vector<8x128xbf16>
      %cst_143 = arith.constant dense<0.000000e+00> : vector<16x128xf32>
      %176 = tpu.matmul %173, %175, %cst_143 {dimension_numbers = #tpu.dot_dimension_numbers<[1], [0], [0], [1], [0, 0, 1, 1], [], []>} : vector<16x8xbf16>, vector<8x128xbf16>, vector<16x128xf32> -> vector<16x128xf32>
      %177 = arith.addf %172, %176 : vector<16x128xf32>
      %178 = vector.extract_strided_slice %162 {offsets = [3, 0], sizes = [16, 8], strides = [1, 1]} : vector<22x8xbf16> to vector<16x8xbf16>
      %c3_144 = arith.constant 3 : index
      %c3_145 = arith.constant 3 : index
      %c0_146 = arith.constant 0 : index
      %c0_147 = arith.constant 0 : index
      %179 = vector.load %arg2[%c3_144, %c3_145, %c0_146, %c0_147] : memref<7x7x8x128xbf16, #tpu.memory_space<vmem>>, vector<1x1x8x128xbf16>
      %180 = vector.shape_cast %179 : vector<1x1x8x128xbf16> to vector<8x128xbf16>
      %cst_148 = arith.constant dense<0.000000e+00> : vector<16x128xf32>
      %181 = tpu.matmul %178, %180, %cst_148 {dimension_numbers = #tpu.dot_dimension_numbers<[1], [0], [0], [1], [0, 0, 1, 1], [], []>} : vector<16x8xbf16>, vector<8x128xbf16>, vector<16x128xf32> -> vector<16x128xf32>
      %182 = arith.addf %177, %181 : vector<16x128xf32>
      %183 = vector.extract_strided_slice %162 {offsets = [4, 0], sizes = [16, 8], strides = [1, 1]} : vector<22x8xbf16> to vector<16x8xbf16>
      %c3_149 = arith.constant 3 : index
      %c4_150 = arith.constant 4 : index
      %c0_151 = arith.constant 0 : index
      %c0_152 = arith.constant 0 : index
      %184 = vector.load %arg2[%c3_149, %c4_150, %c0_151, %c0_152] : memref<7x7x8x128xbf16, #tpu.memory_space<vmem>>, vector<1x1x8x128xbf16>
      %185 = vector.shape_cast %184 : vector<1x1x8x128xbf16> to vector<8x128xbf16>
      %cst_153 = arith.constant dense<0.000000e+00> : vector<16x128xf32>
      %186 = tpu.matmul %183, %185, %cst_153 {dimension_numbers = #tpu.dot_dimension_numbers<[1], [0], [0], [1], [0, 0, 1, 1], [], []>} : vector<16x8xbf16>, vector<8x128xbf16>, vector<16x128xf32> -> vector<16x128xf32>
      %187 = arith.addf %182, %186 : vector<16x128xf32>
      %188 = vector.extract_strided_slice %162 {offsets = [5, 0], sizes = [16, 8], strides = [1, 1]} : vector<22x8xbf16> to vector<16x8xbf16>
      %c3_154 = arith.constant 3 : index
      %c5_155 = arith.constant 5 : index
      %c0_156 = arith.constant 0 : index
      %c0_157 = arith.constant 0 : index
      %189 = vector.load %arg2[%c3_154, %c5_155, %c0_156, %c0_157] : memref<7x7x8x128xbf16, #tpu.memory_space<vmem>>, vector<1x1x8x128xbf16>
      %190 = vector.shape_cast %189 : vector<1x1x8x128xbf16> to vector<8x128xbf16>
      %cst_158 = arith.constant dense<0.000000e+00> : vector<16x128xf32>
      %191 = tpu.matmul %188, %190, %cst_158 {dimension_numbers = #tpu.dot_dimension_numbers<[1], [0], [0], [1], [0, 0, 1, 1], [], []>} : vector<16x8xbf16>, vector<8x128xbf16>, vector<16x128xf32> -> vector<16x128xf32>
      %192 = arith.addf %187, %191 : vector<16x128xf32>
      %193 = vector.extract_strided_slice %162 {offsets = [6, 0], sizes = [16, 8], strides = [1, 1]} : vector<22x8xbf16> to vector<16x8xbf16>
      %c3_159 = arith.constant 3 : index
      %c6_160 = arith.constant 6 : index
      %c0_161 = arith.constant 0 : index
      %c0_162 = arith.constant 0 : index
      %194 = vector.load %arg2[%c3_159, %c6_160, %c0_161, %c0_162] : memref<7x7x8x128xbf16, #tpu.memory_space<vmem>>, vector<1x1x8x128xbf16>
      %195 = vector.shape_cast %194 : vector<1x1x8x128xbf16> to vector<8x128xbf16>
      %cst_163 = arith.constant dense<0.000000e+00> : vector<16x128xf32>
      %196 = tpu.matmul %193, %195, %cst_163 {dimension_numbers = #tpu.dot_dimension_numbers<[1], [0], [0], [1], [0, 0, 1, 1], [], []>} : vector<16x8xbf16>, vector<8x128xbf16>, vector<16x128xf32> -> vector<16x128xf32>
      %197 = arith.addf %192, %196 : vector<16x128xf32>
      %c4_i32 = arith.constant 4 : i32
      %198 = arith.addi %arg7, %c4_i32 : i32
      %199 = arith.index_cast %198 : i32 to index
      %c0_164 = arith.constant 0 : index
      %c0_165 = arith.constant 0 : index
      %200 = vector.load %arg1[%199, %c0_164, %c0_165] : memref<22x22x8xbf16, #tpu.memory_space<vmem>>, vector<1x22x8xbf16>
      %201 = vector.shape_cast %200 : vector<1x22x8xbf16> to vector<22x8xbf16>
      %202 = arith.extf %201 : vector<22x8xbf16> to vector<22x8xf32>
      %c0_166 = arith.constant 0 : index
      %c0_167 = arith.constant 0 : index
      %203 = vector.load %arg3[%c0_166, %c0_167] : memref<1x8xf32, #tpu.memory_space<vmem>>, vector<1x8xf32>
      %204 = vector.broadcast %203 : vector<1x8xf32> to vector<22x8xf32>
      %205 = arith.mulf %202, %204 : vector<22x8xf32>
      %c0_168 = arith.constant 0 : index
      %c0_169 = arith.constant 0 : index
      %206 = vector.load %arg4[%c0_168, %c0_169] : memref<1x8xf32, #tpu.memory_space<vmem>>, vector<1x8xf32>
      %207 = vector.broadcast %206 : vector<1x8xf32> to vector<22x8xf32>
      %208 = arith.addf %205, %207 : vector<22x8xf32>
      %cst_170 = arith.constant 0.000000e+00 : f32
      %209 = vector.broadcast %cst_170 : f32 to vector<22x8xf32>
      %210 = arith.maximumf %208, %209 : vector<22x8xf32>
      %211 = arith.truncf %210 : vector<22x8xf32> to vector<22x8xbf16>
      %212 = vector.extract_strided_slice %211 {offsets = [0, 0], sizes = [16, 8], strides = [1, 1]} : vector<22x8xbf16> to vector<16x8xbf16>
      %c4_171 = arith.constant 4 : index
      %c0_172 = arith.constant 0 : index
      %c0_173 = arith.constant 0 : index
      %c0_174 = arith.constant 0 : index
      %213 = vector.load %arg2[%c4_171, %c0_172, %c0_173, %c0_174] : memref<7x7x8x128xbf16, #tpu.memory_space<vmem>>, vector<1x1x8x128xbf16>
      %214 = vector.shape_cast %213 : vector<1x1x8x128xbf16> to vector<8x128xbf16>
      %cst_175 = arith.constant dense<0.000000e+00> : vector<16x128xf32>
      %215 = tpu.matmul %212, %214, %cst_175 {dimension_numbers = #tpu.dot_dimension_numbers<[1], [0], [0], [1], [0, 0, 1, 1], [], []>} : vector<16x8xbf16>, vector<8x128xbf16>, vector<16x128xf32> -> vector<16x128xf32>
      %216 = arith.addf %197, %215 : vector<16x128xf32>
      %217 = vector.extract_strided_slice %211 {offsets = [1, 0], sizes = [16, 8], strides = [1, 1]} : vector<22x8xbf16> to vector<16x8xbf16>
      %c4_176 = arith.constant 4 : index
      %c1_177 = arith.constant 1 : index
      %c0_178 = arith.constant 0 : index
      %c0_179 = arith.constant 0 : index
      %218 = vector.load %arg2[%c4_176, %c1_177, %c0_178, %c0_179] : memref<7x7x8x128xbf16, #tpu.memory_space<vmem>>, vector<1x1x8x128xbf16>
      %219 = vector.shape_cast %218 : vector<1x1x8x128xbf16> to vector<8x128xbf16>
      %cst_180 = arith.constant dense<0.000000e+00> : vector<16x128xf32>
      %220 = tpu.matmul %217, %219, %cst_180 {dimension_numbers = #tpu.dot_dimension_numbers<[1], [0], [0], [1], [0, 0, 1, 1], [], []>} : vector<16x8xbf16>, vector<8x128xbf16>, vector<16x128xf32> -> vector<16x128xf32>
      %221 = arith.addf %216, %220 : vector<16x128xf32>
      %222 = vector.extract_strided_slice %211 {offsets = [2, 0], sizes = [16, 8], strides = [1, 1]} : vector<22x8xbf16> to vector<16x8xbf16>
      %c4_181 = arith.constant 4 : index
      %c2_182 = arith.constant 2 : index
      %c0_183 = arith.constant 0 : index
      %c0_184 = arith.constant 0 : index
      %223 = vector.load %arg2[%c4_181, %c2_182, %c0_183, %c0_184] : memref<7x7x8x128xbf16, #tpu.memory_space<vmem>>, vector<1x1x8x128xbf16>
      %224 = vector.shape_cast %223 : vector<1x1x8x128xbf16> to vector<8x128xbf16>
      %cst_185 = arith.constant dense<0.000000e+00> : vector<16x128xf32>
      %225 = tpu.matmul %222, %224, %cst_185 {dimension_numbers = #tpu.dot_dimension_numbers<[1], [0], [0], [1], [0, 0, 1, 1], [], []>} : vector<16x8xbf16>, vector<8x128xbf16>, vector<16x128xf32> -> vector<16x128xf32>
      %226 = arith.addf %221, %225 : vector<16x128xf32>
      %227 = vector.extract_strided_slice %211 {offsets = [3, 0], sizes = [16, 8], strides = [1, 1]} : vector<22x8xbf16> to vector<16x8xbf16>
      %c4_186 = arith.constant 4 : index
      %c3_187 = arith.constant 3 : index
      %c0_188 = arith.constant 0 : index
      %c0_189 = arith.constant 0 : index
      %228 = vector.load %arg2[%c4_186, %c3_187, %c0_188, %c0_189] : memref<7x7x8x128xbf16, #tpu.memory_space<vmem>>, vector<1x1x8x128xbf16>
      %229 = vector.shape_cast %228 : vector<1x1x8x128xbf16> to vector<8x128xbf16>
      %cst_190 = arith.constant dense<0.000000e+00> : vector<16x128xf32>
      %230 = tpu.matmul %227, %229, %cst_190 {dimension_numbers = #tpu.dot_dimension_numbers<[1], [0], [0], [1], [0, 0, 1, 1], [], []>} : vector<16x8xbf16>, vector<8x128xbf16>, vector<16x128xf32> -> vector<16x128xf32>
      %231 = arith.addf %226, %230 : vector<16x128xf32>
      %232 = vector.extract_strided_slice %211 {offsets = [4, 0], sizes = [16, 8], strides = [1, 1]} : vector<22x8xbf16> to vector<16x8xbf16>
      %c4_191 = arith.constant 4 : index
      %c4_192 = arith.constant 4 : index
      %c0_193 = arith.constant 0 : index
      %c0_194 = arith.constant 0 : index
      %233 = vector.load %arg2[%c4_191, %c4_192, %c0_193, %c0_194] : memref<7x7x8x128xbf16, #tpu.memory_space<vmem>>, vector<1x1x8x128xbf16>
      %234 = vector.shape_cast %233 : vector<1x1x8x128xbf16> to vector<8x128xbf16>
      %cst_195 = arith.constant dense<0.000000e+00> : vector<16x128xf32>
      %235 = tpu.matmul %232, %234, %cst_195 {dimension_numbers = #tpu.dot_dimension_numbers<[1], [0], [0], [1], [0, 0, 1, 1], [], []>} : vector<16x8xbf16>, vector<8x128xbf16>, vector<16x128xf32> -> vector<16x128xf32>
      %236 = arith.addf %231, %235 : vector<16x128xf32>
      %237 = vector.extract_strided_slice %211 {offsets = [5, 0], sizes = [16, 8], strides = [1, 1]} : vector<22x8xbf16> to vector<16x8xbf16>
      %c4_196 = arith.constant 4 : index
      %c5_197 = arith.constant 5 : index
      %c0_198 = arith.constant 0 : index
      %c0_199 = arith.constant 0 : index
      %238 = vector.load %arg2[%c4_196, %c5_197, %c0_198, %c0_199] : memref<7x7x8x128xbf16, #tpu.memory_space<vmem>>, vector<1x1x8x128xbf16>
      %239 = vector.shape_cast %238 : vector<1x1x8x128xbf16> to vector<8x128xbf16>
      %cst_200 = arith.constant dense<0.000000e+00> : vector<16x128xf32>
      %240 = tpu.matmul %237, %239, %cst_200 {dimension_numbers = #tpu.dot_dimension_numbers<[1], [0], [0], [1], [0, 0, 1, 1], [], []>} : vector<16x8xbf16>, vector<8x128xbf16>, vector<16x128xf32> -> vector<16x128xf32>
      %241 = arith.addf %236, %240 : vector<16x128xf32>
      %242 = vector.extract_strided_slice %211 {offsets = [6, 0], sizes = [16, 8], strides = [1, 1]} : vector<22x8xbf16> to vector<16x8xbf16>
      %c4_201 = arith.constant 4 : index
      %c6_202 = arith.constant 6 : index
      %c0_203 = arith.constant 0 : index
      %c0_204 = arith.constant 0 : index
      %243 = vector.load %arg2[%c4_201, %c6_202, %c0_203, %c0_204] : memref<7x7x8x128xbf16, #tpu.memory_space<vmem>>, vector<1x1x8x128xbf16>
      %244 = vector.shape_cast %243 : vector<1x1x8x128xbf16> to vector<8x128xbf16>
      %cst_205 = arith.constant dense<0.000000e+00> : vector<16x128xf32>
      %245 = tpu.matmul %242, %244, %cst_205 {dimension_numbers = #tpu.dot_dimension_numbers<[1], [0], [0], [1], [0, 0, 1, 1], [], []>} : vector<16x8xbf16>, vector<8x128xbf16>, vector<16x128xf32> -> vector<16x128xf32>
      %246 = arith.addf %241, %245 : vector<16x128xf32>
      %c5_i32 = arith.constant 5 : i32
      %247 = arith.addi %arg7, %c5_i32 : i32
      %248 = arith.index_cast %247 : i32 to index
      %c0_206 = arith.constant 0 : index
      %c0_207 = arith.constant 0 : index
      %249 = vector.load %arg1[%248, %c0_206, %c0_207] : memref<22x22x8xbf16, #tpu.memory_space<vmem>>, vector<1x22x8xbf16>
      %250 = vector.shape_cast %249 : vector<1x22x8xbf16> to vector<22x8xbf16>
      %251 = arith.extf %250 : vector<22x8xbf16> to vector<22x8xf32>
      %c0_208 = arith.constant 0 : index
      %c0_209 = arith.constant 0 : index
      %252 = vector.load %arg3[%c0_208, %c0_209] : memref<1x8xf32, #tpu.memory_space<vmem>>, vector<1x8xf32>
      %253 = vector.broadcast %252 : vector<1x8xf32> to vector<22x8xf32>
      %254 = arith.mulf %251, %253 : vector<22x8xf32>
      %c0_210 = arith.constant 0 : index
      %c0_211 = arith.constant 0 : index
      %255 = vector.load %arg4[%c0_210, %c0_211] : memref<1x8xf32, #tpu.memory_space<vmem>>, vector<1x8xf32>
      %256 = vector.broadcast %255 : vector<1x8xf32> to vector<22x8xf32>
      %257 = arith.addf %254, %256 : vector<22x8xf32>
      %cst_212 = arith.constant 0.000000e+00 : f32
      %258 = vector.broadcast %cst_212 : f32 to vector<22x8xf32>
      %259 = arith.maximumf %257, %258 : vector<22x8xf32>
      %260 = arith.truncf %259 : vector<22x8xf32> to vector<22x8xbf16>
      %261 = vector.extract_strided_slice %260 {offsets = [0, 0], sizes = [16, 8], strides = [1, 1]} : vector<22x8xbf16> to vector<16x8xbf16>
      %c5_213 = arith.constant 5 : index
      %c0_214 = arith.constant 0 : index
      %c0_215 = arith.constant 0 : index
      %c0_216 = arith.constant 0 : index
      %262 = vector.load %arg2[%c5_213, %c0_214, %c0_215, %c0_216] : memref<7x7x8x128xbf16, #tpu.memory_space<vmem>>, vector<1x1x8x128xbf16>
      %263 = vector.shape_cast %262 : vector<1x1x8x128xbf16> to vector<8x128xbf16>
      %cst_217 = arith.constant dense<0.000000e+00> : vector<16x128xf32>
      %264 = tpu.matmul %261, %263, %cst_217 {dimension_numbers = #tpu.dot_dimension_numbers<[1], [0], [0], [1], [0, 0, 1, 1], [], []>} : vector<16x8xbf16>, vector<8x128xbf16>, vector<16x128xf32> -> vector<16x128xf32>
      %265 = arith.addf %246, %264 : vector<16x128xf32>
      %266 = vector.extract_strided_slice %260 {offsets = [1, 0], sizes = [16, 8], strides = [1, 1]} : vector<22x8xbf16> to vector<16x8xbf16>
      %c5_218 = arith.constant 5 : index
      %c1_219 = arith.constant 1 : index
      %c0_220 = arith.constant 0 : index
      %c0_221 = arith.constant 0 : index
      %267 = vector.load %arg2[%c5_218, %c1_219, %c0_220, %c0_221] : memref<7x7x8x128xbf16, #tpu.memory_space<vmem>>, vector<1x1x8x128xbf16>
      %268 = vector.shape_cast %267 : vector<1x1x8x128xbf16> to vector<8x128xbf16>
      %cst_222 = arith.constant dense<0.000000e+00> : vector<16x128xf32>
      %269 = tpu.matmul %266, %268, %cst_222 {dimension_numbers = #tpu.dot_dimension_numbers<[1], [0], [0], [1], [0, 0, 1, 1], [], []>} : vector<16x8xbf16>, vector<8x128xbf16>, vector<16x128xf32> -> vector<16x128xf32>
      %270 = arith.addf %265, %269 : vector<16x128xf32>
      %271 = vector.extract_strided_slice %260 {offsets = [2, 0], sizes = [16, 8], strides = [1, 1]} : vector<22x8xbf16> to vector<16x8xbf16>
      %c5_223 = arith.constant 5 : index
      %c2_224 = arith.constant 2 : index
      %c0_225 = arith.constant 0 : index
      %c0_226 = arith.constant 0 : index
      %272 = vector.load %arg2[%c5_223, %c2_224, %c0_225, %c0_226] : memref<7x7x8x128xbf16, #tpu.memory_space<vmem>>, vector<1x1x8x128xbf16>
      %273 = vector.shape_cast %272 : vector<1x1x8x128xbf16> to vector<8x128xbf16>
      %cst_227 = arith.constant dense<0.000000e+00> : vector<16x128xf32>
      %274 = tpu.matmul %271, %273, %cst_227 {dimension_numbers = #tpu.dot_dimension_numbers<[1], [0], [0], [1], [0, 0, 1, 1], [], []>} : vector<16x8xbf16>, vector<8x128xbf16>, vector<16x128xf32> -> vector<16x128xf32>
      %275 = arith.addf %270, %274 : vector<16x128xf32>
      %276 = vector.extract_strided_slice %260 {offsets = [3, 0], sizes = [16, 8], strides = [1, 1]} : vector<22x8xbf16> to vector<16x8xbf16>
      %c5_228 = arith.constant 5 : index
      %c3_229 = arith.constant 3 : index
      %c0_230 = arith.constant 0 : index
      %c0_231 = arith.constant 0 : index
      %277 = vector.load %arg2[%c5_228, %c3_229, %c0_230, %c0_231] : memref<7x7x8x128xbf16, #tpu.memory_space<vmem>>, vector<1x1x8x128xbf16>
      %278 = vector.shape_cast %277 : vector<1x1x8x128xbf16> to vector<8x128xbf16>
      %cst_232 = arith.constant dense<0.000000e+00> : vector<16x128xf32>
      %279 = tpu.matmul %276, %278, %cst_232 {dimension_numbers = #tpu.dot_dimension_numbers<[1], [0], [0], [1], [0, 0, 1, 1], [], []>} : vector<16x8xbf16>, vector<8x128xbf16>, vector<16x128xf32> -> vector<16x128xf32>
      %280 = arith.addf %275, %279 : vector<16x128xf32>
      %281 = vector.extract_strided_slice %260 {offsets = [4, 0], sizes = [16, 8], strides = [1, 1]} : vector<22x8xbf16> to vector<16x8xbf16>
      %c5_233 = arith.constant 5 : index
      %c4_234 = arith.constant 4 : index
      %c0_235 = arith.constant 0 : index
      %c0_236 = arith.constant 0 : index
      %282 = vector.load %arg2[%c5_233, %c4_234, %c0_235, %c0_236] : memref<7x7x8x128xbf16, #tpu.memory_space<vmem>>, vector<1x1x8x128xbf16>
      %283 = vector.shape_cast %282 : vector<1x1x8x128xbf16> to vector<8x128xbf16>
      %cst_237 = arith.constant dense<0.000000e+00> : vector<16x128xf32>
      %284 = tpu.matmul %281, %283, %cst_237 {dimension_numbers = #tpu.dot_dimension_numbers<[1], [0], [0], [1], [0, 0, 1, 1], [], []>} : vector<16x8xbf16>, vector<8x128xbf16>, vector<16x128xf32> -> vector<16x128xf32>
      %285 = arith.addf %280, %284 : vector<16x128xf32>
      %286 = vector.extract_strided_slice %260 {offsets = [5, 0], sizes = [16, 8], strides = [1, 1]} : vector<22x8xbf16> to vector<16x8xbf16>
      %c5_238 = arith.constant 5 : index
      %c5_239 = arith.constant 5 : index
      %c0_240 = arith.constant 0 : index
      %c0_241 = arith.constant 0 : index
      %287 = vector.load %arg2[%c5_238, %c5_239, %c0_240, %c0_241] : memref<7x7x8x128xbf16, #tpu.memory_space<vmem>>, vector<1x1x8x128xbf16>
      %288 = vector.shape_cast %287 : vector<1x1x8x128xbf16> to vector<8x128xbf16>
      %cst_242 = arith.constant dense<0.000000e+00> : vector<16x128xf32>
      %289 = tpu.matmul %286, %288, %cst_242 {dimension_numbers = #tpu.dot_dimension_numbers<[1], [0], [0], [1], [0, 0, 1, 1], [], []>} : vector<16x8xbf16>, vector<8x128xbf16>, vector<16x128xf32> -> vector<16x128xf32>
      %290 = arith.addf %285, %289 : vector<16x128xf32>
      %291 = vector.extract_strided_slice %260 {offsets = [6, 0], sizes = [16, 8], strides = [1, 1]} : vector<22x8xbf16> to vector<16x8xbf16>
      %c5_243 = arith.constant 5 : index
      %c6_244 = arith.constant 6 : index
      %c0_245 = arith.constant 0 : index
      %c0_246 = arith.constant 0 : index
      %292 = vector.load %arg2[%c5_243, %c6_244, %c0_245, %c0_246] : memref<7x7x8x128xbf16, #tpu.memory_space<vmem>>, vector<1x1x8x128xbf16>
      %293 = vector.shape_cast %292 : vector<1x1x8x128xbf16> to vector<8x128xbf16>
      %cst_247 = arith.constant dense<0.000000e+00> : vector<16x128xf32>
      %294 = tpu.matmul %291, %293, %cst_247 {dimension_numbers = #tpu.dot_dimension_numbers<[1], [0], [0], [1], [0, 0, 1, 1], [], []>} : vector<16x8xbf16>, vector<8x128xbf16>, vector<16x128xf32> -> vector<16x128xf32>
      %295 = arith.addf %290, %294 : vector<16x128xf32>
      %c6_i32 = arith.constant 6 : i32
      %296 = arith.addi %arg7, %c6_i32 : i32
      %297 = arith.index_cast %296 : i32 to index
      %c0_248 = arith.constant 0 : index
      %c0_249 = arith.constant 0 : index
      %298 = vector.load %arg1[%297, %c0_248, %c0_249] : memref<22x22x8xbf16, #tpu.memory_space<vmem>>, vector<1x22x8xbf16>
      %299 = vector.shape_cast %298 : vector<1x22x8xbf16> to vector<22x8xbf16>
      %300 = arith.extf %299 : vector<22x8xbf16> to vector<22x8xf32>
      %c0_250 = arith.constant 0 : index
      %c0_251 = arith.constant 0 : index
      %301 = vector.load %arg3[%c0_250, %c0_251] : memref<1x8xf32, #tpu.memory_space<vmem>>, vector<1x8xf32>
      %302 = vector.broadcast %301 : vector<1x8xf32> to vector<22x8xf32>
      %303 = arith.mulf %300, %302 : vector<22x8xf32>
      %c0_252 = arith.constant 0 : index
      %c0_253 = arith.constant 0 : index
      %304 = vector.load %arg4[%c0_252, %c0_253] : memref<1x8xf32, #tpu.memory_space<vmem>>, vector<1x8xf32>
      %305 = vector.broadcast %304 : vector<1x8xf32> to vector<22x8xf32>
      %306 = arith.addf %303, %305 : vector<22x8xf32>
      %cst_254 = arith.constant 0.000000e+00 : f32
      %307 = vector.broadcast %cst_254 : f32 to vector<22x8xf32>
      %308 = arith.maximumf %306, %307 : vector<22x8xf32>
      %309 = arith.truncf %308 : vector<22x8xf32> to vector<22x8xbf16>
      %310 = vector.extract_strided_slice %309 {offsets = [0, 0], sizes = [16, 8], strides = [1, 1]} : vector<22x8xbf16> to vector<16x8xbf16>
      %c6_255 = arith.constant 6 : index
      %c0_256 = arith.constant 0 : index
      %c0_257 = arith.constant 0 : index
      %c0_258 = arith.constant 0 : index
      %311 = vector.load %arg2[%c6_255, %c0_256, %c0_257, %c0_258] : memref<7x7x8x128xbf16, #tpu.memory_space<vmem>>, vector<1x1x8x128xbf16>
      %312 = vector.shape_cast %311 : vector<1x1x8x128xbf16> to vector<8x128xbf16>
      %cst_259 = arith.constant dense<0.000000e+00> : vector<16x128xf32>
      %313 = tpu.matmul %310, %312, %cst_259 {dimension_numbers = #tpu.dot_dimension_numbers<[1], [0], [0], [1], [0, 0, 1, 1], [], []>} : vector<16x8xbf16>, vector<8x128xbf16>, vector<16x128xf32> -> vector<16x128xf32>
      %314 = arith.addf %295, %313 : vector<16x128xf32>
      %315 = vector.extract_strided_slice %309 {offsets = [1, 0], sizes = [16, 8], strides = [1, 1]} : vector<22x8xbf16> to vector<16x8xbf16>
      %c6_260 = arith.constant 6 : index
      %c1_261 = arith.constant 1 : index
      %c0_262 = arith.constant 0 : index
      %c0_263 = arith.constant 0 : index
      %316 = vector.load %arg2[%c6_260, %c1_261, %c0_262, %c0_263] : memref<7x7x8x128xbf16, #tpu.memory_space<vmem>>, vector<1x1x8x128xbf16>
      %317 = vector.shape_cast %316 : vector<1x1x8x128xbf16> to vector<8x128xbf16>
      %cst_264 = arith.constant dense<0.000000e+00> : vector<16x128xf32>
      %318 = tpu.matmul %315, %317, %cst_264 {dimension_numbers = #tpu.dot_dimension_numbers<[1], [0], [0], [1], [0, 0, 1, 1], [], []>} : vector<16x8xbf16>, vector<8x128xbf16>, vector<16x128xf32> -> vector<16x128xf32>
      %319 = arith.addf %314, %318 : vector<16x128xf32>
      %320 = vector.extract_strided_slice %309 {offsets = [2, 0], sizes = [16, 8], strides = [1, 1]} : vector<22x8xbf16> to vector<16x8xbf16>
      %c6_265 = arith.constant 6 : index
      %c2_266 = arith.constant 2 : index
      %c0_267 = arith.constant 0 : index
      %c0_268 = arith.constant 0 : index
      %321 = vector.load %arg2[%c6_265, %c2_266, %c0_267, %c0_268] : memref<7x7x8x128xbf16, #tpu.memory_space<vmem>>, vector<1x1x8x128xbf16>
      %322 = vector.shape_cast %321 : vector<1x1x8x128xbf16> to vector<8x128xbf16>
      %cst_269 = arith.constant dense<0.000000e+00> : vector<16x128xf32>
      %323 = tpu.matmul %320, %322, %cst_269 {dimension_numbers = #tpu.dot_dimension_numbers<[1], [0], [0], [1], [0, 0, 1, 1], [], []>} : vector<16x8xbf16>, vector<8x128xbf16>, vector<16x128xf32> -> vector<16x128xf32>
      %324 = arith.addf %319, %323 : vector<16x128xf32>
      %325 = vector.extract_strided_slice %309 {offsets = [3, 0], sizes = [16, 8], strides = [1, 1]} : vector<22x8xbf16> to vector<16x8xbf16>
      %c6_270 = arith.constant 6 : index
      %c3_271 = arith.constant 3 : index
      %c0_272 = arith.constant 0 : index
      %c0_273 = arith.constant 0 : index
      %326 = vector.load %arg2[%c6_270, %c3_271, %c0_272, %c0_273] : memref<7x7x8x128xbf16, #tpu.memory_space<vmem>>, vector<1x1x8x128xbf16>
      %327 = vector.shape_cast %326 : vector<1x1x8x128xbf16> to vector<8x128xbf16>
      %cst_274 = arith.constant dense<0.000000e+00> : vector<16x128xf32>
      %328 = tpu.matmul %325, %327, %cst_274 {dimension_numbers = #tpu.dot_dimension_numbers<[1], [0], [0], [1], [0, 0, 1, 1], [], []>} : vector<16x8xbf16>, vector<8x128xbf16>, vector<16x128xf32> -> vector<16x128xf32>
      %329 = arith.addf %324, %328 : vector<16x128xf32>
      %330 = vector.extract_strided_slice %309 {offsets = [4, 0], sizes = [16, 8], strides = [1, 1]} : vector<22x8xbf16> to vector<16x8xbf16>
      %c6_275 = arith.constant 6 : index
      %c4_276 = arith.constant 4 : index
      %c0_277 = arith.constant 0 : index
      %c0_278 = arith.constant 0 : index
      %331 = vector.load %arg2[%c6_275, %c4_276, %c0_277, %c0_278] : memref<7x7x8x128xbf16, #tpu.memory_space<vmem>>, vector<1x1x8x128xbf16>
      %332 = vector.shape_cast %331 : vector<1x1x8x128xbf16> to vector<8x128xbf16>
      %cst_279 = arith.constant dense<0.000000e+00> : vector<16x128xf32>
      %333 = tpu.matmul %330, %332, %cst_279 {dimension_numbers = #tpu.dot_dimension_numbers<[1], [0], [0], [1], [0, 0, 1, 1], [], []>} : vector<16x8xbf16>, vector<8x128xbf16>, vector<16x128xf32> -> vector<16x128xf32>
      %334 = arith.addf %329, %333 : vector<16x128xf32>
      %335 = vector.extract_strided_slice %309 {offsets = [5, 0], sizes = [16, 8], strides = [1, 1]} : vector<22x8xbf16> to vector<16x8xbf16>
      %c6_280 = arith.constant 6 : index
      %c5_281 = arith.constant 5 : index
      %c0_282 = arith.constant 0 : index
      %c0_283 = arith.constant 0 : index
      %336 = vector.load %arg2[%c6_280, %c5_281, %c0_282, %c0_283] : memref<7x7x8x128xbf16, #tpu.memory_space<vmem>>, vector<1x1x8x128xbf16>
      %337 = vector.shape_cast %336 : vector<1x1x8x128xbf16> to vector<8x128xbf16>
      %cst_284 = arith.constant dense<0.000000e+00> : vector<16x128xf32>
      %338 = tpu.matmul %335, %337, %cst_284 {dimension_numbers = #tpu.dot_dimension_numbers<[1], [0], [0], [1], [0, 0, 1, 1], [], []>} : vector<16x8xbf16>, vector<8x128xbf16>, vector<16x128xf32> -> vector<16x128xf32>
      %339 = arith.addf %334, %338 : vector<16x128xf32>
      %340 = vector.extract_strided_slice %309 {offsets = [6, 0], sizes = [16, 8], strides = [1, 1]} : vector<22x8xbf16> to vector<16x8xbf16>
      %c6_285 = arith.constant 6 : index
      %c6_286 = arith.constant 6 : index
      %c0_287 = arith.constant 0 : index
      %c0_288 = arith.constant 0 : index
      %341 = vector.load %arg2[%c6_285, %c6_286, %c0_287, %c0_288] : memref<7x7x8x128xbf16, #tpu.memory_space<vmem>>, vector<1x1x8x128xbf16>
      %342 = vector.shape_cast %341 : vector<1x1x8x128xbf16> to vector<8x128xbf16>
      %cst_289 = arith.constant dense<0.000000e+00> : vector<16x128xf32>
      %343 = tpu.matmul %340, %342, %cst_289 {dimension_numbers = #tpu.dot_dimension_numbers<[1], [0], [0], [1], [0, 0, 1, 1], [], []>} : vector<16x8xbf16>, vector<8x128xbf16>, vector<16x128xf32> -> vector<16x128xf32>
      %344 = arith.addf %339, %343 : vector<16x128xf32>
      %c0_290 = arith.constant 0 : index
      %c0_291 = arith.constant 0 : index
      %345 = vector.load %arg5[%c0_290, %c0_291] : memref<1x128xf32, #tpu.memory_space<vmem>>, vector<1x128xf32>
      %346 = vector.broadcast %345 : vector<1x128xf32> to vector<16x128xf32>
      %347 = arith.addf %344, %346 : vector<16x128xf32>
      %348 = math.tanh %347 : vector<16x128xf32>
      %349 = arith.truncf %348 : vector<16x128xf32> to vector<16x128xbf16>
      %350 = arith.index_cast %arg7 : i32 to index
      %c0_292 = arith.constant 0 : index
      %c0_293 = arith.constant 0 : index
      %351 = vector.load %arg6[%350, %c0_292, %c0_293] : memref<16x16x128xbf16, #tpu.memory_space<vmem>>, vector<1x16x128xbf16>
      %352 = vector.shape_cast %351 : vector<1x16x128xbf16> to vector<16x128xbf16>
      %353 = vector.shape_cast %349 : vector<16x128xbf16> to vector<1x16x128xbf16>
      tpu.vector_store %arg6[%350, %c0_292, %c0_293], %353 {strides = array<i32>} : memref<16x16x128xbf16, #tpu.memory_space<vmem>>, vector<1x16x128xbf16>,
    }
    %c16_i32_0 = arith.constant 16 : i32
    return
  }
  func.func @transform_0(%arg0: i32) -> (i32, i32, i32) {
    %c0_i32 = arith.constant 0 : i32
    %c0_i32_0 = arith.constant 0 : i32
    %c0_i32_1 = arith.constant 0 : i32
    return %arg0, %c0_i32, %c0_i32_0 : i32, i32, i32
  }
  func.func @transform_1(%arg0: i32) -> (i32, i32, i32, i32) {
    %c0_i32 = arith.constant 0 : i32
    %c0_i32_0 = arith.constant 0 : i32
    %c0_i32_1 = arith.constant 0 : i32
    %c0_i32_2 = arith.constant 0 : i32
    %c0_i32_3 = arith.constant 0 : i32
    return %c0_i32, %c0_i32_0, %c0_i32_1, %c0_i32_2 : i32, i32, i32, i32
  }
  func.func @transform_2(%arg0: i32) -> (i32, i32) {
    %c0_i32 = arith.constant 0 : i32
    %c0_i32_0 = arith.constant 0 : i32
    %c0_i32_1 = arith.constant 0 : i32
    return %c0_i32, %c0_i32_0 : i32, i32
  }
  func.func @transform_3(%arg0: i32) -> (i32, i32) {
    %c0_i32 = arith.constant 0 : i32
    %c0_i32_0 = arith.constant 0 : i32
    %c0_i32_1 = arith.constant 0 : i32
    return %c0_i32, %c0_i32_0 : i32, i32
  }
  func.func @transform_4(%arg0: i32) -> (i32, i32) {
    %c0_i32 = arith.constant 0 : i32
    %c0_i32_0 = arith.constant 0 : i32
    %c0_i32_1 = arith.constant 0 : i32
    return %c0_i32, %c0_i32_0 : i32, i32
  }
  func.func @transform_5(%arg0: i32) -> (i32, i32, i32) {
    %c0_i32 = arith.constant 0 : i32
    %c0_i32_0 = arith.constant 0 : i32
    %c0_i32_1 = arith.constant 0 : i32
    return %arg0, %c0_i32, %c0_i32_0 : i32, i32, i32
  }
}

</mosaic_0001>

<llo_original>
// kernel: _lambda_.3
$region0: #{_lambda_.3}
  #allocation0 [shape = 'u32[]', space=smem, size = 0x4, offset = 0x4, fixed_abs, tag = 'smem constant byte address 0x4 - core index']
  #allocation1 [shape = 'u32[144,128]{1,0:T(1,128)}', space=vmem, size = 0x12000, scoped, tag = 'internal scratch']
  #allocation2 [shape = 'f32[2,128]{1,0:T(2,128)}', space=vmem, size = 0x400, scoped, tag = 'scratch operand']
  %s0 = inlined_call_operand.vmem [shape: bf16[10,5,32], index: 0, kind: input, shape index: {}]
  %s1 = inlined_call_operand.vmem [shape: bf16[4,32,128], index: 1, kind: input, shape index: {}]
  %s2 = inlined_call_operand.vmem [shape: f32[1,32], index: 2, kind: input, shape index: {}]
  %s3 = inlined_call_operand.vmem [shape: f32[1,32], index: 3, kind: input, shape index: {}]
  %s4 = inlined_call_operand.vmem [shape: bf16[8,4,128], index: 4, kind: output, shape index: {0}]
  %s5 = inlined_call_operand.vmem [shape: f32[2,2,128], index: 5, kind: output, shape index: {1}]
  %6 = xla_tuple %s4, %s5
  %s7 = sld [smem:[#allocation0]]
  $region64: #{_lambda_.3} parent=0
    _
  %s9 = ssub.s32 1, %s7
  %s10 = scalar_select 0, %s9, %s7
  loop: start=0, step=1, limit=4
  $region2: #{_lambda_.3} parent=0 // loop_pre_header
    _
  $region3: #{_lambda_.3} parent=0 // loop_header
    %s12 = sphi 0, %s16
    %p13 = scmp.ge.s32.totalorder %s12, 4
    %s22 = sphi 0, %s24
    %s25 = sphi 0, %s22
    %s26 = sphi 0, %s25
    %s42 = sphi 0, %s26
    %s46 = sphi 0, %s46
    %s48 = sphi 0, %s46
    %s49 = sphi 0, %s48
    %s63 = sphi 0, %s49
    %s67 = sphi 0, %s67
    %s69 = sphi 0, %s67
    %s70 = sphi 0, %s69
    %s84 = sphi 0, %s70
    %s88 = sphi 0, %s88
    %s90 = sphi 0, %s88
    %s91 = sphi 0, %s90
    %s105 = sphi 0, %s91
    %s111 = sphi 0, %s113
    %s114 = sphi 0, %s111
    %s115 = sphi 0, %s114
    %s131 = sphi 0, %s115
    %s137 = sphi 0, %s139
    %s140 = sphi 0, %s137
    %s141 = sphi 0, %s140
    %s157 = sphi 0, %s141
  $region4: #{_lambda_.3} parent=0 // loop_header_branch
    %15 = sbr.rel (%p13) target = $region8
  $region5: #{_lambda_.3} parent=0 // loop_body
    %s17 = ssub.s32 %s12, 1
    %s18 = ssub.s32 %s12, 2
    %s19 = sadd.s32 %s12, 1
    %s20 = ssub.s32 %s12, %s19
    %p21 = scmp.eq.s32.totalorder %s20, 0
    %s23 = sadd.s32 %s22, 1
    %s24 = scalar_select %p21, %s22, %s23
    %p27 = pneg %p21
    %p28 = scmp.eq.s32.totalorder %s12, 1
    %p29 = por %p27, %p28
    %p30 = scmp.ne.s32.totalorder %s22, %s25
    %p31 = scmp.eq.s32.totalorder %s12, 0
    %p32 = por %p30, %p31
    %p33 = scmp.ne.s32.totalorder %s22, %s25
    %p34 = scmp.eq.s32.totalorder %s17, 1
    %p35 = por %p33, %p34
    %p36 = scmp.ne.s32.totalorder %s25, %s26
    %p37 = scmp.eq.s32.totalorder %s17, 0
    %p38 = por %p36, %p37
    %p39 = scmp.ne.s32.totalorder %s25, %s26
    %p40 = scmp.eq.s32.totalorder %s18, 1
    %p41 = por %p39, %p40
    %p43 = scmp.ne.s32.totalorder %s26, %s42
    %p44 = scmp.eq.s32.totalorder %s18, 0
    %p45 = por %p43, %p44
    %s47 = sadd.s32 %s46, 1
    %p50 = scmp.eq.s32.totalorder %s12, 1
    %p51 = scmp.ne.s32.totalorder %s46, %s48
    %p52 = scmp.eq.s32.totalorder %s12, 0
    %p53 = por %p51, %p52
    %p54 = scmp.ne.s32.totalorder %s46, %s48
    %p55 = scmp.eq.s32.totalorder %s17, 1
    %p56 = por %p54, %p55
    %p57 = scmp.ne.s32.totalorder %s48, %s49
    %p58 = scmp.eq.s32.totalorder %s17, 0
    %p59 = por %p57, %p58
    %p60 = scmp.ne.s32.totalorder %s48, %s49
    %p61 = scmp.eq.s32.totalorder %s18, 1
    %p62 = por %p60, %p61
    %p64 = scmp.ne.s32.totalorder %s49, %s63
    %p65 = scmp.eq.s32.totalorder %s18, 0
    %p66 = por %p64, %p65
    %s68 = sadd.s32 %s67, 1
    %p71 = scmp.eq.s32.totalorder %s12, 1
    %p72 = scmp.ne.s32.totalorder %s67, %s69
    %p73 = scmp.eq.s32.totalorder %s12, 0
    %p74 = por %p72, %p73
    %p75 = scmp.ne.s32.totalorder %s67, %s69
    %p76 = scmp.eq.s32.totalorder %s17, 1
    %p77 = por %p75, %p76
    %p78 = scmp.ne.s32.totalorder %s69, %s70
    %p79 = scmp.eq.s32.totalorder %s17, 0
    %p80 = por %p78, %p79
    %p81 = scmp.ne.s32.totalorder %s69, %s70
    %p82 = scmp.eq.s32.totalorder %s18, 1
    %p83 = por %p81, %p82
    %p85 = scmp.ne.s32.totalorder %s70, %s84
    %p86 = scmp.eq.s32.totalorder %s18, 0
    %p87 = por %p85, %p86
    %s89 = sadd.s32 %s88, 1
    %p92 = scmp.eq.s32.totalorder %s12, 1
    %p93 = scmp.ne.s32.totalorder %s88, %s90
    %p94 = scmp.eq.s32.totalorder %s12, 0
    %p95 = por %p93, %p94
    %p96 = scmp.ne.s32.totalorder %s88, %s90
    %p97 = scmp.eq.s32.totalorder %s17, 1
    %p98 = por %p96, %p97
    %p99 = scmp.ne.s32.totalorder %s90, %s91
    %p100 = scmp.eq.s32.totalorder %s17, 0
    %p101 = por %p99, %p100
    %p102 = scmp.ne.s32.totalorder %s90, %s91
    %p103 = scmp.eq.s32.totalorder %s18, 1
    %p104 = por %p102, %p103
    %p106 = scmp.ne.s32.totalorder %s91, %s105
    %p107 = scmp.eq.s32.totalorder %s18, 0
    %p108 = por %p106, %p107
    %s109 = ssub.s32 %s12, %s19
    %p110 = scmp.eq.s32.totalorder %s109, 0
    %s112 = sadd.s32 %s111, 1
    %s113 = scalar_select %p110, %s111, %s112
    %p116 = pneg %p110
    %p117 = scmp.eq.s32.totalorder %s12, 1
    %p118 = por %p116, %p117
    %p119 = scmp.ne.s32.totalorder %s111, %s114
    %p120 = scmp.eq.s32.totalorder %s12, 0
    %p121 = por %p119, %p120
    %p122 = scmp.ne.s32.totalorder %s111, %s114
    %p123 = scmp.eq.s32.totalorder %s17, 1
    %p124 = por %p122, %p123
    %p125 = scmp.ne.s32.totalorder %s114, %s115
    %p126 = scmp.eq.s32.totalorder %s17, 0
    %p127 = por %p125, %p126
    %p128 = scmp.ne.s32.totalorder %s114, %s115
    %p129 = scmp.eq.s32.totalorder %s18, 1
    %p130 = por %p128, %p129
    %p132 = scmp.ne.s32.totalorder %s115, %s131
    %p133 = scmp.eq.s32.totalorder %s18, 0
    %p134 = por %p132, %p133
    %s135 = ssub.s32 %s12, %s19
    %p136 = scmp.eq.s32.totalorder %s135, 0
    %s138 = sadd.s32 %s137, 1
    %s139 = scalar_select %p136, %s137, %s138
    %p142 = pneg %p136
    %p143 = scmp.eq.s32.totalorder %s12, 1
    %p144 = por %p142, %p143
    %p145 = scmp.ne.s32.totalorder %s137, %s140
    %p146 = scmp.eq.s32.totalorder %s12, 0
    %p147 = por %p145, %p146
    %p148 = scmp.ne.s32.totalorder %s137, %s140
    %p149 = scmp.eq.s32.totalorder %s17, 1
    %p150 = por %p148, %p149
    %p151 = scmp.ne.s32.totalorder %s140, %s141
    %p152 = scmp.eq.s32.totalorder %s17, 0
    %p153 = por %p151, %p152
    %p154 = scmp.ne.s32.totalorder %s140, %s141
    %p155 = scmp.eq.s32.totalorder %s18, 1
    %p156 = por %p154, %p155
    %p158 = scmp.ne.s32.totalorder %s141, %s157
    %p159 = scmp.eq.s32.totalorder %s18, 0
    %p160 = por %p158, %p159
    %p161 = scmp.le.s32.totalorder 1, %s12
    %p162 = scmp.lt.s32.totalorder %s12, 3
    %p163 = pnand %p161, %p162
    %p164 = pneg %p163
    // Predicated region
    $region9: #{_lambda_.3} parent=5 // pred_check
      _
    $region10: #{_lambda_.3} parent=5 // pred_check_branch
      %166 = sbr.rel (%p163) target = $region12
    $region11: #{_lambda_.3} parent=5 // pred_region
      %s167 = ssub.s32 %s12, 1
      // Predicated region
      $region13: #{_lambda_.3} parent=11 // pred_check
        %p168 = pneg %p59
      $region14: #{_lambda_.3} parent=11 // pred_check_branch
        %170 = sbr.rel (%p168) target = $region16
      $region15: #{_lambda_.3} parent=11 // pred_region
        _
      $region16: #{_lambda_.3} parent=11 // pred_fallthru
        _
      // Predicated region
      $region17: #{_lambda_.3} parent=11 // pred_check
        %p171 = pneg %p80
      $region18: #{_lambda_.3} parent=11 // pred_check_branch
        %173 = sbr.rel (%p171) target = $region20
      $region19: #{_lambda_.3} parent=11 // pred_region
        _
      $region20: #{_lambda_.3} parent=11 // pred_fallthru
        _
      // Predicated region
      $region21: #{_lambda_.3} parent=11 // pred_check
        %p174 = pneg %p101
      $region22: #{_lambda_.3} parent=11 // pred_check_branch
        %176 = sbr.rel (%p174) target = $region24
      $region23: #{_lambda_.3} parent=11 // pred_region
        _
      $region24: #{_lambda_.3} parent=11 // pred_fallthru
        _
    $region12: #{_lambda_.3} parent=5 // pred_fallthru
      _
    %p177 = scmp.lt.s32.totalorder %s12, 2
    // Predicated region
    $region25: #{_lambda_.3} parent=5 // pred_check
      %p178 = pneg %p177
    $region26: #{_lambda_.3} parent=5 // pred_check_branch
      %180 = sbr.rel (%p178) target = $region28
    $region27: #{_lambda_.3} parent=5 // pred_region
      // Predicated region
      $region29: #{_lambda_.3} parent=27 // pred_check
        %p181 = pneg %p32
      $region30: #{_lambda_.3} parent=27 // pred_check_branch
        %183 = sbr.rel (%p181) target = $region32
      $region31: #{_lambda_.3} parent=27 // pred_region
        %s184 = smul.u32 5, %s12
        %p185 = scmp.lt.s32.totalorder %s184, 9
        %s186 = scalar_select %p185, %s184, 9
        %s187 = smul.addr %s186, 4
        %s188 = scalar_lea.vmem %s0, %s187
        %s189 = smul.u32 5, %s12
      $region32: #{_lambda_.3} parent=27 // pred_fallthru
        _
    $region28: #{_lambda_.3} parent=5 // pred_fallthru
      _
    %p190 = scmp.le.s32.totalorder 1, %s12
    %p191 = scmp.lt.s32.totalorder %s12, 3
    %p192 = pnand %p190, %p191
    %p193 = pneg %p192
    // Predicated region
    $region33: #{_lambda_.3} parent=5 // pred_check
      _
    $region34: #{_lambda_.3} parent=5 // pred_check_branch
      %195 = sbr.rel (%p192) target = $region36
    $region35: #{_lambda_.3} parent=5 // pred_region
      %s196 = ssub.s32 %s12, 1
      %s197 = smul.u32 5, %s17
      %p198 = scmp.lt.s32.totalorder %s197, 9
      %s199 = scalar_select %p198, %s197, 9
      %s200 = smul.addr %s199, 4
      %s201 = scalar_lea.vmem %s0, %s200
      %p202 = pneg %p38
      %p203 = pneg %p35
      %p204 = pneg %p59
      %p205 = pneg %p56
      %p206 = pneg %p80
      %p207 = pneg %p77
      %p208 = pneg %p101
      %p209 = pneg %p98
      %p210 = pneg %p127
      %p211 = pneg %p124
      %s212 = smul.u32 4, %s17
      %p213 = scmp.lt.s32.totalorder %s212, 7
      %s214 = scalar_select %p213, %s212, 7
      %s215 = smul.addr %s214, 2
      %s216 = scalar_lea.vmem %s4, %s215
      %p217 = pneg %p153
      %p218 = pneg %p150
      %p219 = scmp.lt.s32.totalorder %s17, 1
      %s220 = scalar_select %p219, %s17, 1
      %s221 = smul.addr %s220, 2
      %s222 = scalar_lea.vmem %s5, %s221
      %s223 = smul.u32 5, %s17
      %p224 = scmp.lt.s32.totalorder %s223, 9
      %s225 = scalar_select %p224, %s223, 9
      %s226 = smul.addr %s225, 4
      %s227 = scalar_lea.vmem %s0, %s226
      %s228 = smul.u32 5, %s17
      %s229 = smul.u32 4, %s17
      %p230 = scmp.lt.s32.totalorder %s229, 7
      %s231 = scalar_select %p230, %s229, 7
      %s232 = smul.addr %s231, 2
      %s233 = scalar_lea.vmem %s4, %s232
      %s234 = smul.u32 4, %s17
      %p235 = scmp.lt.s32.totalorder %s17, 1
      %s236 = scalar_select %p235, %s17, 1
      %s237 = smul.addr %s236, 2
      %s238 = scalar_lea.vmem %s5, %s237
      %240 = vst [vmem:[#allocation2] sm:$0x3] 0.0
      %v241 = vlaneseq
      %v242 = vshrl.u32 %v241, 7
      %vm243 = vcmp.lt.s32.totalorder %v242, 4
      loop: start=0, step=1, limit=4
      $region37: #{_lambda_.3} parent=35 // loop_pre_header
        _
      $region38: #{_lambda_.3} parent=35 // loop_header
        %s245 = sphi 0, %s249
        %p246 = scmp.ge.s32.totalorder %s245, 4
      $region39: #{_lambda_.3} parent=35 // loop_header_branch
        %248 = sbr.rel (%p246) target = $region43
      $region40: #{_lambda_.3} parent=35 // loop_body
        %s250 = smul.addr %s245, 4
        %s251 = scalar_lea.vmem %s227, %s250
        %v252 = vld [vmem:[%s251] sm:$0x7]
        %v253 = vunpack.c.l.bf16 %v252
        %v254 = vld [vmem:[%s2] sm:$0x1]
        %v256 = vlaneseq
        %v257 = vshrl.u32 %v256, 7
        %v258 = vsub.s32 0, %v257
        %v259 = vrot.slane %v254, %v258
        %v261 = vmul.f32 %v253, %v259
        %v262 = vld [vmem:[%s3] sm:$0x1]
        %v264 = vlaneseq
        %v265 = vshrl.u32 %v264, 7
        %v266 = vsub.s32 0, %v265
        %v267 = vrot.slane %v262, %v266
        %v269 = vadd.f32 %v261, %v267
        %v270 = vsel %vm243, 1, 0
        %vm271 = vcmp.eq.s32.totalorder %v270, 1
        %v272 = vsel %vm271, %v269, 0.0
        %v273 = vpack.c.bf16 %v272, %v272
        %s274 = sadd.s32 %s245, 1
        %s275 = smul.addr %s274, 4
        %s276 = scalar_lea.vmem %s227, %s275
        %v277 = vld [vmem:[%s276] sm:$0x7]
        %p278 = scmp.lt.s32.totalorder %s274, 4
        %v279 = vunpack.c.l.bf16 %v277
        %v280 = vmul.f32 %v279, %v259
        %v281 = vadd.f32 %v280, %v267
        %s282 = scalar_select %p278, 1, 0
        %v283 = vstv %s282
        %vm284 = vcmp.eq.s32.totalorder %v283, 1
        %vm285 = vmand %vm243, %vm284
        %v286 = vsel %vm285, 1, 0
        %vm287 = vcmp.eq.s32.totalorder %v286, 1
        %v288 = vsel %vm287, %v281, 0.0
        %v289 = vpack.c.bf16 %v288, %v288
        %v290 = vld [vmem:[%s1] sm:$0xf]
        %v291 = vld [vmem:[%s1 + $0x4] sm:$0xf]
        %v292 = vld [vmem:[%s1 + $0x8] sm:$0xf]
        %v293 = vld [vmem:[%s1 + $0xc] sm:$0xf]
        %s294 = scalar_lea.vmem %s1, 16
        %v295 = vld [vmem:[%s294] sm:$0xf]
        %v296 = vld [vmem:[%s294 + $0x4] sm:$0xf]
        %v297 = vld [vmem:[%s294 + $0x8] sm:$0xf]
        %v298 = vld [vmem:[%s294 + $0xc] sm:$0xf]
        %v300 = vshrl.u32 %v273, 16
        %v302 = vshll.u32 %v273, 16
        %v304 = vrot.slane %v302, 1
        %v305 = vor.u32 %v300, %v304
        %v310 = vunpack.c.l.b16 %v295
        %v311 = vunpack.c.l.b16 %v296
        %v312 = vunpack.c.l.b16 %v297
        %v313 = vunpack.c.l.b16 %v298
        %v314 = vpack.c.b16 %v311, %v310
        %v315 = vpack.c.b16 %v313, %v312
        %vm318 = vcmask 261120
        %v320 = vsel %vm318, %v305, 0
        %322 = vmatprep.subr.bf16.mxu0 0
        %323 = vmatpush1.bf16.msra.mxu0 %v314
        %324 = vmatprep.subr.bf16.mxu0 0
        %325 = vmatpush1.bf16.msra.mxu0 %v315
        %326 = vmatprep.subr.bf16.mxu0 0
        %327 = vmatpush1.bf16.msra.mxu0 0
        %328 = vmatprep.subr.bf16.mxu0 0
        %329 = vmatpush1.bf16.msra.mxu0 0
        %330 = vmatprep.subr.bf16.mxu0 0
        %331 = vmatpush1.bf16.msra.mxu0 0
        %332 = vmatprep.subr.bf16.mxu0 0
        %333 = vmatpush1.bf16.msra.mxu0 0
        %334 = vmatprep.subr.bf16.mxu0 0
        %335 = vmatpush1.bf16.msra.mxu0 0
        %336 = vmatprep.subr.bf16.mxu0 0
        %337 = vmatpush1.bf16.msra.mxu0 0
        %338 = vmatprep.subr.bf16.mxu0 0
        %339 = vmatpush1.bf16.msra.mxu0 0
        %340 = vmatprep.subr.bf16.mxu0 0
        %341 = vmatpush1.bf16.msra.mxu0 0
        %342 = vmatprep.subr.bf16.mxu0 0
        %343 = vmatpush1.bf16.msra.mxu0 0
        %344 = vmatprep.subr.bf16.mxu0 0
        %345 = vmatpush1.bf16.msra.mxu0 0
        %346 = vmatprep.subr.bf16.mxu0 0
        %347 = vmatpush1.bf16.msra.mxu0 0
        %348 = vmatprep.subr.bf16.mxu0 0
        %349 = vmatpush1.bf16.msra.mxu0 0
        %350 = vmatprep.subr.bf16.mxu0 0
        %351 = vmatpush1.bf16.msra.mxu0 0
        %352 = vmatprep.subr.bf16.mxu0 0
        %353 = vmatpush1.bf16.msra.mxu0 0
        %354 = vmatprep.mubr.bf16.mxu0 0
        %355 = vmatmul.mubr.bf16.gmra.mrb[0].mxu0 %v320
        %v356 = vpop.f32.mrb[0].mxu0
        %v357 = vadd.f32 0.0, %v356
        %v358 = vpop.f32.mrb[0].mxu0
        %v359 = vpop.f32.mrb[0].mxu0
        %v360 = vpop.f32.mrb[0].mxu0
        %361 = vdwg.mxu0
        %v366 = vunpack.c.l.b16 %v290
        %v367 = vunpack.c.l.b16 %v291
        %v368 = vunpack.c.l.b16 %v292
        %v369 = vunpack.c.l.b16 %v293
        %v370 = vpack.c.b16 %v367, %v366
        %v371 = vpack.c.b16 %v369, %v368
        %v374 = vsel %vm318, %v273, 0
        %376 = vmatprep.subr.bf16.mxu0 0
        %377 = vmatpush1.bf16.msra.mxu0 %v370
        %378 = vmatprep.subr.bf16.mxu0 0
        %379 = vmatpush1.bf16.msra.mxu0 %v371
        %380 = vmatprep.subr.bf16.mxu0 0
        %381 = vmatpush1.bf16.msra.mxu0 0
        %382 = vmatprep.subr.bf16.mxu0 0
        %383 = vmatpush1.bf16.msra.mxu0 0
        %384 = vmatprep.subr.bf16.mxu0 0
        %385 = vmatpush1.bf16.msra.mxu0 0
        %386 = vmatprep.subr.bf16.mxu0 0
        %387 = vmatpush1.bf16.msra.mxu0 0
        %388 = vmatprep.subr.bf16.mxu0 0
        %389 = vmatpush1.bf16.msra.mxu0 0
        %390 = vmatprep.subr.bf16.mxu0 0
        %391 = vmatpush1.bf16.msra.mxu0 0
        %392 = vmatprep.subr.bf16.mxu0 0
        %393 = vmatpush1.bf16.msra.mxu0 0
        %394 = vmatprep.subr.bf16.mxu0 0
        %395 = vmatpush1.bf16.msra.mxu0 0
        %396 = vmatprep.subr.bf16.mxu0 0
        %397 = vmatpush1.bf16.msra.mxu0 0
        %398 = vmatprep.subr.bf16.mxu0 0
        %399 = vmatpush1.bf16.msra.mxu0 0
        %400 = vmatprep.subr.bf16.mxu0 0
        %401 = vmatpush1.bf16.msra.mxu0 0
        %402 = vmatprep.subr.bf16.mxu0 0
        %403 = vmatpush1.bf16.msra.mxu0 0
        %404 = vmatprep.subr.bf16.mxu0 0
        %405 = vmatpush1.bf16.msra.mxu0 0
        %406 = vmatprep.subr.bf16.mxu0 0
        %407 = vmatpush1.bf16.msra.mxu0 0
        %408 = vmatprep.mubr.bf16.mxu0 0
        %409 = vmatmul.mubr.bf16.gmra.mrb[0].mxu0 %v374
        %v410 = vpop.f32.mrb[0].mxu0
        %v411 = vadd.f32 %v357, %v410
        %v412 = vpop.f32.mrb[0].mxu0
        %v413 = vpop.f32.mrb[0].mxu0
        %v414 = vpop.f32.mrb[0].mxu0
        %415 = vdwg.mxu0
        %s416 = scalar_lea.vmem %s1, 32
        %v417 = vld [vmem:[%s416] sm:$0xf]
        %v418 = vld [vmem:[%s416 + $0x4] sm:$0xf]
        %v419 = vld [vmem:[%s416 + $0x8] sm:$0xf]
        %v420 = vld [vmem:[%s416 + $0xc] sm:$0xf]
        %v425 = vunpack.c.l.b16 %v417
        %v426 = vunpack.c.l.b16 %v418
        %v427 = vunpack.c.l.b16 %v419
        %v428 = vunpack.c.l.b16 %v420
        %v429 = vpack.c.b16 %v426, %v425
        %v430 = vpack.c.b16 %v428, %v427
        %v434 = vsel %vm318, %v289, 0
        %436 = vmatprep.subr.bf16.mxu0 0
        %437 = vmatpush1.bf16.msra.mxu0 %v429
        %438 = vmatprep.subr.bf16.mxu0 0
        %439 = vmatpush1.bf16.msra.mxu0 %v430
        %440 = vmatprep.subr.bf16.mxu0 0
        %441 = vmatpush1.bf16.msra.mxu0 0
        %442 = vmatprep.subr.bf16.mxu0 0
        %443 = vmatpush1.bf16.msra.mxu0 0
        %444 = vmatprep.subr.bf16.mxu0 0
        %445 = vmatpush1.bf16.msra.mxu0 0
        %446 = vmatprep.subr.bf16.mxu0 0
        %447 = vmatpush1.bf16.msra.mxu0 0
        %448 = vmatprep.subr.bf16.mxu0 0
        %449 = vmatpush1.bf16.msra.mxu0 0
        %450 = vmatprep.subr.bf16.mxu0 0
        %451 = vmatpush1.bf16.msra.mxu0 0
        %452 = vmatprep.subr.bf16.mxu0 0
        %453 = vmatpush1.bf16.msra.mxu0 0
        %454 = vmatprep.subr.bf16.mxu0 0
        %455 = vmatpush1.bf16.msra.mxu0 0
        %456 = vmatprep.subr.bf16.mxu0 0
        %457 = vmatpush1.bf16.msra.mxu0 0
        %458 = vmatprep.subr.bf16.mxu0 0
        %459 = vmatpush1.bf16.msra.mxu0 0
        %460 = vmatprep.subr.bf16.mxu0 0
        %461 = vmatpush1.bf16.msra.mxu0 0
        %462 = vmatprep.subr.bf16.mxu0 0
        %463 = vmatpush1.bf16.msra.mxu0 0
        %464 = vmatprep.subr.bf16.mxu0 0
        %465 = vmatpush1.bf16.msra.mxu0 0
        %466 = vmatprep.subr.bf16.mxu0 0
        %467 = vmatpush1.bf16.msra.mxu0 0
        %468 = vmatprep.mubr.bf16.mxu0 0
        %469 = vmatmul.mubr.bf16.gmra.mrb[0].mxu0 %v434
        %v470 = vpop.f32.mrb[0].mxu0
        %v471 = vadd.f32 0.0, %v470
        %v472 = vpop.f32.mrb[0].mxu0
        %v473 = vpop.f32.mrb[0].mxu0
        %v474 = vpop.f32.mrb[0].mxu0
        %475 = vdwg.mxu0
        %v476 = vadd.f32 %v411, %v471
        %s477 = scalar_lea.vmem %s1, 48
        %v478 = vld [vmem:[%s477] sm:$0xf]
        %v479 = vld [vmem:[%s477 + $0x4] sm:$0xf]
        %v480 = vld [vmem:[%s477 + $0x8] sm:$0xf]
        %v481 = vld [vmem:[%s477 + $0xc] sm:$0xf]
        %v482 = vshrl.u32 %v289, 16
        %v484 = vshll.u32 %v289, 16
        %v486 = vrot.slane %v484, 1
        %v487 = vor.u32 %v482, %v486
        %v492 = vunpack.c.l.b16 %v478
        %v493 = vunpack.c.l.b16 %v479
        %v494 = vunpack.c.l.b16 %v480
        %v495 = vunpack.c.l.b16 %v481
        %v496 = vpack.c.b16 %v493, %v492
        %v497 = vpack.c.b16 %v495, %v494
        %v501 = vsel %vm318, %v487, 0
        %503 = vmatprep.subr.bf16.mxu0 0
        %504 = vmatpush1.bf16.msra.mxu0 %v496
        %505 = vmatprep.subr.bf16.mxu0 0
        %506 = vmatpush1.bf16.msra.mxu0 %v497
        %507 = vmatprep.subr.bf16.mxu0 0
        %508 = vmatpush1.bf16.msra.mxu0 0
        %509 = vmatprep.subr.bf16.mxu0 0
        %510 = vmatpush1.bf16.msra.mxu0 0
        %511 = vmatprep.subr.bf16.mxu0 0
        %512 = vmatpush1.bf16.msra.mxu0 0
        %513 = vmatprep.subr.bf16.mxu0 0
        %514 = vmatpush1.bf16.msra.mxu0 0
        %515 = vmatprep.subr.bf16.mxu0 0
        %516 = vmatpush1.bf16.msra.mxu0 0
        %517 = vmatprep.subr.bf16.mxu0 0
        %518 = vmatpush1.bf16.msra.mxu0 0
        %519 = vmatprep.subr.bf16.mxu0 0
        %520 = vmatpush1.bf16.msra.mxu0 0
        %521 = vmatprep.subr.bf16.mxu0 0
        %522 = vmatpush1.bf16.msra.mxu0 0
        %523 = vmatprep.subr.bf16.mxu0 0
        %524 = vmatpush1.bf16.msra.mxu0 0
        %525 = vmatprep.subr.bf16.mxu0 0
        %526 = vmatpush1.bf16.msra.mxu0 0
        %527 = vmatprep.subr.bf16.mxu0 0
        %528 = vmatpush1.bf16.msra.mxu0 0
        %529 = vmatprep.subr.bf16.mxu0 0
        %530 = vmatpush1.bf16.msra.mxu0 0
        %531 = vmatprep.subr.bf16.mxu0 0
        %532 = vmatpush1.bf16.msra.mxu0 0
        %533 = vmatprep.subr.bf16.mxu0 0
        %534 = vmatpush1.bf16.msra.mxu0 0
        %535 = vmatprep.mubr.bf16.mxu0 0
        %536 = vmatmul.mubr.bf16.gmra.mrb[0].mxu0 %v501
        %v537 = vpop.f32.mrb[0].mxu0
        %v538 = vadd.f32 0.0, %v537
        %v539 = vpop.f32.mrb[0].mxu0
        %v540 = vpop.f32.mrb[0].mxu0
        %v541 = vpop.f32.mrb[0].mxu0
        %542 = vdwg.mxu0
        %v543 = vadd.f32 %v476, %v538
        %v544 = vpack.c.bf16 %v543, %v543
        %s545 = smul.addr %s245, 2
        %s546 = scalar_lea.vmem %s233, %s545
        %547 = vst [vmem:[%s546] sm:$0x3] %v544
        %v548 = vld [vmem:[#allocation2] sm:$0x1]
        %vm549 = vcmask 1043456
        %v550 = vsel %vm549, %v543, 0.0
        %v551 = vrot.slane %v550, 4
        %v552 = vadd.f32 %v550, %v551
        %v553 = vrot.slane %v552, 2
        %v554 = vadd.f32 %v552, %v553
        %v555 = vrot.slane %v554, 1
        %v556 = vadd.f32 %v554, %v555
        %v557 = vadd.f32 %v548, %v556
        %558 = vst [vmem:[#allocation2] sm:$0x1] %v557
        %v559 = vld [vmem:[#allocation2 + $0x1] sm:$0x1]
        %v560 = vmul.f32 %v543, %v543
        %v561 = vsel %vm549, %v560, 0.0
        %v562 = vrot.slane %v561, 4
        %v563 = vadd.f32 %v561, %v562
        %v564 = vrot.slane %v563, 2
        %v565 = vadd.f32 %v563, %v564
        %v566 = vrot.slane %v565, 1
        %v567 = vadd.f32 %v565, %v566
        %v568 = vadd.f32 %v559, %v567
        %569 = vst [vmem:[#allocation2 + $0x1] sm:$0x1] %v568
      $region41: #{_lambda_.3} parent=35 // loop_footer
        %s249 = sadd.s32 1, %s245
      $region42: #{_lambda_.3} parent=35 // loop_footer_branch
        %244 = sbr.rel target = $region38
      $region43: #{_lambda_.3} parent=35 // loop_exit
        _
      %v570 = vld [vmem:[#allocation2] sm:$0x3]
      %571 = vst [vmem:[%s238] sm:$0x3] %v570
      %s572 = smul.u32 4, %s17
      %p573 = scmp.lt.s32.totalorder %s572, 7
      %s574 = scalar_select %p573, %s572, 7
      %s575 = smul.addr %s574, 2
      %s576 = scalar_lea.vmem %s4, %s575
      %p577 = scmp.lt.s32.totalorder %s17, 1
      %s578 = scalar_select %p577, %s17, 1
      %s579 = smul.addr %s578, 2
      %s580 = scalar_lea.vmem %s5, %s579
      // Predicated region
      $region44: #{_lambda_.3} parent=35 // pred_check
        %p581 = pneg %p124
      $region45: #{_lambda_.3} parent=35 // pred_check_branch
        %583 = sbr.rel (%p581) target = $region47
      $region46: #{_lambda_.3} parent=35 // pred_region
        %s584 = smul.u32 4, %s17
      $region47: #{_lambda_.3} parent=35 // pred_fallthru
        _
      // Predicated region
      $region48: #{_lambda_.3} parent=35 // pred_check
        %p585 = pneg %p150
      $region49: #{_lambda_.3} parent=35 // pred_check_branch
        %587 = sbr.rel (%p585) target = $region51
      $region50: #{_lambda_.3} parent=35 // pred_region
        _
      $region51: #{_lambda_.3} parent=35 // pred_fallthru
        _
    $region36: #{_lambda_.3} parent=5 // pred_fallthru
      _
    %p588 = scmp.le.s32.totalorder 2, %s12
    // Predicated region
    $region52: #{_lambda_.3} parent=5 // pred_check
      %p589 = pneg %p588
    $region53: #{_lambda_.3} parent=5 // pred_check_branch
      %591 = sbr.rel (%p589) target = $region55
    $region54: #{_lambda_.3} parent=5 // pred_region
      %s592 = ssub.s32 %s12, 2
      // Predicated region
      $region56: #{_lambda_.3} parent=54 // pred_check
        %p593 = pneg %p130
      $region57: #{_lambda_.3} parent=54 // pred_check_branch
        %595 = sbr.rel (%p593) target = $region59
      $region58: #{_lambda_.3} parent=54 // pred_region
        %s596 = smul.u32 4, %s18
        %p597 = scmp.lt.s32.totalorder %s596, 7
        %s598 = scalar_select %p597, %s596, 7
        %s599 = smul.addr %s598, 2
        %s600 = scalar_lea.vmem %s4, %s599
      $region59: #{_lambda_.3} parent=54 // pred_fallthru
        _
      // Predicated region
      $region60: #{_lambda_.3} parent=54 // pred_check
        %p601 = pneg %p156
      $region61: #{_lambda_.3} parent=54 // pred_check_branch
        %603 = sbr.rel (%p601) target = $region63
      $region62: #{_lambda_.3} parent=54 // pred_region
        %p604 = scmp.lt.s32.totalorder %s18, 1
        %s605 = scalar_select %p604, %s18, 1
        %s606 = smul.addr %s605, 2
        %s607 = scalar_lea.vmem %s5, %s606
      $region63: #{_lambda_.3} parent=54 // pred_fallthru
        _
    $region55: #{_lambda_.3} parent=5 // pred_fallthru
      _
  $region6: #{_lambda_.3} parent=0 // loop_footer
    %s16 = sadd.s32 1, %s12
  $region7: #{_lambda_.3} parent=0 // loop_footer_branch
    %11 = sbr.rel target = $region3
  $region8: #{_lambda_.3} parent=0 // loop_exit
    _

// kernel: _lambda_.4
$region0: #{_lambda_.4}
  #allocation0 [shape = 'u32[]', space=smem, size = 0x4, offset = 0x4, fixed_abs, tag = 'smem constant byte address 0x4 - core index']
  #allocation1 [shape = 'u32[144,128]{1,0:T(1,128)}', space=vmem, size = 0x12000, scoped, tag = 'internal scratch']
  #allocation2 [shape = 'f32[2,128]{1,0:T(2,128)}', space=vmem, size = 0x400, scoped, tag = 'scratch operand']
  %s0 = inlined_call_operand.vmem [shape: bf16[18,9,16], index: 0, kind: input, shape index: {}]
  %s1 = inlined_call_operand.vmem [shape: bf16[4,16,128], index: 1, kind: input, shape index: {}]
  %s2 = inlined_call_operand.vmem [shape: f32[1,16], index: 2, kind: input, shape index: {}]
  %s3 = inlined_call_operand.vmem [shape: f32[1,16], index: 3, kind: input, shape index: {}]
  %s4 = inlined_call_operand.vmem [shape: bf16[16,8,128], index: 4, kind: output, shape index: {0}]
  %s5 = inlined_call_operand.vmem [shape: f32[2,2,128], index: 5, kind: output, shape index: {1}]
  %6 = xla_tuple %s4, %s5
  %s7 = sld [smem:[#allocation0]]
  $region64: #{_lambda_.4} parent=0
    _
  %s9 = ssub.s32 1, %s7
  %s10 = scalar_select 0, %s9, %s7
  loop: start=0, step=1, limit=4
  $region2: #{_lambda_.4} parent=0 // loop_pre_header
    _
  $region3: #{_lambda_.4} parent=0 // loop_header
    %s12 = sphi 0, %s16
    %p13 = scmp.ge.s32.totalorder %s12, 4
    %s22 = sphi 0, %s24
    %s25 = sphi 0, %s22
    %s26 = sphi 0, %s25
    %s42 = sphi 0, %s26
    %s46 = sphi 0, %s46
    %s48 = sphi 0, %s46
    %s49 = sphi 0, %s48
    %s63 = sphi 0, %s49
    %s67 = sphi 0, %s67
    %s69 = sphi 0, %s67
    %s70 = sphi 0, %s69
    %s84 = sphi 0, %s70
    %s88 = sphi 0, %s88
    %s90 = sphi 0, %s88
    %s91 = sphi 0, %s90
    %s105 = sphi 0, %s91
    %s111 = sphi 0, %s113
    %s114 = sphi 0, %s111
    %s115 = sphi 0, %s114
    %s131 = sphi 0, %s115
    %s137 = sphi 0, %s139
    %s140 = sphi 0, %s137
    %s141 = sphi 0, %s140
    %s157 = sphi 0, %s141
  $region4: #{_lambda_.4} parent=0 // loop_header_branch
    %15 = sbr.rel (%p13) target = $region8
  $region5: #{_lambda_.4} parent=0 // loop_body
    %s17 = ssub.s32 %s12, 1
    %s18 = ssub.s32 %s12, 2
    %s19 = sadd.s32 %s12, 1
    %s20 = ssub.s32 %s12, %s19
    %p21 = scmp.eq.s32.totalorder %s20, 0
    %s23 = sadd.s32 %s22, 1
    %s24 = scalar_select %p21, %s22, %s23
    %p27 = pneg %p21
    %p28 = scmp.eq.s32.totalorder %s12, 1
    %p29 = por %p27, %p28
    %p30 = scmp.ne.s32.totalorder %s22, %s25
    %p31 = scmp.eq.s32.totalorder %s12, 0
    %p32 = por %p30, %p31
    %p33 = scmp.ne.s32.totalorder %s22, %s25
    %p34 = scmp.eq.s32.totalorder %s17, 1
    %p35 = por %p33, %p34
    %p36 = scmp.ne.s32.totalorder %s25, %s26
    %p37 = scmp.eq.s32.totalorder %s17, 0
    %p38 = por %p36, %p37
    %p39 = scmp.ne.s32.totalorder %s25, %s26
    %p40 = scmp.eq.s32.totalorder %s18, 1
    %p41 = por %p39, %p40
    %p43 = scmp.ne.s32.totalorder %s26, %s42
    %p44 = scmp.eq.s32.totalorder %s18, 0
    %p45 = por %p43, %p44
    %s47 = sadd.s32 %s46, 1
    %p50 = scmp.eq.s32.totalorder %s12, 1
    %p51 = scmp.ne.s32.totalorder %s46, %s48
    %p52 = scmp.eq.s32.totalorder %s12, 0
    %p53 = por %p51, %p52
    %p54 = scmp.ne.s32.totalorder %s46, %s48
    %p55 = scmp.eq.s32.totalorder %s17, 1
    %p56 = por %p54, %p55
    %p57 = scmp.ne.s32.totalorder %s48, %s49
    %p58 = scmp.eq.s32.totalorder %s17, 0
    %p59 = por %p57, %p58
    %p60 = scmp.ne.s32.totalorder %s48, %s49
    %p61 = scmp.eq.s32.totalorder %s18, 1
    %p62 = por %p60, %p61
    %p64 = scmp.ne.s32.totalorder %s49, %s63
    %p65 = scmp.eq.s32.totalorder %s18, 0
    %p66 = por %p64, %p65
    %s68 = sadd.s32 %s67, 1
    %p71 = scmp.eq.s32.totalorder %s12, 1
    %p72 = scmp.ne.s32.totalorder %s67, %s69
    %p73 = scmp.eq.s32.totalorder %s12, 0
    %p74 = por %p72, %p73
    %p75 = scmp.ne.s32.totalorder %s67, %s69
    %p76 = scmp.eq.s32.totalorder %s17, 1
    %p77 = por %p75, %p76
    %p78 = scmp.ne.s32.totalorder %s69, %s70
    %p79 = scmp.eq.s32.totalorder %s17, 0
    %p80 = por %p78, %p79
    %p81 = scmp.ne.s32.totalorder %s69, %s70
    %p82 = scmp.eq.s32.totalorder %s18, 1
    %p83 = por %p81, %p82
    %p85 = scmp.ne.s32.totalorder %s70, %s84
    %p86 = scmp.eq.s32.totalorder %s18, 0
    %p87 = por %p85, %p86
    %s89 = sadd.s32 %s88, 1
    %p92 = scmp.eq.s32.totalorder %s12, 1
    %p93 = scmp.ne.s32.totalorder %s88, %s90
    %p94 = scmp.eq.s32.totalorder %s12, 0
    %p95 = por %p93, %p94
    %p96 = scmp.ne.s32.totalorder %s88, %s90
    %p97 = scmp.eq.s32.totalorder %s17, 1
    %p98 = por %p96, %p97
    %p99 = scmp.ne.s32.totalorder %s90, %s91
    %p100 = scmp.eq.s32.totalorder %s17, 0
    %p101 = por %p99, %p100
    %p102 = scmp.ne.s32.totalorder %s90, %s91
    %p103 = scmp.eq.s32.totalorder %s18, 1
    %p104 = por %p102, %p103
    %p106 = scmp.ne.s32.totalorder %s91, %s105
    %p107 = scmp.eq.s32.totalorder %s18, 0
    %p108 = por %p106, %p107
    %s109 = ssub.s32 %s12, %s19
    %p110 = scmp.eq.s32.totalorder %s109, 0
    %s112 = sadd.s32 %s111, 1
    %s113 = scalar_select %p110, %s111, %s112
    %p116 = pneg %p110
    %p117 = scmp.eq.s32.totalorder %s12, 1
    %p118 = por %p116, %p117
    %p119 = scmp.ne.s32.totalorder %s111, %s114
    %p120 = scmp.eq.s32.totalorder %s12, 0
    %p121 = por %p119, %p120
    %p122 = scmp.ne.s32.totalorder %s111, %s114
    %p123 = scmp.eq.s32.totalorder %s17, 1
    %p124 = por %p122, %p123
    %p125 = scmp.ne.s32.totalorder %s114, %s115
    %p126 = scmp.eq.s32.totalorder %s17, 0
    %p127 = por %p125, %p126
    %p128 = scmp.ne.s32.totalorder %s114, %s115
    %p129 = scmp.eq.s32.totalorder %s18, 1
    %p130 = por %p128, %p129
    %p132 = scmp.ne.s32.totalorder %s115, %s131
    %p133 = scmp.eq.s32.totalorder %s18, 0
    %p134 = por %p132, %p133
    %s135 = ssub.s32 %s12, %s19
    %p136 = scmp.eq.s32.totalorder %s135, 0
    %s138 = sadd.s32 %s137, 1
    %s139 = scalar_select %p136, %s137, %s138
    %p142 = pneg %p136
    %p143 = scmp.eq.s32.totalorder %s12, 1
    %p144 = por %p142, %p143
    %p145 = scmp.ne.s32.totalorder %s137, %s140
    %p146 = scmp.eq.s32.totalorder %s12, 0
    %p147 = por %p145, %p146
    %p148 = scmp.ne.s32.totalorder %s137, %s140
    %p149 = scmp.eq.s32.totalorder %s17, 1
    %p150 = por %p148, %p149
    %p151 = scmp.ne.s32.totalorder %s140, %s141
    %p152 = scmp.eq.s32.totalorder %s17, 0
    %p153 = por %p151, %p152
    %p154 = scmp.ne.s32.totalorder %s140, %s141
    %p155 = scmp.eq.s32.totalorder %s18, 1
    %p156 = por %p154, %p155
    %p158 = scmp.ne.s32.totalorder %s141, %s157
    %p159 = scmp.eq.s32.totalorder %s18, 0
    %p160 = por %p158, %p159
    %p161 = scmp.le.s32.totalorder 1, %s12
    %p162 = scmp.lt.s32.totalorder %s12, 3
    %p163 = pnand %p161, %p162
    %p164 = pneg %p163
    // Predicated region
    $region9: #{_lambda_.4} parent=5 // pred_check
      _
    $region10: #{_lambda_.4} parent=5 // pred_check_branch
      %166 = sbr.rel (%p163) target = $region12
    $region11: #{_lambda_.4} parent=5 // pred_region
      %s167 = ssub.s32 %s12, 1
      // Predicated region
      $region13: #{_lambda_.4} parent=11 // pred_check
        %p168 = pneg %p59
      $region14: #{_lambda_.4} parent=11 // pred_check_branch
        %170 = sbr.rel (%p168) target = $region16
      $region15: #{_lambda_.4} parent=11 // pred_region
        _
      $region16: #{_lambda_.4} parent=11 // pred_fallthru
        _
      // Predicated region
      $region17: #{_lambda_.4} parent=11 // pred_check
        %p171 = pneg %p80
      $region18: #{_lambda_.4} parent=11 // pred_check_branch
        %173 = sbr.rel (%p171) target = $region20
      $region19: #{_lambda_.4} parent=11 // pred_region
        _
      $region20: #{_lambda_.4} parent=11 // pred_fallthru
        _
      // Predicated region
      $region21: #{_lambda_.4} parent=11 // pred_check
        %p174 = pneg %p101
      $region22: #{_lambda_.4} parent=11 // pred_check_branch
        %176 = sbr.rel (%p174) target = $region24
      $region23: #{_lambda_.4} parent=11 // pred_region
        _
      $region24: #{_lambda_.4} parent=11 // pred_fallthru
        _
    $region12: #{_lambda_.4} parent=5 // pred_fallthru
      _
    %p177 = scmp.lt.s32.totalorder %s12, 2
    // Predicated region
    $region25: #{_lambda_.4} parent=5 // pred_check
      %p178 = pneg %p177
    $region26: #{_lambda_.4} parent=5 // pred_check_branch
      %180 = sbr.rel (%p178) target = $region28
    $region27: #{_lambda_.4} parent=5 // pred_region
      // Predicated region
      $region29: #{_lambda_.4} parent=27 // pred_check
        %p181 = pneg %p32
      $region30: #{_lambda_.4} parent=27 // pred_check_branch
        %183 = sbr.rel (%p181) target = $region32
      $region31: #{_lambda_.4} parent=27 // pred_region
        %s184 = smul.u32 9, %s12
        %p185 = scmp.lt.s32.totalorder %s184, 17
        %s186 = scalar_select %p185, %s184, 17
        %s187 = smul.addr %s186, 2
        %s188 = smul.addr %s187, 4
        %s189 = scalar_lea.vmem %s0, %s188
        %s190 = smul.u32 9, %s12
      $region32: #{_lambda_.4} parent=27 // pred_fallthru
        _
    $region28: #{_lambda_.4} parent=5 // pred_fallthru
      _
    %p191 = scmp.le.s32.totalorder 1, %s12
    %p192 = scmp.lt.s32.totalorder %s12, 3
    %p193 = pnand %p191, %p192
    %p194 = pneg %p193
    // Predicated region
    $region33: #{_lambda_.4} parent=5 // pred_check
      _
    $region34: #{_lambda_.4} parent=5 // pred_check_branch
      %196 = sbr.rel (%p193) target = $region36
    $region35: #{_lambda_.4} parent=5 // pred_region
      %s197 = ssub.s32 %s12, 1
      %s198 = smul.u32 9, %s17
      %p199 = scmp.lt.s32.totalorder %s198, 17
      %s200 = scalar_select %p199, %s198, 17
      %s201 = smul.addr %s200, 2
      %s202 = smul.addr %s201, 4
      %s203 = scalar_lea.vmem %s0, %s202
      %p204 = pneg %p38
      %p205 = pneg %p35
      %p206 = pneg %p59
      %p207 = pneg %p56
      %p208 = pneg %p80
      %p209 = pneg %p77
      %p210 = pneg %p101
      %p211 = pneg %p98
      %p212 = pneg %p127
      %p213 = pneg %p124
      %s214 = smul.u32 8, %s17
      %p215 = scmp.lt.s32.totalorder %s214, 15
      %s216 = scalar_select %p215, %s214, 15
      %s217 = smul.addr %s216, 4
      %s218 = scalar_lea.vmem %s4, %s217
      %p219 = pneg %p153
      %p220 = pneg %p150
      %p221 = scmp.lt.s32.totalorder %s17, 1
      %s222 = scalar_select %p221, %s17, 1
      %s223 = smul.addr %s222, 2
      %s224 = scalar_lea.vmem %s5, %s223
      %s225 = smul.u32 9, %s17
      %p226 = scmp.lt.s32.totalorder %s225, 17
      %s227 = scalar_select %p226, %s225, 17
      %s228 = smul.addr %s227, 2
      %s229 = smul.addr %s228, 4
      %s230 = scalar_lea.vmem %s0, %s229
      %s231 = smul.u32 9, %s17
      %s232 = smul.u32 8, %s17
      %p233 = scmp.lt.s32.totalorder %s232, 15
      %s234 = scalar_select %p233, %s232, 15
      %s235 = smul.addr %s234, 4
      %s236 = scalar_lea.vmem %s4, %s235
      %s237 = smul.u32 8, %s17
      %p238 = scmp.lt.s32.totalorder %s17, 1
      %s239 = scalar_select %p238, %s17, 1
      %s240 = smul.addr %s239, 2
      %s241 = scalar_lea.vmem %s5, %s240
      %243 = vst [vmem:[#allocation2] sm:$0x3] 0.0
      %v244 = vlaneseq
      %v245 = vshrl.u32 %v244, 7
      %v246 = vadd.s32 %v245, 8
      %vm247 = vcmp.lt.s32.totalorder %v245, 8
      %vm248 = vcmp.lt.s32.totalorder %v246, 8
      loop: start=0, step=1, limit=8
      $region37: #{_lambda_.4} parent=35 // loop_pre_header
        _
      $region38: #{_lambda_.4} parent=35 // loop_header
        %s250 = sphi 0, %s254
        %p251 = scmp.ge.s32.totalorder %s250, 8
      $region39: #{_lambda_.4} parent=35 // loop_header_branch
        %253 = sbr.rel (%p251) target = $region43
      $region40: #{_lambda_.4} parent=35 // loop_body
        %s255 = smul.u32 %s250, 2
        %s256 = smul.addr %s255, 4
        %s257 = scalar_lea.vmem %s230, %s256
        %v258 = vld [vmem:[%s257] sm:$0xf]
        %v259 = vld [vmem:[%s257 + $0x4] sm:$0x1]
        %v260 = vunpack.c.l.bf16 %v258
        %v261 = vunpack.c.l.bf16 %v259
        %v262 = vld [vmem:[%s2] sm:$0x1]
        %v264 = vlaneseq
        %v265 = vshrl.u32 %v264, 7
        %v266 = vsub.s32 0, %v265
        %v267 = vrot.slane %v262, %v266
        %v269 = vmul.f32 %v260, %v267
        %v270 = vmul.f32 %v261, %v267
        %v271 = vld [vmem:[%s3] sm:$0x1]
        %v273 = vlaneseq
        %v274 = vshrl.u32 %v273, 7
        %v275 = vsub.s32 0, %v274
        %v276 = vrot.slane %v271, %v275
        %v278 = vadd.f32 %v269, %v276
        %v279 = vadd.f32 %v270, %v276
        %v280 = vmax.f32 %v278, 0.0
        %v281 = vmax.f32 %v279, 0.0
        %v282 = vsel %vm247, 1, 0
        %v283 = vsel %vm248, 1, 0
        %vm284 = vcmp.eq.s32.totalorder %v282, 1
        %vm285 = vcmp.eq.s32.totalorder %v283, 1
        %v286 = vsel %vm284, %v280, 0.0
        %v287 = vsel %vm285, %v281, 0.0
        %v288 = vpack.c.bf16 %v287, %v286
        %s289 = sadd.s32 %s250, 1
        %s290 = smul.u32 %s289, 2
        %s291 = smul.addr %s290, 4
        %s292 = scalar_lea.vmem %s230, %s291
        %v293 = vld [vmem:[%s292] sm:$0xf]
        %v294 = vld [vmem:[%s292 + $0x4] sm:$0x1]
        %p295 = scmp.lt.s32.totalorder %s289, 8
        %v296 = vunpack.c.l.bf16 %v293
        %v297 = vunpack.c.l.bf16 %v294
        %v298 = vmul.f32 %v296, %v267
        %v299 = vmul.f32 %v297, %v267
        %v300 = vadd.f32 %v298, %v276
        %v301 = vadd.f32 %v299, %v276
        %v302 = vmax.f32 %v300, 0.0
        %v303 = vmax.f32 %v301, 0.0
        %s304 = scalar_select %p295, 1, 0
        %v305 = vstv %s304
        %vm306 = vcmp.eq.s32.totalorder %v305, 1
        %vm307 = vmand %vm247, %vm306
        %vm308 = vmand %vm248, %vm306
        %v309 = vsel %vm307, 1, 0
        %v310 = vsel %vm308, 1, 0
        %vm311 = vcmp.eq.s32.totalorder %v309, 1
        %vm312 = vcmp.eq.s32.totalorder %v310, 1
        %v313 = vsel %vm311, %v302, 0.0
        %v314 = vsel %vm312, %v303, 0.0
        %v315 = vpack.c.bf16 %v314, %v313
        %v316 = vld [vmem:[%s1] sm:$0xf]
        %v317 = vld [vmem:[%s1 + $0x4] sm:$0xf]
        %s318 = scalar_lea.vmem %s1, 8
        %v319 = vld [vmem:[%s318] sm:$0xf]
        %v320 = vld [vmem:[%s318 + $0x4] sm:$0xf]
        %v322 = vshrl.u32 %v288, 16
        %v324 = vshll.u32 %v288, 16
        %v326 = vrot.slane %v324, 1
        %v327 = vor.u32 %v322, %v326
        %v330 = vunpack.c.l.b16 %v319
        %v331 = vunpack.c.l.b16 %v320
        %v332 = vpack.c.b16 %v331, %v330
        %vm334 = vcmask 130048
        %v336 = vsel %vm334, %v327, 0
        %338 = vmatprep.subr.bf16.mxu0 0
        %339 = vmatpush1.bf16.msra.mxu0 %v332
        %340 = vmatprep.subr.bf16.mxu0 0
        %341 = vmatpush1.bf16.msra.mxu0 0
        %342 = vmatprep.subr.bf16.mxu0 0
        %343 = vmatpush1.bf16.msra.mxu0 0
        %344 = vmatprep.subr.bf16.mxu0 0
        %345 = vmatpush1.bf16.msra.mxu0 0
        %346 = vmatprep.subr.bf16.mxu0 0
        %347 = vmatpush1.bf16.msra.mxu0 0
        %348 = vmatprep.subr.bf16.mxu0 0
        %349 = vmatpush1.bf16.msra.mxu0 0
        %350 = vmatprep.subr.bf16.mxu0 0
        %351 = vmatpush1.bf16.msra.mxu0 0
        %352 = vmatprep.subr.bf16.mxu0 0
        %353 = vmatpush1.bf16.msra.mxu0 0
        %354 = vmatprep.subr.bf16.mxu0 0
        %355 = vmatpush1.bf16.msra.mxu0 0
        %356 = vmatprep.subr.bf16.mxu0 0
        %357 = vmatpush1.bf16.msra.mxu0 0
        %358 = vmatprep.subr.bf16.mxu0 0
        %359 = vmatpush1.bf16.msra.mxu0 0
        %360 = vmatprep.subr.bf16.mxu0 0
        %361 = vmatpush1.bf16.msra.mxu0 0
        %362 = vmatprep.subr.bf16.mxu0 0
        %363 = vmatpush1.bf16.msra.mxu0 0
        %364 = vmatprep.subr.bf16.mxu0 0
        %365 = vmatpush1.bf16.msra.mxu0 0
        %366 = vmatprep.subr.bf16.mxu0 0
        %367 = vmatpush1.bf16.msra.mxu0 0
        %368 = vmatprep.subr.bf16.mxu0 0
        %369 = vmatpush1.bf16.msra.mxu0 0
        %370 = vmatprep.mubr.bf16.mxu0 0
        %371 = vmatmul.mubr.bf16.gmra.mrb[0].mxu0 %v336
        %v372 = vpop.f32.mrb[0].mxu0
        %v373 = vadd.f32 0.0, %v372
        %v374 = vpop.f32.mrb[0].mxu0
        %v375 = vpop.f32.mrb[0].mxu0
        %v376 = vpop.f32.mrb[0].mxu0
        %377 = vdwg.mxu0
        %v380 = vunpack.c.l.b16 %v316
        %v381 = vunpack.c.l.b16 %v317
        %v382 = vpack.c.b16 %v381, %v380
        %v384 = vsel %vm334, %v288, 0
        %386 = vmatprep.subr.bf16.mxu0 0
        %387 = vmatpush1.bf16.msra.mxu0 %v382
        %388 = vmatprep.subr.bf16.mxu0 0
        %389 = vmatpush1.bf16.msra.mxu0 0
        %390 = vmatprep.subr.bf16.mxu0 0
        %391 = vmatpush1.bf16.msra.mxu0 0
        %392 = vmatprep.subr.bf16.mxu0 0
        %393 = vmatpush1.bf16.msra.mxu0 0
        %394 = vmatprep.subr.bf16.mxu0 0
        %395 = vmatpush1.bf16.msra.mxu0 0
        %396 = vmatprep.subr.bf16.mxu0 0
        %397 = vmatpush1.bf16.msra.mxu0 0
        %398 = vmatprep.subr.bf16.mxu0 0
        %399 = vmatpush1.bf16.msra.mxu0 0
        %400 = vmatprep.subr.bf16.mxu0 0
        %401 = vmatpush1.bf16.msra.mxu0 0
        %402 = vmatprep.subr.bf16.mxu0 0
        %403 = vmatpush1.bf16.msra.mxu0 0
        %404 = vmatprep.subr.bf16.mxu0 0
        %405 = vmatpush1.bf16.msra.mxu0 0
        %406 = vmatprep.subr.bf16.mxu0 0
        %407 = vmatpush1.bf16.msra.mxu0 0
        %408 = vmatprep.subr.bf16.mxu0 0
        %409 = vmatpush1.bf16.msra.mxu0 0
        %410 = vmatprep.subr.bf16.mxu0 0
        %411 = vmatpush1.bf16.msra.mxu0 0
        %412 = vmatprep.subr.bf16.mxu0 0
        %413 = vmatpush1.bf16.msra.mxu0 0
        %414 = vmatprep.subr.bf16.mxu0 0
        %415 = vmatpush1.bf16.msra.mxu0 0
        %416 = vmatprep.subr.bf16.mxu0 0
        %417 = vmatpush1.bf16.msra.mxu0 0
        %418 = vmatprep.mubr.bf16.mxu0 0
        %419 = vmatmul.mubr.bf16.gmra.mrb[0].mxu0 %v384
        %v420 = vpop.f32.mrb[0].mxu0
        %v421 = vadd.f32 %v373, %v420
        %v422 = vpop.f32.mrb[0].mxu0
        %v423 = vpop.f32.mrb[0].mxu0
        %v424 = vpop.f32.mrb[0].mxu0
        %425 = vdwg.mxu0
        %s426 = scalar_lea.vmem %s1, 16
        %v427 = vld [vmem:[%s426] sm:$0xf]
        %v428 = vld [vmem:[%s426 + $0x4] sm:$0xf]
        %v431 = vunpack.c.l.b16 %v427
        %v432 = vunpack.c.l.b16 %v428
        %v433 = vpack.c.b16 %v432, %v431
        %v436 = vsel %vm334, %v315, 0
        %438 = vmatprep.subr.bf16.mxu0 0
        %439 = vmatpush1.bf16.msra.mxu0 %v433
        %440 = vmatprep.subr.bf16.mxu0 0
        %441 = vmatpush1.bf16.msra.mxu0 0
        %442 = vmatprep.subr.bf16.mxu0 0
        %443 = vmatpush1.bf16.msra.mxu0 0
        %444 = vmatprep.subr.bf16.mxu0 0
        %445 = vmatpush1.bf16.msra.mxu0 0
        %446 = vmatprep.subr.bf16.mxu0 0
        %447 = vmatpush1.bf16.msra.mxu0 0
        %448 = vmatprep.subr.bf16.mxu0 0
        %449 = vmatpush1.bf16.msra.mxu0 0
        %450 = vmatprep.subr.bf16.mxu0 0
        %451 = vmatpush1.bf16.msra.mxu0 0
        %452 = vmatprep.subr.bf16.mxu0 0
        %453 = vmatpush1.bf16.msra.mxu0 0
        %454 = vmatprep.subr.bf16.mxu0 0
        %455 = vmatpush1.bf16.msra.mxu0 0
        %456 = vmatprep.subr.bf16.mxu0 0
        %457 = vmatpush1.bf16.msra.mxu0 0
        %458 = vmatprep.subr.bf16.mxu0 0
        %459 = vmatpush1.bf16.msra.mxu0 0
        %460 = vmatprep.subr.bf16.mxu0 0
        %461 = vmatpush1.bf16.msra.mxu0 0
        %462 = vmatprep.subr.bf16.mxu0 0
        %463 = vmatpush1.bf16.msra.mxu0 0
        %464 = vmatprep.subr.bf16.mxu0 0
        %465 = vmatpush1.bf16.msra.mxu0 0
        %466 = vmatprep.subr.bf16.mxu0 0
        %467 = vmatpush1.bf16.msra.mxu0 0
        %468 = vmatprep.subr.bf16.mxu0 0
        %469 = vmatpush1.bf16.msra.mxu0 0
        %470 = vmatprep.mubr.bf16.mxu0 0
        %471 = vmatmul.mubr.bf16.gmra.mrb[0].mxu0 %v436
        %v472 = vpop.f32.mrb[0].mxu0
        %v473 = vadd.f32 0.0, %v472
        %v474 = vpop.f32.mrb[0].mxu0
        %v475 = vpop.f32.mrb[0].mxu0
        %v476 = vpop.f32.mrb[0].mxu0
        %477 = vdwg.mxu0
        %v478 = vadd.f32 %v421, %v473
        %s479 = scalar_lea.vmem %s1, 24
        %v480 = vld [vmem:[%s479] sm:$0xf]
        %v481 = vld [vmem:[%s479 + $0x4] sm:$0xf]
        %v482 = vshrl.u32 %v315, 16
        %v484 = vshll.u32 %v315, 16
        %v486 = vrot.slane %v484, 1
        %v487 = vor.u32 %v482, %v486
        %v490 = vunpack.c.l.b16 %v480
        %v491 = vunpack.c.l.b16 %v481
        %v492 = vpack.c.b16 %v491, %v490
        %v495 = vsel %vm334, %v487, 0
        %497 = vmatprep.subr.bf16.mxu0 0
        %498 = vmatpush1.bf16.msra.mxu0 %v492
        %499 = vmatprep.subr.bf16.mxu0 0
        %500 = vmatpush1.bf16.msra.mxu0 0
        %501 = vmatprep.subr.bf16.mxu0 0
        %502 = vmatpush1.bf16.msra.mxu0 0
        %503 = vmatprep.subr.bf16.mxu0 0
        %504 = vmatpush1.bf16.msra.mxu0 0
        %505 = vmatprep.subr.bf16.mxu0 0
        %506 = vmatpush1.bf16.msra.mxu0 0
        %507 = vmatprep.subr.bf16.mxu0 0
        %508 = vmatpush1.bf16.msra.mxu0 0
        %509 = vmatprep.subr.bf16.mxu0 0
        %510 = vmatpush1.bf16.msra.mxu0 0
        %511 = vmatprep.subr.bf16.mxu0 0
        %512 = vmatpush1.bf16.msra.mxu0 0
        %513 = vmatprep.subr.bf16.mxu0 0
        %514 = vmatpush1.bf16.msra.mxu0 0
        %515 = vmatprep.subr.bf16.mxu0 0
        %516 = vmatpush1.bf16.msra.mxu0 0
        %517 = vmatprep.subr.bf16.mxu0 0
        %518 = vmatpush1.bf16.msra.mxu0 0
        %519 = vmatprep.subr.bf16.mxu0 0
        %520 = vmatpush1.bf16.msra.mxu0 0
        %521 = vmatprep.subr.bf16.mxu0 0
        %522 = vmatpush1.bf16.msra.mxu0 0
        %523 = vmatprep.subr.bf16.mxu0 0
        %524 = vmatpush1.bf16.msra.mxu0 0
        %525 = vmatprep.subr.bf16.mxu0 0
        %526 = vmatpush1.bf16.msra.mxu0 0
        %527 = vmatprep.subr.bf16.mxu0 0
        %528 = vmatpush1.bf16.msra.mxu0 0
        %529 = vmatprep.mubr.bf16.mxu0 0
        %530 = vmatmul.mubr.bf16.gmra.mrb[0].mxu0 %v495
        %v531 = vpop.f32.mrb[0].mxu0
        %v532 = vadd.f32 0.0, %v531
        %v533 = vpop.f32.mrb[0].mxu0
        %v534 = vpop.f32.mrb[0].mxu0
        %v535 = vpop.f32.mrb[0].mxu0
        %536 = vdwg.mxu0
        %v537 = vadd.f32 %v478, %v532
        %v538 = vpack.c.bf16 %v537, %v537
        %s539 = smul.addr %s250, 4
        %s540 = scalar_lea.vmem %s236, %s539
        %541 = vst [vmem:[%s540] sm:$0xf] %v538
        %v542 = vld [vmem:[#allocation2] sm:$0x1]
        %v543 = vrot.slane %v537, 4
        %v544 = vadd.f32 %v537, %v543
        %v545 = vrot.slane %v544, 2
        %v546 = vadd.f32 %v544, %v545
        %v547 = vrot.slane %v546, 1
        %v548 = vadd.f32 %v546, %v547
        %v549 = vadd.f32 %v542, %v548
        %550 = vst [vmem:[#allocation2] sm:$0x1] %v549
        %v551 = vld [vmem:[#allocation2 + $0x1] sm:$0x1]
        %v552 = vmul.f32 %v537, %v537
        %v553 = vrot.slane %v552, 4
        %v554 = vadd.f32 %v552, %v553
        %v555 = vrot.slane %v554, 2
        %v556 = vadd.f32 %v554, %v555
        %v557 = vrot.slane %v556, 1
        %v558 = vadd.f32 %v556, %v557
        %v559 = vadd.f32 %v551, %v558
        %560 = vst [vmem:[#allocation2 + $0x1] sm:$0x1] %v559
      $region41: #{_lambda_.4} parent=35 // loop_footer
        %s254 = sadd.s32 1, %s250
      $region42: #{_lambda_.4} parent=35 // loop_footer_branch
        %249 = sbr.rel target = $region38
      $region43: #{_lambda_.4} parent=35 // loop_exit
        _
      %v561 = vld [vmem:[#allocation2] sm:$0x3]
      %562 = vst [vmem:[%s241] sm:$0x3] %v561
      %s563 = smul.u32 8, %s17
      %p564 = scmp.lt.s32.totalorder %s563, 15
      %s565 = scalar_select %p564, %s563, 15
      %s566 = smul.addr %s565, 4
      %s567 = scalar_lea.vmem %s4, %s566
      %p568 = scmp.lt.s32.totalorder %s17, 1
      %s569 = scalar_select %p568, %s17, 1
      %s570 = smul.addr %s569, 2
      %s571 = scalar_lea.vmem %s5, %s570
      // Predicated region
      $region44: #{_lambda_.4} parent=35 // pred_check
        %p572 = pneg %p124
      $region45: #{_lambda_.4} parent=35 // pred_check_branch
        %574 = sbr.rel (%p572) target = $region47
      $region46: #{_lambda_.4} parent=35 // pred_region
        %s575 = smul.u32 8, %s17
      $region47: #{_lambda_.4} parent=35 // pred_fallthru
        _
      // Predicated region
      $region48: #{_lambda_.4} parent=35 // pred_check
        %p576 = pneg %p150
      $region49: #{_lambda_.4} parent=35 // pred_check_branch
        %578 = sbr.rel (%p576) target = $region51
      $region50: #{_lambda_.4} parent=35 // pred_region
        _
      $region51: #{_lambda_.4} parent=35 // pred_fallthru
        _
    $region36: #{_lambda_.4} parent=5 // pred_fallthru
      _
    %p579 = scmp.le.s32.totalorder 2, %s12
    // Predicated region
    $region52: #{_lambda_.4} parent=5 // pred_check
      %p580 = pneg %p579
    $region53: #{_lambda_.4} parent=5 // pred_check_branch
      %582 = sbr.rel (%p580) target = $region55
    $region54: #{_lambda_.4} parent=5 // pred_region
      %s583 = ssub.s32 %s12, 2
      // Predicated region
      $region56: #{_lambda_.4} parent=54 // pred_check
        %p584 = pneg %p130
      $region57: #{_lambda_.4} parent=54 // pred_check_branch
        %586 = sbr.rel (%p584) target = $region59
      $region58: #{_lambda_.4} parent=54 // pred_region
        %s587 = smul.u32 8, %s18
        %p588 = scmp.lt.s32.totalorder %s587, 15
        %s589 = scalar_select %p588, %s587, 15
        %s590 = smul.addr %s589, 4
        %s591 = scalar_lea.vmem %s4, %s590
      $region59: #{_lambda_.4} parent=54 // pred_fallthru
        _
      // Predicated region
      $region60: #{_lambda_.4} parent=54 // pred_check
        %p592 = pneg %p156
      $region61: #{_lambda_.4} parent=54 // pred_check_branch
        %594 = sbr.rel (%p592) target = $region63
      $region62: #{_lambda_.4} parent=54 // pred_region
        %p595 = scmp.lt.s32.totalorder %s18, 1
        %s596 = scalar_select %p595, %s18, 1
        %s597 = smul.addr %s596, 2
        %s598 = scalar_lea.vmem %s5, %s597
      $region63: #{_lambda_.4} parent=54 // pred_fallthru
        _
    $region55: #{_lambda_.4} parent=5 // pred_fallthru
      _
  $region6: #{_lambda_.4} parent=0 // loop_footer
    %s16 = sadd.s32 1, %s12
  $region7: #{_lambda_.4} parent=0 // loop_footer_branch
    %11 = sbr.rel target = $region3
  $region8: #{_lambda_.4} parent=0 // loop_exit
    _

// kernel: _lambda_.5
$region0: #{_lambda_.5}
  #allocation0 [shape = 'u32[]', space=smem, size = 0x4, offset = 0x4, fixed_abs, tag = 'smem constant byte address 0x4 - core index']
  #allocation1 [shape = 'u32[144,128]{1,0:T(1,128)}', space=vmem, size = 0x12000, scoped, tag = 'internal scratch']
  %s0 = inlined_call_operand.vmem [shape: bf16[44,22,8], index: 0, kind: input, shape index: {}]
  %s1 = inlined_call_operand.vmem [shape: bf16[7,7,8,128], index: 1, kind: input, shape index: {}]
  %s2 = inlined_call_operand.vmem [shape: f32[1,8], index: 2, kind: input, shape index: {}]
  %s3 = inlined_call_operand.vmem [shape: f32[1,8], index: 3, kind: input, shape index: {}]
  %s4 = inlined_call_operand.vmem [shape: f32[1,128], index: 4, kind: input, shape index: {}]
  %s5 = inlined_call_operand.vmem [shape: bf16[32,16,128], index: 5, kind: output, shape index: {}]
  %s6 = sld [smem:[#allocation0]]
  $region60: #{_lambda_.5} parent=0
    _
  %s8 = ssub.s32 1, %s6
  %s9 = scalar_select 0, %s8, %s6
  loop: start=0, step=1, limit=4
  $region2: #{_lambda_.5} parent=0 // loop_pre_header
    _
  $region3: #{_lambda_.5} parent=0 // loop_header
    %s11 = sphi 0, %s15
    %p12 = scmp.ge.s32.totalorder %s11, 4
    %s21 = sphi 0, %s23
    %s24 = sphi 0, %s21
    %s25 = sphi 0, %s24
    %s41 = sphi 0, %s25
    %s45 = sphi 0, %s45
    %s47 = sphi 0, %s45
    %s48 = sphi 0, %s47
    %s62 = sphi 0, %s48
    %s66 = sphi 0, %s66
    %s68 = sphi 0, %s66
    %s69 = sphi 0, %s68
    %s83 = sphi 0, %s69
    %s87 = sphi 0, %s87
    %s89 = sphi 0, %s87
    %s90 = sphi 0, %s89
    %s104 = sphi 0, %s90
    %s108 = sphi 0, %s108
    %s110 = sphi 0, %s108
    %s111 = sphi 0, %s110
    %s125 = sphi 0, %s111
    %s131 = sphi 0, %s133
    %s134 = sphi 0, %s131
    %s135 = sphi 0, %s134
    %s151 = sphi 0, %s135
  $region4: #{_lambda_.5} parent=0 // loop_header_branch
    %14 = sbr.rel (%p12) target = $region8
  $region5: #{_lambda_.5} parent=0 // loop_body
    %s16 = ssub.s32 %s11, 1
    %s17 = ssub.s32 %s11, 2
    %s18 = sadd.s32 %s11, 1
    %s19 = ssub.s32 %s11, %s18
    %p20 = scmp.eq.s32.totalorder %s19, 0
    %s22 = sadd.s32 %s21, 1
    %s23 = scalar_select %p20, %s21, %s22
    %p26 = pneg %p20
    %p27 = scmp.eq.s32.totalorder %s11, 1
    %p28 = por %p26, %p27
    %p29 = scmp.ne.s32.totalorder %s21, %s24
    %p30 = scmp.eq.s32.totalorder %s11, 0
    %p31 = por %p29, %p30
    %p32 = scmp.ne.s32.totalorder %s21, %s24
    %p33 = scmp.eq.s32.totalorder %s16, 1
    %p34 = por %p32, %p33
    %p35 = scmp.ne.s32.totalorder %s24, %s25
    %p36 = scmp.eq.s32.totalorder %s16, 0
    %p37 = por %p35, %p36
    %p38 = scmp.ne.s32.totalorder %s24, %s25
    %p39 = scmp.eq.s32.totalorder %s17, 1
    %p40 = por %p38, %p39
    %p42 = scmp.ne.s32.totalorder %s25, %s41
    %p43 = scmp.eq.s32.totalorder %s17, 0
    %p44 = por %p42, %p43
    %s46 = sadd.s32 %s45, 1
    %p49 = scmp.eq.s32.totalorder %s11, 1
    %p50 = scmp.ne.s32.totalorder %s45, %s47
    %p51 = scmp.eq.s32.totalorder %s11, 0
    %p52 = por %p50, %p51
    %p53 = scmp.ne.s32.totalorder %s45, %s47
    %p54 = scmp.eq.s32.totalorder %s16, 1
    %p55 = por %p53, %p54
    %p56 = scmp.ne.s32.totalorder %s47, %s48
    %p57 = scmp.eq.s32.totalorder %s16, 0
    %p58 = por %p56, %p57
    %p59 = scmp.ne.s32.totalorder %s47, %s48
    %p60 = scmp.eq.s32.totalorder %s17, 1
    %p61 = por %p59, %p60
    %p63 = scmp.ne.s32.totalorder %s48, %s62
    %p64 = scmp.eq.s32.totalorder %s17, 0
    %p65 = por %p63, %p64
    %s67 = sadd.s32 %s66, 1
    %p70 = scmp.eq.s32.totalorder %s11, 1
    %p71 = scmp.ne.s32.totalorder %s66, %s68
    %p72 = scmp.eq.s32.totalorder %s11, 0
    %p73 = por %p71, %p72
    %p74 = scmp.ne.s32.totalorder %s66, %s68
    %p75 = scmp.eq.s32.totalorder %s16, 1
    %p76 = por %p74, %p75
    %p77 = scmp.ne.s32.totalorder %s68, %s69
    %p78 = scmp.eq.s32.totalorder %s16, 0
    %p79 = por %p77, %p78
    %p80 = scmp.ne.s32.totalorder %s68, %s69
    %p81 = scmp.eq.s32.totalorder %s17, 1
    %p82 = por %p80, %p81
    %p84 = scmp.ne.s32.totalorder %s69, %s83
    %p85 = scmp.eq.s32.totalorder %s17, 0
    %p86 = por %p84, %p85
    %s88 = sadd.s32 %s87, 1
    %p91 = scmp.eq.s32.totalorder %s11, 1
    %p92 = scmp.ne.s32.totalorder %s87, %s89
    %p93 = scmp.eq.s32.totalorder %s11, 0
    %p94 = por %p92, %p93
    %p95 = scmp.ne.s32.totalorder %s87, %s89
    %p96 = scmp.eq.s32.totalorder %s16, 1
    %p97 = por %p95, %p96
    %p98 = scmp.ne.s32.totalorder %s89, %s90
    %p99 = scmp.eq.s32.totalorder %s16, 0
    %p100 = por %p98, %p99
    %p101 = scmp.ne.s32.totalorder %s89, %s90
    %p102 = scmp.eq.s32.totalorder %s17, 1
    %p103 = por %p101, %p102
    %p105 = scmp.ne.s32.totalorder %s90, %s104
    %p106 = scmp.eq.s32.totalorder %s17, 0
    %p107 = por %p105, %p106
    %s109 = sadd.s32 %s108, 1
    %p112 = scmp.eq.s32.totalorder %s11, 1
    %p113 = scmp.ne.s32.totalorder %s108, %s110
    %p114 = scmp.eq.s32.totalorder %s11, 0
    %p115 = por %p113, %p114
    %p116 = scmp.ne.s32.totalorder %s108, %s110
    %p117 = scmp.eq.s32.totalorder %s16, 1
    %p118 = por %p116, %p117
    %p119 = scmp.ne.s32.totalorder %s110, %s111
    %p120 = scmp.eq.s32.totalorder %s16, 0
    %p121 = por %p119, %p120
    %p122 = scmp.ne.s32.totalorder %s110, %s111
    %p123 = scmp.eq.s32.totalorder %s17, 1
    %p124 = por %p122, %p123
    %p126 = scmp.ne.s32.totalorder %s111, %s125
    %p127 = scmp.eq.s32.totalorder %s17, 0
    %p128 = por %p126, %p127
    %s129 = ssub.s32 %s11, %s18
    %p130 = scmp.eq.s32.totalorder %s129, 0
    %s132 = sadd.s32 %s131, 1
    %s133 = scalar_select %p130, %s131, %s132
    %p136 = pneg %p130
    %p137 = scmp.eq.s32.totalorder %s11, 1
    %p138 = por %p136, %p137
    %p139 = scmp.ne.s32.totalorder %s131, %s134
    %p140 = scmp.eq.s32.totalorder %s11, 0
    %p141 = por %p139, %p140
    %p142 = scmp.ne.s32.totalorder %s131, %s134
    %p143 = scmp.eq.s32.totalorder %s16, 1
    %p144 = por %p142, %p143
    %p145 = scmp.ne.s32.totalorder %s134, %s135
    %p146 = scmp.eq.s32.totalorder %s16, 0
    %p147 = por %p145, %p146
    %p148 = scmp.ne.s32.totalorder %s134, %s135
    %p149 = scmp.eq.s32.totalorder %s17, 1
    %p150 = por %p148, %p149
    %p152 = scmp.ne.s32.totalorder %s135, %s151
    %p153 = scmp.eq.s32.totalorder %s17, 0
    %p154 = por %p152, %p153
    %p155 = scmp.le.s32.totalorder 1, %s11
    %p156 = scmp.lt.s32.totalorder %s11, 3
    %p157 = pnand %p155, %p156
    %p158 = pneg %p157
    // Predicated region
    $region9: #{_lambda_.5} parent=5 // pred_check
      _
    $region10: #{_lambda_.5} parent=5 // pred_check_branch
      %160 = sbr.rel (%p157) target = $region12
    $region11: #{_lambda_.5} parent=5 // pred_region
      %s161 = ssub.s32 %s11, 1
      // Predicated region
      $region13: #{_lambda_.5} parent=11 // pred_check
        %p162 = pneg %p58
      $region14: #{_lambda_.5} parent=11 // pred_check_branch
        %164 = sbr.rel (%p162) target = $region16
      $region15: #{_lambda_.5} parent=11 // pred_region
        _
      $region16: #{_lambda_.5} parent=11 // pred_fallthru
        _
      // Predicated region
      $region17: #{_lambda_.5} parent=11 // pred_check
        %p165 = pneg %p79
      $region18: #{_lambda_.5} parent=11 // pred_check_branch
        %167 = sbr.rel (%p165) target = $region20
      $region19: #{_lambda_.5} parent=11 // pred_region
        _
      $region20: #{_lambda_.5} parent=11 // pred_fallthru
        _
      // Predicated region
      $region21: #{_lambda_.5} parent=11 // pred_check
        %p168 = pneg %p100
      $region22: #{_lambda_.5} parent=11 // pred_check_branch
        %170 = sbr.rel (%p168) target = $region24
      $region23: #{_lambda_.5} parent=11 // pred_region
        _
      $region24: #{_lambda_.5} parent=11 // pred_fallthru
        _
      // Predicated region
      $region25: #{_lambda_.5} parent=11 // pred_check
        %p171 = pneg %p121
      $region26: #{_lambda_.5} parent=11 // pred_check_branch
        %173 = sbr.rel (%p171) target = $region28
      $region27: #{_lambda_.5} parent=11 // pred_region
        _
      $region28: #{_lambda_.5} parent=11 // pred_fallthru
        _
    $region12: #{_lambda_.5} parent=5 // pred_fallthru
      _
    %p174 = scmp.lt.s32.totalorder %s11, 2
    // Predicated region
    $region29: #{_lambda_.5} parent=5 // pred_check
      %p175 = pneg %p174
    $region30: #{_lambda_.5} parent=5 // pred_check_branch
      %177 = sbr.rel (%p175) target = $region32
    $region31: #{_lambda_.5} parent=5 // pred_region
      // Predicated region
      $region33: #{_lambda_.5} parent=31 // pred_check
        %p178 = pneg %p31
      $region34: #{_lambda_.5} parent=31 // pred_check_branch
        %180 = sbr.rel (%p178) target = $region36
      $region35: #{_lambda_.5} parent=31 // pred_region
        %s181 = smul.u32 22, %s11
        %p182 = scmp.lt.s32.totalorder %s181, 43
        %s183 = scalar_select %p182, %s181, 43
        %s184 = smul.addr %s183, 3
        %s185 = smul.addr %s184, 4
        %s186 = scalar_lea.vmem %s0, %s185
        %s187 = smul.u32 22, %s11
      $region36: #{_lambda_.5} parent=31 // pred_fallthru
        _
    $region32: #{_lambda_.5} parent=5 // pred_fallthru
      _
    %p188 = scmp.le.s32.totalorder 1, %s11
    %p189 = scmp.lt.s32.totalorder %s11, 3
    %p190 = pnand %p188, %p189
    %p191 = pneg %p190
    // Predicated region
    $region37: #{_lambda_.5} parent=5 // pred_check
      _
    $region38: #{_lambda_.5} parent=5 // pred_check_branch
      %193 = sbr.rel (%p190) target = $region40
    $region39: #{_lambda_.5} parent=5 // pred_region
      %s194 = ssub.s32 %s11, 1
      %s195 = smul.u32 22, %s16
      %p196 = scmp.lt.s32.totalorder %s195, 43
      %s197 = scalar_select %p196, %s195, 43
      %s198 = smul.addr %s197, 3
      %s199 = smul.addr %s198, 4
      %s200 = scalar_lea.vmem %s0, %s199
      %p201 = pneg %p37
      %p202 = pneg %p34
      %p203 = pneg %p58
      %p204 = pneg %p55
      %p205 = pneg %p79
      %p206 = pneg %p76
      %p207 = pneg %p100
      %p208 = pneg %p97
      %p209 = pneg %p121
      %p210 = pneg %p118
      %p211 = pneg %p147
      %p212 = pneg %p144
      %s213 = smul.u32 16, %s16
      %p214 = scmp.lt.s32.totalorder %s213, 31
      %s215 = scalar_select %p214, %s213, 31
      %s216 = smul.addr %s215, 2
      %s217 = smul.addr %s216, 4
      %s218 = scalar_lea.vmem %s5, %s217
      %s219 = smul.u32 22, %s16
      %p220 = scmp.lt.s32.totalorder %s219, 43
      %s221 = scalar_select %p220, %s219, 43
      %s222 = smul.addr %s221, 3
      %s223 = smul.addr %s222, 4
      %s224 = scalar_lea.vmem %s0, %s223
      %s225 = smul.u32 22, %s16
      %s226 = smul.u32 16, %s16
      %p227 = scmp.lt.s32.totalorder %s226, 31
      %s228 = scalar_select %p227, %s226, 31
      %s229 = smul.addr %s228, 2
      %s230 = smul.addr %s229, 4
      %s231 = scalar_lea.vmem %s5, %s230
      %s232 = smul.u32 16, %s16
      loop: start=0, step=1, limit=16
      $region41: #{_lambda_.5} parent=39 // loop_pre_header
        _
      $region42: #{_lambda_.5} parent=39 // loop_header
        %s235 = sphi 0, %s239
        %p236 = scmp.ge.s32.totalorder %s235, 16
      $region43: #{_lambda_.5} parent=39 // loop_header_branch
        %238 = sbr.rel (%p236) target = $region47
      $region44: #{_lambda_.5} parent=39 // loop_body
        %s240 = smul.u32 %s235, 3
        %s241 = smul.addr %s240, 4
        %s242 = scalar_lea.vmem %s224, %s241
        %v243 = vld [vmem:[%s242] sm:$0xf]
        %v244 = vld [vmem:[%s242 + $0x4] sm:$0xf]
        %v245 = vld [vmem:[%s242 + $0x8] sm:$0x7]
        %v246 = vunpack.c.l.bf16 %v243
        %v247 = vunpack.c.l.bf16 %v244
        %v248 = vunpack.c.l.bf16 %v245
        %v249 = vld [vmem:[%s2] sm:$0x1]
        %v251 = vlaneseq
        %v252 = vshrl.u32 %v251, 7
        %v253 = vsub.s32 0, %v252
        %v254 = vrot.slane %v249, %v253
        %v256 = vmul.f32 %v246, %v254
        %v257 = vmul.f32 %v247, %v254
        %v258 = vmul.f32 %v248, %v254
        %v259 = vld [vmem:[%s3] sm:$0x1]
        %v261 = vlaneseq
        %v262 = vshrl.u32 %v261, 7
        %v263 = vsub.s32 0, %v262
        %v264 = vrot.slane %v259, %v263
        %v266 = vadd.f32 %v256, %v264
        %v267 = vadd.f32 %v257, %v264
        %v268 = vadd.f32 %v258, %v264
        %v269 = vmax.f32 %v266, 0.0
        %v270 = vmax.f32 %v267, 0.0
        %v271 = vmax.f32 %v268, 0.0
        %v272 = vpack.c.bf16 %v270, %v269
        %v273 = vpack.c.bf16 %v271, %v271
        %v274 = vld [vmem:[%s1] sm:$0xf]
        %s275 = scalar_lea.vmem %s1, 4
        %v276 = vld [vmem:[%s275] sm:$0xf]
        %vm277 = vsmask.f32 7424
        %v279 = vshrl.u32 %v272, 16
        %v281 = vshll.u32 %v272, 16
        %v283 = vrot.slane %v281, 1
        %v284 = vor.u32 %v279, %v283
        %v286 = vshll.u32 %v273, 16
        %v288 = vrot.slane %v286, 1
        %v289 = vsel %vm277, %v284, %v288
        %vm290 = vcmask 64512
        %v292 = vsel %vm290, %v289, 0
        %vm294 = vcmask 1043456
        %v296 = vsel %vm294, %v276, 0
        %298 = vmatprep.subr.bf16.mxu0 0
        %299 = vmatpush1.bf16.msra.mxu0 %v296
        %300 = vmatprep.subr.bf16.mxu0 0
        %301 = vmatpush1.bf16.msra.mxu0 0
        %302 = vmatprep.subr.bf16.mxu0 0
        %303 = vmatpush1.bf16.msra.mxu0 0
        %304 = vmatprep.subr.bf16.mxu0 0
        %305 = vmatpush1.bf16.msra.mxu0 0
        %306 = vmatprep.subr.bf16.mxu0 0
        %307 = vmatpush1.bf16.msra.mxu0 0
        %308 = vmatprep.subr.bf16.mxu0 0
        %309 = vmatpush1.bf16.msra.mxu0 0
        %310 = vmatprep.subr.bf16.mxu0 0
        %311 = vmatpush1.bf16.msra.mxu0 0
        %312 = vmatprep.subr.bf16.mxu0 0
        %313 = vmatpush1.bf16.msra.mxu0 0
        %314 = vmatprep.subr.bf16.mxu0 0
        %315 = vmatpush1.bf16.msra.mxu0 0
        %316 = vmatprep.subr.bf16.mxu0 0
        %317 = vmatpush1.bf16.msra.mxu0 0
        %318 = vmatprep.subr.bf16.mxu0 0
        %319 = vmatpush1.bf16.msra.mxu0 0
        %320 = vmatprep.subr.bf16.mxu0 0
        %321 = vmatpush1.bf16.msra.mxu0 0
        %322 = vmatprep.subr.bf16.mxu0 0
        %323 = vmatpush1.bf16.msra.mxu0 0
        %324 = vmatprep.subr.bf16.mxu0 0
        %325 = vmatpush1.bf16.msra.mxu0 0
        %326 = vmatprep.subr.bf16.mxu0 0
        %327 = vmatpush1.bf16.msra.mxu0 0
        %328 = vmatprep.subr.bf16.mxu0 0
        %329 = vmatpush1.bf16.msra.mxu0 0
        %330 = vmatprep.mubr.bf16.mxu0 0
        %331 = vmatmul.mubr.bf16.gmra.mrb[0].mxu0 %v292
        %v332 = vpop.f32.mrb[0].mxu0
        %v333 = vadd.f32 0.0, %v332
        %v334 = vpop.f32.mrb[0].mxu0
        %v335 = vpop.f32.mrb[0].mxu0
        %v336 = vadd.f32 0.0, %v335
        %v337 = vpop.f32.mrb[0].mxu0
        %338 = vdwg.mxu0
        %v339 = vsel %vm290, %v272, 0
        %v342 = vsel %vm294, %v274, 0
        %344 = vmatprep.subr.bf16.mxu0 0
        %345 = vmatpush1.bf16.msra.mxu0 %v342
        %346 = vmatprep.subr.bf16.mxu0 0
        %347 = vmatpush1.bf16.msra.mxu0 0
        %348 = vmatprep.subr.bf16.mxu0 0
        %349 = vmatpush1.bf16.msra.mxu0 0
        %350 = vmatprep.subr.bf16.mxu0 0
        %351 = vmatpush1.bf16.msra.mxu0 0
        %352 = vmatprep.subr.bf16.mxu0 0
        %353 = vmatpush1.bf16.msra.mxu0 0
        %354 = vmatprep.subr.bf16.mxu0 0
        %355 = vmatpush1.bf16.msra.mxu0 0
        %356 = vmatprep.subr.bf16.mxu0 0
        %357 = vmatpush1.bf16.msra.mxu0 0
        %358 = vmatprep.subr.bf16.mxu0 0
        %359 = vmatpush1.bf16.msra.mxu0 0
        %360 = vmatprep.subr.bf16.mxu0 0
        %361 = vmatpush1.bf16.msra.mxu0 0
        %362 = vmatprep.subr.bf16.mxu0 0
        %363 = vmatpush1.bf16.msra.mxu0 0
        %364 = vmatprep.subr.bf16.mxu0 0
        %365 = vmatpush1.bf16.msra.mxu0 0
        %366 = vmatprep.subr.bf16.mxu0 0
        %367 = vmatpush1.bf16.msra.mxu0 0
        %368 = vmatprep.subr.bf16.mxu0 0
        %369 = vmatpush1.bf16.msra.mxu0 0
        %370 = vmatprep.subr.bf16.mxu0 0
        %371 = vmatpush1.bf16.msra.mxu0 0
        %372 = vmatprep.subr.bf16.mxu0 0
        %373 = vmatpush1.bf16.msra.mxu0 0
        %374 = vmatprep.subr.bf16.mxu0 0
        %375 = vmatpush1.bf16.msra.mxu0 0
        %376 = vmatprep.mubr.bf16.mxu0 0
        %377 = vmatmul.mubr.bf16.gmra.mrb[0].mxu0 %v339
        %v378 = vpop.f32.mrb[0].mxu0
        %v379 = vadd.f32 %v333, %v378
        %v380 = vpop.f32.mrb[0].mxu0
        %v381 = vpop.f32.mrb[0].mxu0
        %v382 = vadd.f32 %v336, %v381
        %v383 = vpop.f32.mrb[0].mxu0
        %384 = vdwg.mxu0
        %s385 = scalar_lea.vmem %s1, 8
        %v386 = vld [vmem:[%s385] sm:$0xf]
        %vm389 = vcmask 1046528
        %v390 = vrot.slane %v272, 1
        %v391 = vrot.slane %v273, 1
        %v392 = vsel %vm389, %v390, %v391
        %v394 = vsel %vm290, %v392, 0
        %v397 = vsel %vm294, %v386, 0
        %399 = vmatprep.subr.bf16.mxu0 0
        %400 = vmatpush1.bf16.msra.mxu0 %v397
        %401 = vmatprep.subr.bf16.mxu0 0
        %402 = vmatpush1.bf16.msra.mxu0 0
        %403 = vmatprep.subr.bf16.mxu0 0
        %404 = vmatpush1.bf16.msra.mxu0 0
        %405 = vmatprep.subr.bf16.mxu0 0
        %406 = vmatpush1.bf16.msra.mxu0 0
        %407 = vmatprep.subr.bf16.mxu0 0
        %408 = vmatpush1.bf16.msra.mxu0 0
        %409 = vmatprep.subr.bf16.mxu0 0
        %410 = vmatpush1.bf16.msra.mxu0 0
        %411 = vmatprep.subr.bf16.mxu0 0
        %412 = vmatpush1.bf16.msra.mxu0 0
        %413 = vmatprep.subr.bf16.mxu0 0
        %414 = vmatpush1.bf16.msra.mxu0 0
        %415 = vmatprep.subr.bf16.mxu0 0
        %416 = vmatpush1.bf16.msra.mxu0 0
        %417 = vmatprep.subr.bf16.mxu0 0
        %418 = vmatpush1.bf16.msra.mxu0 0
        %419 = vmatprep.subr.bf16.mxu0 0
        %420 = vmatpush1.bf16.msra.mxu0 0
        %421 = vmatprep.subr.bf16.mxu0 0
        %422 = vmatpush1.bf16.msra.mxu0 0
        %423 = vmatprep.subr.bf16.mxu0 0
        %424 = vmatpush1.bf16.msra.mxu0 0
        %425 = vmatprep.subr.bf16.mxu0 0
        %426 = vmatpush1.bf16.msra.mxu0 0
        %427 = vmatprep.subr.bf16.mxu0 0
        %428 = vmatpush1.bf16.msra.mxu0 0
        %429 = vmatprep.subr.bf16.mxu0 0
        %430 = vmatpush1.bf16.msra.mxu0 0
        %431 = vmatprep.mubr.bf16.mxu0 0
        %432 = vmatmul.mubr.bf16.gmra.mrb[0].mxu0 %v394
        %v433 = vpop.f32.mrb[0].mxu0
        %v434 = vadd.f32 0.0, %v433
        %v435 = vpop.f32.mrb[0].mxu0
        %v436 = vpop.f32.mrb[0].mxu0
        %v437 = vadd.f32 0.0, %v436
        %v438 = vpop.f32.mrb[0].mxu0
        %439 = vdwg.mxu0
        %v440 = vadd.f32 %v379, %v434
        %v441 = vadd.f32 %v382, %v437
        %s442 = scalar_lea.vmem %s1, 12
        %v443 = vld [vmem:[%s442] sm:$0xf]
        %vm444 = vsmask.f32 6400
        %v445 = vrot.slane %v279, 1
        %v446 = vrot.slane %v281, 2
        %v447 = vor.u32 %v445, %v446
        %v448 = vshrl.u32 %v273, 16
        %v450 = vrot.slane %v448, 1
        %v451 = vrot.slane %v286, 2
        %v452 = vor.u32 %v450, %v451
        %v453 = vsel %vm444, %v447, %v452
        %v455 = vsel %vm290, %v453, 0
        %v458 = vsel %vm294, %v443, 0
        %460 = vmatprep.subr.bf16.mxu0 0
        %461 = vmatpush1.bf16.msra.mxu0 %v458
        %462 = vmatprep.subr.bf16.mxu0 0
        %463 = vmatpush1.bf16.msra.mxu0 0
        %464 = vmatprep.subr.bf16.mxu0 0
        %465 = vmatpush1.bf16.msra.mxu0 0
        %466 = vmatprep.subr.bf16.mxu0 0
        %467 = vmatpush1.bf16.msra.mxu0 0
        %468 = vmatprep.subr.bf16.mxu0 0
        %469 = vmatpush1.bf16.msra.mxu0 0
        %470 = vmatprep.subr.bf16.mxu0 0
        %471 = vmatpush1.bf16.msra.mxu0 0
        %472 = vmatprep.subr.bf16.mxu0 0
        %473 = vmatpush1.bf16.msra.mxu0 0
        %474 = vmatprep.subr.bf16.mxu0 0
        %475 = vmatpush1.bf16.msra.mxu0 0
        %476 = vmatprep.subr.bf16.mxu0 0
        %477 = vmatpush1.bf16.msra.mxu0 0
        %478 = vmatprep.subr.bf16.mxu0 0
        %479 = vmatpush1.bf16.msra.mxu0 0
        %480 = vmatprep.subr.bf16.mxu0 0
        %481 = vmatpush1.bf16.msra.mxu0 0
        %482 = vmatprep.subr.bf16.mxu0 0
        %483 = vmatpush1.bf16.msra.mxu0 0
        %484 = vmatprep.subr.bf16.mxu0 0
        %485 = vmatpush1.bf16.msra.mxu0 0
        %486 = vmatprep.subr.bf16.mxu0 0
        %487 = vmatpush1.bf16.msra.mxu0 0
        %488 = vmatprep.subr.bf16.mxu0 0
        %489 = vmatpush1.bf16.msra.mxu0 0
        %490 = vmatprep.subr.bf16.mxu0 0
        %491 = vmatpush1.bf16.msra.mxu0 0
        %492 = vmatprep.mubr.bf16.mxu0 0
        %493 = vmatmul.mubr.bf16.gmra.mrb[0].mxu0 %v455
        %v494 = vpop.f32.mrb[0].mxu0
        %v495 = vadd.f32 0.0, %v494
        %v496 = vpop.f32.mrb[0].mxu0
        %v497 = vpop.f32.mrb[0].mxu0
        %v498 = vadd.f32 0.0, %v497
        %v499 = vpop.f32.mrb[0].mxu0
        %500 = vdwg.mxu0
        %v501 = vadd.f32 %v440, %v495
        %v502 = vadd.f32 %v441, %v498
        %s503 = scalar_lea.vmem %s1, 16
        %v504 = vld [vmem:[%s503] sm:$0xf]
        %vm505 = vcmask 1045504
        %v506 = vrot.slane %v272, 2
        %v507 = vrot.slane %v273, 2
        %v508 = vsel %vm505, %v506, %v507
        %v510 = vsel %vm290, %v508, 0
        %v513 = vsel %vm294, %v504, 0
        %515 = vmatprep.subr.bf16.mxu0 0
        %516 = vmatpush1.bf16.msra.mxu0 %v513
        %517 = vmatprep.subr.bf16.mxu0 0
        %518 = vmatpush1.bf16.msra.mxu0 0
        %519 = vmatprep.subr.bf16.mxu0 0
        %520 = vmatpush1.bf16.msra.mxu0 0
        %521 = vmatprep.subr.bf16.mxu0 0
        %522 = vmatpush1.bf16.msra.mxu0 0
        %523 = vmatprep.subr.bf16.mxu0 0
        %524 = vmatpush1.bf16.msra.mxu0 0
        %525 = vmatprep.subr.bf16.mxu0 0
        %526 = vmatpush1.bf16.msra.mxu0 0
        %527 = vmatprep.subr.bf16.mxu0 0
        %528 = vmatpush1.bf16.msra.mxu0 0
        %529 = vmatprep.subr.bf16.mxu0 0
        %530 = vmatpush1.bf16.msra.mxu0 0
        %531 = vmatprep.subr.bf16.mxu0 0
        %532 = vmatpush1.bf16.msra.mxu0 0
        %533 = vmatprep.subr.bf16.mxu0 0
        %534 = vmatpush1.bf16.msra.mxu0 0
        %535 = vmatprep.subr.bf16.mxu0 0
        %536 = vmatpush1.bf16.msra.mxu0 0
        %537 = vmatprep.subr.bf16.mxu0 0
        %538 = vmatpush1.bf16.msra.mxu0 0
        %539 = vmatprep.subr.bf16.mxu0 0
        %540 = vmatpush1.bf16.msra.mxu0 0
        %541 = vmatprep.subr.bf16.mxu0 0
        %542 = vmatpush1.bf16.msra.mxu0 0
        %543 = vmatprep.subr.bf16.mxu0 0
        %544 = vmatpush1.bf16.msra.mxu0 0
        %545 = vmatprep.subr.bf16.mxu0 0
        %546 = vmatpush1.bf16.msra.mxu0 0
        %547 = vmatprep.mubr.bf16.mxu0 0
        %548 = vmatmul.mubr.bf16.gmra.mrb[0].mxu0 %v510
        %v549 = vpop.f32.mrb[0].mxu0
        %v550 = vadd.f32 0.0, %v549
        %v551 = vpop.f32.mrb[0].mxu0
        %v552 = vpop.f32.mrb[0].mxu0
        %v553 = vadd.f32 0.0, %v552
        %v554 = vpop.f32.mrb[0].mxu0
        %555 = vdwg.mxu0
        %v556 = vadd.f32 %v501, %v550
        %v557 = vadd.f32 %v502, %v553
        %s558 = scalar_lea.vmem %s1, 20
        %v559 = vld [vmem:[%s558] sm:$0xf]
        %vm560 = vsmask.f32 5376
        %v561 = vrot.slane %v279, 2
        %v562 = vrot.slane %v281, 3
        %v563 = vor.u32 %v561, %v562
        %v564 = vrot.slane %v448, 2
        %v565 = vrot.slane %v286, 3
        %v566 = vor.u32 %v564, %v565
        %v567 = vsel %vm560, %v563, %v566
        %v569 = vsel %vm290, %v567, 0
        %v572 = vsel %vm294, %v559, 0
        %574 = vmatprep.subr.bf16.mxu0 0
        %575 = vmatpush1.bf16.msra.mxu0 %v572
        %576 = vmatprep.subr.bf16.mxu0 0
        %577 = vmatpush1.bf16.msra.mxu0 0
        %578 = vmatprep.subr.bf16.mxu0 0
        %579 = vmatpush1.bf16.msra.mxu0 0
        %580 = vmatprep.subr.bf16.mxu0 0
        %581 = vmatpush1.bf16.msra.mxu0 0
        %582 = vmatprep.subr.bf16.mxu0 0
        %583 = vmatpush1.bf16.msra.mxu0 0
        %584 = vmatprep.subr.bf16.mxu0 0
        %585 = vmatpush1.bf16.msra.mxu0 0
        %586 = vmatprep.subr.bf16.mxu0 0
        %587 = vmatpush1.bf16.msra.mxu0 0
        %588 = vmatprep.subr.bf16.mxu0 0
        %589 = vmatpush1.bf16.msra.mxu0 0
        %590 = vmatprep.subr.bf16.mxu0 0
        %591 = vmatpush1.bf16.msra.mxu0 0
        %592 = vmatprep.subr.bf16.mxu0 0
        %593 = vmatpush1.bf16.msra.mxu0 0
        %594 = vmatprep.subr.bf16.mxu0 0
        %595 = vmatpush1.bf16.msra.mxu0 0
        %596 = vmatprep.subr.bf16.mxu0 0
        %597 = vmatpush1.bf16.msra.mxu0 0
        %598 = vmatprep.subr.bf16.mxu0 0
        %599 = vmatpush1.bf16.msra.mxu0 0
        %600 = vmatprep.subr.bf16.mxu0 0
        %601 = vmatpush1.bf16.msra.mxu0 0
        %602 = vmatprep.subr.bf16.mxu0 0
        %603 = vmatpush1.bf16.msra.mxu0 0
        %604 = vmatprep.subr.bf16.mxu0 0
        %605 = vmatpush1.bf16.msra.mxu0 0
        %606 = vmatprep.mubr.bf16.mxu0 0
        %607 = vmatmul.mubr.bf16.gmra.mrb[0].mxu0 %v569
        %v608 = vpop.f32.mrb[0].mxu0
        %v609 = vadd.f32 0.0, %v608
        %v610 = vpop.f32.mrb[0].mxu0
        %v611 = vpop.f32.mrb[0].mxu0
        %v612 = vadd.f32 0.0, %v611
        %v613 = vpop.f32.mrb[0].mxu0
        %614 = vdwg.mxu0
        %v615 = vadd.f32 %v556, %v609
        %v616 = vadd.f32 %v557, %v612
        %s617 = scalar_lea.vmem %s1, 24
        %v618 = vld [vmem:[%s617] sm:$0xf]
        %vm619 = vcmask 1044480
        %v620 = vrot.slane %v272, 3
        %v621 = vrot.slane %v273, 3
        %v622 = vsel %vm619, %v620, %v621
        %v624 = vsel %vm290, %v622, 0
        %v627 = vsel %vm294, %v618, 0
        %629 = vmatprep.subr.bf16.mxu0 0
        %630 = vmatpush1.bf16.msra.mxu0 %v627
        %631 = vmatprep.subr.bf16.mxu0 0
        %632 = vmatpush1.bf16.msra.mxu0 0
        %633 = vmatprep.subr.bf16.mxu0 0
        %634 = vmatpush1.bf16.msra.mxu0 0
        %635 = vmatprep.subr.bf16.mxu0 0
        %636 = vmatpush1.bf16.msra.mxu0 0
        %637 = vmatprep.subr.bf16.mxu0 0
        %638 = vmatpush1.bf16.msra.mxu0 0
        %639 = vmatprep.subr.bf16.mxu0 0
        %640 = vmatpush1.bf16.msra.mxu0 0
        %641 = vmatprep.subr.bf16.mxu0 0
        %642 = vmatpush1.bf16.msra.mxu0 0
        %643 = vmatprep.subr.bf16.mxu0 0
        %644 = vmatpush1.bf16.msra.mxu0 0
        %645 = vmatprep.subr.bf16.mxu0 0
        %646 = vmatpush1.bf16.msra.mxu0 0
        %647 = vmatprep.subr.bf16.mxu0 0
        %648 = vmatpush1.bf16.msra.mxu0 0
        %649 = vmatprep.subr.bf16.mxu0 0
        %650 = vmatpush1.bf16.msra.mxu0 0
        %651 = vmatprep.subr.bf16.mxu0 0
        %652 = vmatpush1.bf16.msra.mxu0 0
        %653 = vmatprep.subr.bf16.mxu0 0
        %654 = vmatpush1.bf16.msra.mxu0 0
        %655 = vmatprep.subr.bf16.mxu0 0
        %656 = vmatpush1.bf16.msra.mxu0 0
        %657 = vmatprep.subr.bf16.mxu0 0
        %658 = vmatpush1.bf16.msra.mxu0 0
        %659 = vmatprep.subr.bf16.mxu0 0
        %660 = vmatpush1.bf16.msra.mxu0 0
        %661 = vmatprep.mubr.bf16.mxu0 0
        %662 = vmatmul.mubr.bf16.gmra.mrb[0].mxu0 %v624
        %v663 = vpop.f32.mrb[0].mxu0
        %v664 = vadd.f32 0.0, %v663
        %v665 = vpop.f32.mrb[0].mxu0
        %v666 = vpop.f32.mrb[0].mxu0
        %v667 = vadd.f32 0.0, %v666
        %v668 = vpop.f32.mrb[0].mxu0
        %669 = vdwg.mxu0
        %v670 = vadd.f32 %v615, %v664
        %v671 = vadd.f32 %v616, %v667
        %s672 = sadd.s32 %s235, 1
        %s673 = smul.u32 %s672, 3
        %s674 = smul.addr %s673, 4
        %s675 = scalar_lea.vmem %s224, %s674
        %v676 = vld [vmem:[%s675] sm:$0xf]
        %v677 = vld [vmem:[%s675 + $0x4] sm:$0xf]
        %v678 = vld [vmem:[%s675 + $0x8] sm:$0x7]
        %v679 = vunpack.c.l.bf16 %v676
        %v680 = vunpack.c.l.bf16 %v677
        %v681 = vunpack.c.l.bf16 %v678
        %v682 = vmul.f32 %v679, %v254
        %v683 = vmul.f32 %v680, %v254
        %v684 = vmul.f32 %v681, %v254
        %v685 = vadd.f32 %v682, %v264
        %v686 = vadd.f32 %v683, %v264
        %v687 = vadd.f32 %v684, %v264
        %v688 = vmax.f32 %v685, 0.0
        %v689 = vmax.f32 %v686, 0.0
        %v690 = vmax.f32 %v687, 0.0
        %v691 = vpack.c.bf16 %v689, %v688
        %v692 = vpack.c.bf16 %v690, %v690
        %s693 = scalar_lea.vmem %s1, 28
        %v694 = vld [vmem:[%s693] sm:$0xf]
        %v696 = vsel %vm290, %v691, 0
        %v699 = vsel %vm294, %v694, 0
        %701 = vmatprep.subr.bf16.mxu0 0
        %702 = vmatpush1.bf16.msra.mxu0 %v699
        %703 = vmatprep.subr.bf16.mxu0 0
        %704 = vmatpush1.bf16.msra.mxu0 0
        %705 = vmatprep.subr.bf16.mxu0 0
        %706 = vmatpush1.bf16.msra.mxu0 0
        %707 = vmatprep.subr.bf16.mxu0 0
        %708 = vmatpush1.bf16.msra.mxu0 0
        %709 = vmatprep.subr.bf16.mxu0 0
        %710 = vmatpush1.bf16.msra.mxu0 0
        %711 = vmatprep.subr.bf16.mxu0 0
        %712 = vmatpush1.bf16.msra.mxu0 0
        %713 = vmatprep.subr.bf16.mxu0 0
        %714 = vmatpush1.bf16.msra.mxu0 0
        %715 = vmatprep.subr.bf16.mxu0 0
        %716 = vmatpush1.bf16.msra.mxu0 0
        %717 = vmatprep.subr.bf16.mxu0 0
        %718 = vmatpush1.bf16.msra.mxu0 0
        %719 = vmatprep.subr.bf16.mxu0 0
        %720 = vmatpush1.bf16.msra.mxu0 0
        %721 = vmatprep.subr.bf16.mxu0 0
        %722 = vmatpush1.bf16.msra.mxu0 0
        %723 = vmatprep.subr.bf16.mxu0 0
        %724 = vmatpush1.bf16.msra.mxu0 0
        %725 = vmatprep.subr.bf16.mxu0 0
        %726 = vmatpush1.bf16.msra.mxu0 0
        %727 = vmatprep.subr.bf16.mxu0 0
        %728 = vmatpush1.bf16.msra.mxu0 0
        %729 = vmatprep.subr.bf16.mxu0 0
        %730 = vmatpush1.bf16.msra.mxu0 0
        %731 = vmatprep.subr.bf16.mxu0 0
        %732 = vmatpush1.bf16.msra.mxu0 0
        %733 = vmatprep.mubr.bf16.mxu0 0
        %734 = vmatmul.mubr.bf16.gmra.mrb[0].mxu0 %v696
        %v735 = vpop.f32.mrb[0].mxu0
        %v736 = vadd.f32 0.0, %v735
        %v737 = vpop.f32.mrb[0].mxu0
        %v738 = vpop.f32.mrb[0].mxu0
        %v739 = vadd.f32 0.0, %v738
        %v740 = vpop.f32.mrb[0].mxu0
        %741 = vdwg.mxu0
        %v742 = vadd.f32 %v670, %v736
        %v743 = vadd.f32 %v671, %v739
        %s744 = scalar_lea.vmem %s1, 32
        %v745 = vld [vmem:[%s744] sm:$0xf]
        %v746 = vshrl.u32 %v691, 16
        %v748 = vshll.u32 %v691, 16
        %v750 = vrot.slane %v748, 1
        %v751 = vor.u32 %v746, %v750
        %v753 = vshll.u32 %v692, 16
        %v755 = vrot.slane %v753, 1
        %v756 = vsel %vm277, %v751, %v755
        %v758 = vsel %vm290, %v756, 0
        %v761 = vsel %vm294, %v745, 0
        %763 = vmatprep.subr.bf16.mxu0 0
        %764 = vmatpush1.bf16.msra.mxu0 %v761
        %765 = vmatprep.subr.bf16.mxu0 0
        %766 = vmatpush1.bf16.msra.mxu0 0
        %767 = vmatprep.subr.bf16.mxu0 0
        %768 = vmatpush1.bf16.msra.mxu0 0
        %769 = vmatprep.subr.bf16.mxu0 0
        %770 = vmatpush1.bf16.msra.mxu0 0
        %771 = vmatprep.subr.bf16.mxu0 0
        %772 = vmatpush1.bf16.msra.mxu0 0
        %773 = vmatprep.subr.bf16.mxu0 0
        %774 = vmatpush1.bf16.msra.mxu0 0
        %775 = vmatprep.subr.bf16.mxu0 0
        %776 = vmatpush1.bf16.msra.mxu0 0
        %777 = vmatprep.subr.bf16.mxu0 0
        %778 = vmatpush1.bf16.msra.mxu0 0
        %779 = vmatprep.subr.bf16.mxu0 0
        %780 = vmatpush1.bf16.msra.mxu0 0
        %781 = vmatprep.subr.bf16.mxu0 0
        %782 = vmatpush1.bf16.msra.mxu0 0
        %783 = vmatprep.subr.bf16.mxu0 0
        %784 = vmatpush1.bf16.msra.mxu0 0
        %785 = vmatprep.subr.bf16.mxu0 0
        %786 = vmatpush1.bf16.msra.mxu0 0
        %787 = vmatprep.subr.bf16.mxu0 0
        %788 = vmatpush1.bf16.msra.mxu0 0
        %789 = vmatprep.subr.bf16.mxu0 0
        %790 = vmatpush1.bf16.msra.mxu0 0
        %791 = vmatprep.subr.bf16.mxu0 0
        %792 = vmatpush1.bf16.msra.mxu0 0
        %793 = vmatprep.subr.bf16.mxu0 0
        %794 = vmatpush1.bf16.msra.mxu0 0
        %795 = vmatprep.mubr.bf16.mxu0 0
        %796 = vmatmul.mubr.bf16.gmra.mrb[0].mxu0 %v758
        %v797 = vpop.f32.mrb[0].mxu0
        %v798 = vadd.f32 0.0, %v797
        %v799 = vpop.f32.mrb[0].mxu0
        %v800 = vpop.f32.mrb[0].mxu0
        %v801 = vadd.f32 0.0, %v800
        %v802 = vpop.f32.mrb[0].mxu0
        %803 = vdwg.mxu0
        %v804 = vadd.f32 %v742, %v798
        %v805 = vadd.f32 %v743, %v801
        %s806 = scalar_lea.vmem %s1, 36
        %v807 = vld [vmem:[%s806] sm:$0xf]
        %v810 = vrot.slane %v691, 1
        %v811 = vrot.slane %v692, 1
        %v812 = vsel %vm389, %v810, %v811
        %v814 = vsel %vm290, %v812, 0
        %v817 = vsel %vm294, %v807, 0
        %819 = vmatprep.subr.bf16.mxu0 0
        %820 = vmatpush1.bf16.msra.mxu0 %v817
        %821 = vmatprep.subr.bf16.mxu0 0
        %822 = vmatpush1.bf16.msra.mxu0 0
        %823 = vmatprep.subr.bf16.mxu0 0
        %824 = vmatpush1.bf16.msra.mxu0 0
        %825 = vmatprep.subr.bf16.mxu0 0
        %826 = vmatpush1.bf16.msra.mxu0 0
        %827 = vmatprep.subr.bf16.mxu0 0
        %828 = vmatpush1.bf16.msra.mxu0 0
        %829 = vmatprep.subr.bf16.mxu0 0
        %830 = vmatpush1.bf16.msra.mxu0 0
        %831 = vmatprep.subr.bf16.mxu0 0
        %832 = vmatpush1.bf16.msra.mxu0 0
        %833 = vmatprep.subr.bf16.mxu0 0
        %834 = vmatpush1.bf16.msra.mxu0 0
        %835 = vmatprep.subr.bf16.mxu0 0
        %836 = vmatpush1.bf16.msra.mxu0 0
        %837 = vmatprep.subr.bf16.mxu0 0
        %838 = vmatpush1.bf16.msra.mxu0 0
        %839 = vmatprep.subr.bf16.mxu0 0
        %840 = vmatpush1.bf16.msra.mxu0 0
        %841 = vmatprep.subr.bf16.mxu0 0
        %842 = vmatpush1.bf16.msra.mxu0 0
        %843 = vmatprep.subr.bf16.mxu0 0
        %844 = vmatpush1.bf16.msra.mxu0 0
        %845 = vmatprep.subr.bf16.mxu0 0
        %846 = vmatpush1.bf16.msra.mxu0 0
        %847 = vmatprep.subr.bf16.mxu0 0
        %848 = vmatpush1.bf16.msra.mxu0 0
        %849 = vmatprep.subr.bf16.mxu0 0
        %850 = vmatpush1.bf16.msra.mxu0 0
        %851 = vmatprep.mubr.bf16.mxu0 0
        %852 = vmatmul.mubr.bf16.gmra.mrb[0].mxu0 %v814
        %v853 = vpop.f32.mrb[0].mxu0
        %v854 = vadd.f32 0.0, %v853
        %v855 = vpop.f32.mrb[0].mxu0
        %v856 = vpop.f32.mrb[0].mxu0
        %v857 = vadd.f32 0.0, %v856
        %v858 = vpop.f32.mrb[0].mxu0
        %859 = vdwg.mxu0
        %v860 = vadd.f32 %v804, %v854
        %v861 = vadd.f32 %v805, %v857
        %s862 = scalar_lea.vmem %s1, 40
        %v863 = vld [vmem:[%s862] sm:$0xf]
        %v864 = vrot.slane %v746, 1
        %v865 = vrot.slane %v748, 2
        %v866 = vor.u32 %v864, %v865
        %v867 = vshrl.u32 %v692, 16
        %v869 = vrot.slane %v867, 1
        %v870 = vrot.slane %v753, 2
        %v871 = vor.u32 %v869, %v870
        %v872 = vsel %vm444, %v866, %v871
        %v874 = vsel %vm290, %v872, 0
        %v877 = vsel %vm294, %v863, 0
        %879 = vmatprep.subr.bf16.mxu0 0
        %880 = vmatpush1.bf16.msra.mxu0 %v877
        %881 = vmatprep.subr.bf16.mxu0 0
        %882 = vmatpush1.bf16.msra.mxu0 0
        %883 = vmatprep.subr.bf16.mxu0 0
        %884 = vmatpush1.bf16.msra.mxu0 0
        %885 = vmatprep.subr.bf16.mxu0 0
        %886 = vmatpush1.bf16.msra.mxu0 0
        %887 = vmatprep.subr.bf16.mxu0 0
        %888 = vmatpush1.bf16.msra.mxu0 0
        %889 = vmatprep.subr.bf16.mxu0 0
        %890 = vmatpush1.bf16.msra.mxu0 0
        %891 = vmatprep.subr.bf16.mxu0 0
        %892 = vmatpush1.bf16.msra.mxu0 0
        %893 = vmatprep.subr.bf16.mxu0 0
        %894 = vmatpush1.bf16.msra.mxu0 0
        %895 = vmatprep.subr.bf16.mxu0 0
        %896 = vmatpush1.bf16.msra.mxu0 0
        %897 = vmatprep.subr.bf16.mxu0 0
        %898 = vmatpush1.bf16.msra.mxu0 0
        %899 = vmatprep.subr.bf16.mxu0 0
        %900 = vmatpush1.bf16.msra.mxu0 0
        %901 = vmatprep.subr.bf16.mxu0 0
        %902 = vmatpush1.bf16.msra.mxu0 0
        %903 = vmatprep.subr.bf16.mxu0 0
        %904 = vmatpush1.bf16.msra.mxu0 0
        %905 = vmatprep.subr.bf16.mxu0 0
        %906 = vmatpush1.bf16.msra.mxu0 0
        %907 = vmatprep.subr.bf16.mxu0 0
        %908 = vmatpush1.bf16.msra.mxu0 0
        %909 = vmatprep.subr.bf16.mxu0 0
        %910 = vmatpush1.bf16.msra.mxu0 0
        %911 = vmatprep.mubr.bf16.mxu0 0
        %912 = vmatmul.mubr.bf16.gmra.mrb[0].mxu0 %v874
        %v913 = vpop.f32.mrb[0].mxu0
        %v914 = vadd.f32 0.0, %v913
        %v915 = vpop.f32.mrb[0].mxu0
        %v916 = vpop.f32.mrb[0].mxu0
        %v917 = vadd.f32 0.0, %v916
        %v918 = vpop.f32.mrb[0].mxu0
        %919 = vdwg.mxu0
        %v920 = vadd.f32 %v860, %v914
        %v921 = vadd.f32 %v861, %v917
        %s922 = scalar_lea.vmem %s1, 44
        %v923 = vld [vmem:[%s922] sm:$0xf]
        %v924 = vrot.slane %v691, 2
        %v925 = vrot.slane %v692, 2
        %v926 = vsel %vm505, %v924, %v925
        %v928 = vsel %vm290, %v926, 0
        %v931 = vsel %vm294, %v923, 0
        %933 = vmatprep.subr.bf16.mxu0 0
        %934 = vmatpush1.bf16.msra.mxu0 %v931
        %935 = vmatprep.subr.bf16.mxu0 0
        %936 = vmatpush1.bf16.msra.mxu0 0
        %937 = vmatprep.subr.bf16.mxu0 0
        %938 = vmatpush1.bf16.msra.mxu0 0
        %939 = vmatprep.subr.bf16.mxu0 0
        %940 = vmatpush1.bf16.msra.mxu0 0
        %941 = vmatprep.subr.bf16.mxu0 0
        %942 = vmatpush1.bf16.msra.mxu0 0
        %943 = vmatprep.subr.bf16.mxu0 0
        %944 = vmatpush1.bf16.msra.mxu0 0
        %945 = vmatprep.subr.bf16.mxu0 0
        %946 = vmatpush1.bf16.msra.mxu0 0
        %947 = vmatprep.subr.bf16.mxu0 0
        %948 = vmatpush1.bf16.msra.mxu0 0
        %949 = vmatprep.subr.bf16.mxu0 0
        %950 = vmatpush1.bf16.msra.mxu0 0
        %951 = vmatprep.subr.bf16.mxu0 0
        %952 = vmatpush1.bf16.msra.mxu0 0
        %953 = vmatprep.subr.bf16.mxu0 0
        %954 = vmatpush1.bf16.msra.mxu0 0
        %955 = vmatprep.subr.bf16.mxu0 0
        %956 = vmatpush1.bf16.msra.mxu0 0
        %957 = vmatprep.subr.bf16.mxu0 0
        %958 = vmatpush1.bf16.msra.mxu0 0
        %959 = vmatprep.subr.bf16.mxu0 0
        %960 = vmatpush1.bf16.msra.mxu0 0
        %961 = vmatprep.subr.bf16.mxu0 0
        %962 = vmatpush1.bf16.msra.mxu0 0
        %963 = vmatprep.subr.bf16.mxu0 0
        %964 = vmatpush1.bf16.msra.mxu0 0
        %965 = vmatprep.mubr.bf16.mxu0 0
        %966 = vmatmul.mubr.bf16.gmra.mrb[0].mxu0 %v928
        %v967 = vpop.f32.mrb[0].mxu0
        %v968 = vadd.f32 0.0, %v967
        %v969 = vpop.f32.mrb[0].mxu0
        %v970 = vpop.f32.mrb[0].mxu0
        %v971 = vadd.f32 0.0, %v970
        %v972 = vpop.f32.mrb[0].mxu0
        %973 = vdwg.mxu0
        %v974 = vadd.f32 %v920, %v968
        %v975 = vadd.f32 %v921, %v971
        %s976 = scalar_lea.vmem %s1, 48
        %v977 = vld [vmem:[%s976] sm:$0xf]
        %v978 = vrot.slane %v746, 2
        %v979 = vrot.slane %v748, 3
        %v980 = vor.u32 %v978, %v979
        %v981 = vrot.slane %v867, 2
        %v982 = vrot.slane %v753, 3
        %v983 = vor.u32 %v981, %v982
        %v984 = vsel %vm560, %v980, %v983
        %v986 = vsel %vm290, %v984, 0
        %v989 = vsel %vm294, %v977, 0
        %991 = vmatprep.subr.bf16.mxu0 0
        %992 = vmatpush1.bf16.msra.mxu0 %v989
        %993 = vmatprep.subr.bf16.mxu0 0
        %994 = vmatpush1.bf16.msra.mxu0 0
        %995 = vmatprep.subr.bf16.mxu0 0
        %996 = vmatpush1.bf16.msra.mxu0 0
        %997 = vmatprep.subr.bf16.mxu0 0
        %998 = vmatpush1.bf16.msra.mxu0 0
        %999 = vmatprep.subr.bf16.mxu0 0
        %1000 = vmatpush1.bf16.msra.mxu0 0
        %1001 = vmatprep.subr.bf16.mxu0 0
        %1002 = vmatpush1.bf16.msra.mxu0 0
        %1003 = vmatprep.subr.bf16.mxu0 0
        %1004 = vmatpush1.bf16.msra.mxu0 0
        %1005 = vmatprep.subr.bf16.mxu0 0
        %1006 = vmatpush1.bf16.msra.mxu0 0
        %1007 = vmatprep.subr.bf16.mxu0 0
        %1008 = vmatpush1.bf16.msra.mxu0 0
        %1009 = vmatprep.subr.bf16.mxu0 0
        %1010 = vmatpush1.bf16.msra.mxu0 0
        %1011 = vmatprep.subr.bf16.mxu0 0
        %1012 = vmatpush1.bf16.msra.mxu0 0
        %1013 = vmatprep.subr.bf16.mxu0 0
        %1014 = vmatpush1.bf16.msra.mxu0 0
        %1015 = vmatprep.subr.bf16.mxu0 0
        %1016 = vmatpush1.bf16.msra.mxu0 0
        %1017 = vmatprep.subr.bf16.mxu0 0
        %1018 = vmatpush1.bf16.msra.mxu0 0
        %1019 = vmatprep.subr.bf16.mxu0 0
        %1020 = vmatpush1.bf16.msra.mxu0 0
        %1021 = vmatprep.subr.bf16.mxu0 0
        %1022 = vmatpush1.bf16.msra.mxu0 0
        %1023 = vmatprep.mubr.bf16.mxu0 0
        %1024 = vmatmul.mubr.bf16.gmra.mrb[0].mxu0 %v986
        %v1025 = vpop.f32.mrb[0].mxu0
        %v1026 = vadd.f32 0.0, %v1025
        %v1027 = vpop.f32.mrb[0].mxu0
        %v1028 = vpop.f32.mrb[0].mxu0
        %v1029 = vadd.f32 0.0, %v1028
        %v1030 = vpop.f32.mrb[0].mxu0
        %1031 = vdwg.mxu0
        %v1032 = vadd.f32 %v974, %v1026
        %v1033 = vadd.f32 %v975, %v1029
        %s1034 = scalar_lea.vmem %s1, 52
        %v1035 = vld [vmem:[%s1034] sm:$0xf]
        %v1036 = vrot.slane %v691, 3
        %v1037 = vrot.slane %v692, 3
        %v1038 = vsel %vm619, %v1036, %v1037
        %v1040 = vsel %vm290, %v1038, 0
        %v1043 = vsel %vm294, %v1035, 0
        %1045 = vmatprep.subr.bf16.mxu0 0
        %1046 = vmatpush1.bf16.msra.mxu0 %v1043
        %1047 = vmatprep.subr.bf16.mxu0 0
        %1048 = vmatpush1.bf16.msra.mxu0 0
        %1049 = vmatprep.subr.bf16.mxu0 0
        %1050 = vmatpush1.bf16.msra.mxu0 0
        %1051 = vmatprep.subr.bf16.mxu0 0
        %1052 = vmatpush1.bf16.msra.mxu0 0
        %1053 = vmatprep.subr.bf16.mxu0 0
        %1054 = vmatpush1.bf16.msra.mxu0 0
        %1055 = vmatprep.subr.bf16.mxu0 0
        %1056 = vmatpush1.bf16.msra.mxu0 0
        %1057 = vmatprep.subr.bf16.mxu0 0
        %1058 = vmatpush1.bf16.msra.mxu0 0
        %1059 = vmatprep.subr.bf16.mxu0 0
        %1060 = vmatpush1.bf16.msra.mxu0 0
        %1061 = vmatprep.subr.bf16.mxu0 0
        %1062 = vmatpush1.bf16.msra.mxu0 0
        %1063 = vmatprep.subr.bf16.mxu0 0
        %1064 = vmatpush1.bf16.msra.mxu0 0
        %1065 = vmatprep.subr.bf16.mxu0 0
        %1066 = vmatpush1.bf16.msra.mxu0 0
        %1067 = vmatprep.subr.bf16.mxu0 0
        %1068 = vmatpush1.bf16.msra.mxu0 0
        %1069 = vmatprep.subr.bf16.mxu0 0
        %1070 = vmatpush1.bf16.msra.mxu0 0
        %1071 = vmatprep.subr.bf16.mxu0 0
        %1072 = vmatpush1.bf16.msra.mxu0 0
        %1073 = vmatprep.subr.bf16.mxu0 0
        %1074 = vmatpush1.bf16.msra.mxu0 0
        %1075 = vmatprep.subr.bf16.mxu0 0
        %1076 = vmatpush1.bf16.msra.mxu0 0
        %1077 = vmatprep.mubr.bf16.mxu0 0
        %1078 = vmatmul.mubr.bf16.gmra.mrb[0].mxu0 %v1040
        %v1079 = vpop.f32.mrb[0].mxu0
        %v1080 = vadd.f32 0.0, %v1079
        %v1081 = vpop.f32.mrb[0].mxu0
        %v1082 = vpop.f32.mrb[0].mxu0
        %v1083 = vadd.f32 0.0, %v1082
        %v1084 = vpop.f32.mrb[0].mxu0
        %1085 = vdwg.mxu0
        %v1086 = vadd.f32 %v1032, %v1080
        %v1087 = vadd.f32 %v1033, %v1083
        %s1088 = sadd.s32 %s235, 2
        %s1089 = smul.u32 %s1088, 3
        %s1090 = smul.addr %s1089, 4
        %s1091 = scalar_lea.vmem %s224, %s1090
        %v1092 = vld [vmem:[%s1091] sm:$0xf]
        %v1093 = vld [vmem:[%s1091 + $0x4] sm:$0xf]
        %v1094 = vld [vmem:[%s1091 + $0x8] sm:$0x7]
        %v1095 = vunpack.c.l.bf16 %v1092
        %v1096 = vunpack.c.l.bf16 %v1093
        %v1097 = vunpack.c.l.bf16 %v1094
        %v1098 = vmul.f32 %v1095, %v254
        %v1099 = vmul.f32 %v1096, %v254
        %v1100 = vmul.f32 %v1097, %v254
        %v1101 = vadd.f32 %v1098, %v264
        %v1102 = vadd.f32 %v1099, %v264
        %v1103 = vadd.f32 %v1100, %v264
        %v1104 = vmax.f32 %v1101, 0.0
        %v1105 = vmax.f32 %v1102, 0.0
        %v1106 = vmax.f32 %v1103, 0.0
        %v1107 = vpack.c.bf16 %v1105, %v1104
        %v1108 = vpack.c.bf16 %v1106, %v1106
        %s1109 = scalar_lea.vmem %s1, 56
        %v1110 = vld [vmem:[%s1109] sm:$0xf]
        %v1112 = vsel %vm290, %v1107, 0
        %v1115 = vsel %vm294, %v1110, 0
        %1117 = vmatprep.subr.bf16.mxu0 0
        %1118 = vmatpush1.bf16.msra.mxu0 %v1115
        %1119 = vmatprep.subr.bf16.mxu0 0
        %1120 = vmatpush1.bf16.msra.mxu0 0
        %1121 = vmatprep.subr.bf16.mxu0 0
        %1122 = vmatpush1.bf16.msra.mxu0 0
        %1123 = vmatprep.subr.bf16.mxu0 0
        %1124 = vmatpush1.bf16.msra.mxu0 0
        %1125 = vmatprep.subr.bf16.mxu0 0
        %1126 = vmatpush1.bf16.msra.mxu0 0
        %1127 = vmatprep.subr.bf16.mxu0 0
        %1128 = vmatpush1.bf16.msra.mxu0 0
        %1129 = vmatprep.subr.bf16.mxu0 0
        %1130 = vmatpush1.bf16.msra.mxu0 0
        %1131 = vmatprep.subr.bf16.mxu0 0
        %1132 = vmatpush1.bf16.msra.mxu0 0
        %1133 = vmatprep.subr.bf16.mxu0 0
        %1134 = vmatpush1.bf16.msra.mxu0 0
        %1135 = vmatprep.subr.bf16.mxu0 0
        %1136 = vmatpush1.bf16.msra.mxu0 0
        %1137 = vmatprep.subr.bf16.mxu0 0
        %1138 = vmatpush1.bf16.msra.mxu0 0
        %1139 = vmatprep.subr.bf16.mxu0 0
        %1140 = vmatpush1.bf16.msra.mxu0 0
        %1141 = vmatprep.subr.bf16.mxu0 0
        %1142 = vmatpush1.bf16.msra.mxu0 0
        %1143 = vmatprep.subr.bf16.mxu0 0
        %1144 = vmatpush1.bf16.msra.mxu0 0
        %1145 = vmatprep.subr.bf16.mxu0 0
        %1146 = vmatpush1.bf16.msra.mxu0 0
        %1147 = vmatprep.subr.bf16.mxu0 0
        %1148 = vmatpush1.bf16.msra.mxu0 0
        %1149 = vmatprep.mubr.bf16.mxu0 0
        %1150 = vmatmul.mubr.bf16.gmra.mrb[0].mxu0 %v1112
        %v1151 = vpop.f32.mrb[0].mxu0
        %v1152 = vadd.f32 0.0, %v1151
        %v1153 = vpop.f32.mrb[0].mxu0
        %v1154 = vpop.f32.mrb[0].mxu0
        %v1155 = vadd.f32 0.0, %v1154
        %v1156 = vpop.f32.mrb[0].mxu0
        %1157 = vdwg.mxu0
        %v1158 = vadd.f32 %v1086, %v1152
        %v1159 = vadd.f32 %v1087, %v1155
        %s1160 = scalar_lea.vmem %s1, 60
        %v1161 = vld [vmem:[%s1160] sm:$0xf]
        %v1162 = vshrl.u32 %v1107, 16
        %v1164 = vshll.u32 %v1107, 16
        %v1166 = vrot.slane %v1164, 1
        %v1167 = vor.u32 %v1162, %v1166
        %v1169 = vshll.u32 %v1108, 16
        %v1171 = vrot.slane %v1169, 1
        %v1172 = vsel %vm277, %v1167, %v1171
        %v1174 = vsel %vm290, %v1172, 0
        %v1177 = vsel %vm294, %v1161, 0
        %1179 = vmatprep.subr.bf16.mxu0 0
        %1180 = vmatpush1.bf16.msra.mxu0 %v1177
        %1181 = vmatprep.subr.bf16.mxu0 0
        %1182 = vmatpush1.bf16.msra.mxu0 0
        %1183 = vmatprep.subr.bf16.mxu0 0
        %1184 = vmatpush1.bf16.msra.mxu0 0
        %1185 = vmatprep.subr.bf16.mxu0 0
        %1186 = vmatpush1.bf16.msra.mxu0 0
        %1187 = vmatprep.subr.bf16.mxu0 0
        %1188 = vmatpush1.bf16.msra.mxu0 0
        %1189 = vmatprep.subr.bf16.mxu0 0
        %1190 = vmatpush1.bf16.msra.mxu0 0
        %1191 = vmatprep.subr.bf16.mxu0 0
        %1192 = vmatpush1.bf16.msra.mxu0 0
        %1193 = vmatprep.subr.bf16.mxu0 0
        %1194 = vmatpush1.bf16.msra.mxu0 0
        %1195 = vmatprep.subr.bf16.mxu0 0
        %1196 = vmatpush1.bf16.msra.mxu0 0
        %1197 = vmatprep.subr.bf16.mxu0 0
        %1198 = vmatpush1.bf16.msra.mxu0 0
        %1199 = vmatprep.subr.bf16.mxu0 0
        %1200 = vmatpush1.bf16.msra.mxu0 0
        %1201 = vmatprep.subr.bf16.mxu0 0
        %1202 = vmatpush1.bf16.msra.mxu0 0
        %1203 = vmatprep.subr.bf16.mxu0 0
        %1204 = vmatpush1.bf16.msra.mxu0 0
        %1205 = vmatprep.subr.bf16.mxu0 0
        %1206 = vmatpush1.bf16.msra.mxu0 0
        %1207 = vmatprep.subr.bf16.mxu0 0
        %1208 = vmatpush1.bf16.msra.mxu0 0
        %1209 = vmatprep.subr.bf16.mxu0 0
        %1210 = vmatpush1.bf16.msra.mxu0 0
        %1211 = vmatprep.mubr.bf16.mxu0 0
        %1212 = vmatmul.mubr.bf16.gmra.mrb[0].mxu0 %v1174
        %v1213 = vpop.f32.mrb[0].mxu0
        %v1214 = vadd.f32 0.0, %v1213
        %v1215 = vpop.f32.mrb[0].mxu0
        %v1216 = vpop.f32.mrb[0].mxu0
        %v1217 = vadd.f32 0.0, %v1216
        %v1218 = vpop.f32.mrb[0].mxu0
        %1219 = vdwg.mxu0
        %v1220 = vadd.f32 %v1158, %v1214
        %v1221 = vadd.f32 %v1159, %v1217
        %s1222 = scalar_lea.vmem %s1, 64
        %v1223 = vld [vmem:[%s1222] sm:$0xf]
        %v1226 = vrot.slane %v1107, 1
        %v1227 = vrot.slane %v1108, 1
        %v1228 = vsel %vm389, %v1226, %v1227
        %v1230 = vsel %vm290, %v1228, 0
        %v1233 = vsel %vm294, %v1223, 0
        %1235 = vmatprep.subr.bf16.mxu0 0
        %1236 = vmatpush1.bf16.msra.mxu0 %v1233
        %1237 = vmatprep.subr.bf16.mxu0 0
        %1238 = vmatpush1.bf16.msra.mxu0 0
        %1239 = vmatprep.subr.bf16.mxu0 0
        %1240 = vmatpush1.bf16.msra.mxu0 0
        %1241 = vmatprep.subr.bf16.mxu0 0
        %1242 = vmatpush1.bf16.msra.mxu0 0
        %1243 = vmatprep.subr.bf16.mxu0 0
        %1244 = vmatpush1.bf16.msra.mxu0 0
        %1245 = vmatprep.subr.bf16.mxu0 0
        %1246 = vmatpush1.bf16.msra.mxu0 0
        %1247 = vmatprep.subr.bf16.mxu0 0
        %1248 = vmatpush1.bf16.msra.mxu0 0
        %1249 = vmatprep.subr.bf16.mxu0 0
        %1250 = vmatpush1.bf16.msra.mxu0 0
        %1251 = vmatprep.subr.bf16.mxu0 0
        %1252 = vmatpush1.bf16.msra.mxu0 0
        %1253 = vmatprep.subr.bf16.mxu0 0
        %1254 = vmatpush1.bf16.msra.mxu0 0
        %1255 = vmatprep.subr.bf16.mxu0 0
        %1256 = vmatpush1.bf16.msra.mxu0 0
        %1257 = vmatprep.subr.bf16.mxu0 0
        %1258 = vmatpush1.bf16.msra.mxu0 0
        %1259 = vmatprep.subr.bf16.mxu0 0
        %1260 = vmatpush1.bf16.msra.mxu0 0
        %1261 = vmatprep.subr.bf16.mxu0 0
        %1262 = vmatpush1.bf16.msra.mxu0 0
        %1263 = vmatprep.subr.bf16.mxu0 0
        %1264 = vmatpush1.bf16.msra.mxu0 0
        %1265 = vmatprep.subr.bf16.mxu0 0
        %1266 = vmatpush1.bf16.msra.mxu0 0
        %1267 = vmatprep.mubr.bf16.mxu0 0
        %1268 = vmatmul.mubr.bf16.gmra.mrb[0].mxu0 %v1230
        %v1269 = vpop.f32.mrb[0].mxu0
        %v1270 = vadd.f32 0.0, %v1269
        %v1271 = vpop.f32.mrb[0].mxu0
        %v1272 = vpop.f32.mrb[0].mxu0
        %v1273 = vadd.f32 0.0, %v1272
        %v1274 = vpop.f32.mrb[0].mxu0
        %1275 = vdwg.mxu0
        %v1276 = vadd.f32 %v1220, %v1270
        %v1277 = vadd.f32 %v1221, %v1273
        %s1278 = scalar_lea.vmem %s1, 68
        %v1279 = vld [vmem:[%s1278] sm:$0xf]
        %v1280 = vrot.slane %v1162, 1
        %v1281 = vrot.slane %v1164, 2
        %v1282 = vor.u32 %v1280, %v1281
        %v1283 = vshrl.u32 %v1108, 16
        %v1285 = vrot.slane %v1283, 1
        %v1286 = vrot.slane %v1169, 2
        %v1287 = vor.u32 %v1285, %v1286
        %v1288 = vsel %vm444, %v1282, %v1287
        %v1290 = vsel %vm290, %v1288, 0
        %v1293 = vsel %vm294, %v1279, 0
        %1295 = vmatprep.subr.bf16.mxu0 0
        %1296 = vmatpush1.bf16.msra.mxu0 %v1293
        %1297 = vmatprep.subr.bf16.mxu0 0
        %1298 = vmatpush1.bf16.msra.mxu0 0
        %1299 = vmatprep.subr.bf16.mxu0 0
        %1300 = vmatpush1.bf16.msra.mxu0 0
        %1301 = vmatprep.subr.bf16.mxu0 0
        %1302 = vmatpush1.bf16.msra.mxu0 0
        %1303 = vmatprep.subr.bf16.mxu0 0
        %1304 = vmatpush1.bf16.msra.mxu0 0
        %1305 = vmatprep.subr.bf16.mxu0 0
        %1306 = vmatpush1.bf16.msra.mxu0 0
        %1307 = vmatprep.subr.bf16.mxu0 0
        %1308 = vmatpush1.bf16.msra.mxu0 0
        %1309 = vmatprep.subr.bf16.mxu0 0
        %1310 = vmatpush1.bf16.msra.mxu0 0
        %1311 = vmatprep.subr.bf16.mxu0 0
        %1312 = vmatpush1.bf16.msra.mxu0 0
        %1313 = vmatprep.subr.bf16.mxu0 0
        %1314 = vmatpush1.bf16.msra.mxu0 0
        %1315 = vmatprep.subr.bf16.mxu0 0
        %1316 = vmatpush1.bf16.msra.mxu0 0
        %1317 = vmatprep.subr.bf16.mxu0 0
        %1318 = vmatpush1.bf16.msra.mxu0 0
        %1319 = vmatprep.subr.bf16.mxu0 0
        %1320 = vmatpush1.bf16.msra.mxu0 0
        %1321 = vmatprep.subr.bf16.mxu0 0
        %1322 = vmatpush1.bf16.msra.mxu0 0
        %1323 = vmatprep.subr.bf16.mxu0 0
        %1324 = vmatpush1.bf16.msra.mxu0 0
        %1325 = vmatprep.subr.bf16.mxu0 0
        %1326 = vmatpush1.bf16.msra.mxu0 0
        %1327 = vmatprep.mubr.bf16.mxu0 0
        %1328 = vmatmul.mubr.bf16.gmra.mrb[0].mxu0 %v1290
        %v1329 = vpop.f32.mrb[0].mxu0
        %v1330 = vadd.f32 0.0, %v1329
        %v1331 = vpop.f32.mrb[0].mxu0
        %v1332 = vpop.f32.mrb[0].mxu0
        %v1333 = vadd.f32 0.0, %v1332
        %v1334 = vpop.f32.mrb[0].mxu0
        %1335 = vdwg.mxu0
        %v1336 = vadd.f32 %v1276, %v1330
        %v1337 = vadd.f32 %v1277, %v1333
        %s1338 = scalar_lea.vmem %s1, 72
        %v1339 = vld [vmem:[%s1338] sm:$0xf]
        %v1340 = vrot.slane %v1107, 2
        %v1341 = vrot.slane %v1108, 2
        %v1342 = vsel %vm505, %v1340, %v1341
        %v1344 = vsel %vm290, %v1342, 0
        %v1347 = vsel %vm294, %v1339, 0
        %1349 = vmatprep.subr.bf16.mxu0 0
        %1350 = vmatpush1.bf16.msra.mxu0 %v1347
        %1351 = vmatprep.subr.bf16.mxu0 0
        %1352 = vmatpush1.bf16.msra.mxu0 0
        %1353 = vmatprep.subr.bf16.mxu0 0
        %1354 = vmatpush1.bf16.msra.mxu0 0
        %1355 = vmatprep.subr.bf16.mxu0 0
        %1356 = vmatpush1.bf16.msra.mxu0 0
        %1357 = vmatprep.subr.bf16.mxu0 0
        %1358 = vmatpush1.bf16.msra.mxu0 0
        %1359 = vmatprep.subr.bf16.mxu0 0
        %1360 = vmatpush1.bf16.msra.mxu0 0
        %1361 = vmatprep.subr.bf16.mxu0 0
        %1362 = vmatpush1.bf16.msra.mxu0 0
        %1363 = vmatprep.subr.bf16.mxu0 0
        %1364 = vmatpush1.bf16.msra.mxu0 0
        %1365 = vmatprep.subr.bf16.mxu0 0
        %1366 = vmatpush1.bf16.msra.mxu0 0
        %1367 = vmatprep.subr.bf16.mxu0 0
        %1368 = vmatpush1.bf16.msra.mxu0 0
        %1369 = vmatprep.subr.bf16.mxu0 0
        %1370 = vmatpush1.bf16.msra.mxu0 0
        %1371 = vmatprep.subr.bf16.mxu0 0
        %1372 = vmatpush1.bf16.msra.mxu0 0
        %1373 = vmatprep.subr.bf16.mxu0 0
        %1374 = vmatpush1.bf16.msra.mxu0 0
        %1375 = vmatprep.subr.bf16.mxu0 0
        %1376 = vmatpush1.bf16.msra.mxu0 0
        %1377 = vmatprep.subr.bf16.mxu0 0
        %1378 = vmatpush1.bf16.msra.mxu0 0
        %1379 = vmatprep.subr.bf16.mxu0 0
        %1380 = vmatpush1.bf16.msra.mxu0 0
        %1381 = vmatprep.mubr.bf16.mxu0 0
        %1382 = vmatmul.mubr.bf16.gmra.mrb[0].mxu0 %v1344
        %v1383 = vpop.f32.mrb[0].mxu0
        %v1384 = vadd.f32 0.0, %v1383
        %v1385 = vpop.f32.mrb[0].mxu0
        %v1386 = vpop.f32.mrb[0].mxu0
        %v1387 = vadd.f32 0.0, %v1386
        %v1388 = vpop.f32.mrb[0].mxu0
        %1389 = vdwg.mxu0
        %v1390 = vadd.f32 %v1336, %v1384
        %v1391 = vadd.f32 %v1337, %v1387
        %s1392 = scalar_lea.vmem %s1, 76
        %v1393 = vld [vmem:[%s1392] sm:$0xf]
        %v1394 = vrot.slane %v1162, 2
        %v1395 = vrot.slane %v1164, 3
        %v1396 = vor.u32 %v1394, %v1395
        %v1397 = vrot.slane %v1283, 2
        %v1398 = vrot.slane %v1169, 3
        %v1399 = vor.u32 %v1397, %v1398
        %v1400 = vsel %vm560, %v1396, %v1399
        %v1402 = vsel %vm290, %v1400, 0
        %v1405 = vsel %vm294, %v1393, 0
        %1407 = vmatprep.subr.bf16.mxu0 0
        %1408 = vmatpush1.bf16.msra.mxu0 %v1405
        %1409 = vmatprep.subr.bf16.mxu0 0
        %1410 = vmatpush1.bf16.msra.mxu0 0
        %1411 = vmatprep.subr.bf16.mxu0 0
        %1412 = vmatpush1.bf16.msra.mxu0 0
        %1413 = vmatprep.subr.bf16.mxu0 0
        %1414 = vmatpush1.bf16.msra.mxu0 0
        %1415 = vmatprep.subr.bf16.mxu0 0
        %1416 = vmatpush1.bf16.msra.mxu0 0
        %1417 = vmatprep.subr.bf16.mxu0 0
        %1418 = vmatpush1.bf16.msra.mxu0 0
        %1419 = vmatprep.subr.bf16.mxu0 0
        %1420 = vmatpush1.bf16.msra.mxu0 0
        %1421 = vmatprep.subr.bf16.mxu0 0
        %1422 = vmatpush1.bf16.msra.mxu0 0
        %1423 = vmatprep.subr.bf16.mxu0 0
        %1424 = vmatpush1.bf16.msra.mxu0 0
        %1425 = vmatprep.subr.bf16.mxu0 0
        %1426 = vmatpush1.bf16.msra.mxu0 0
        %1427 = vmatprep.subr.bf16.mxu0 0
        %1428 = vmatpush1.bf16.msra.mxu0 0
        %1429 = vmatprep.subr.bf16.mxu0 0
        %1430 = vmatpush1.bf16.msra.mxu0 0
        %1431 = vmatprep.subr.bf16.mxu0 0
        %1432 = vmatpush1.bf16.msra.mxu0 0
        %1433 = vmatprep.subr.bf16.mxu0 0
        %1434 = vmatpush1.bf16.msra.mxu0 0
        %1435 = vmatprep.subr.bf16.mxu0 0
        %1436 = vmatpush1.bf16.msra.mxu0 0
        %1437 = vmatprep.subr.bf16.mxu0 0
        %1438 = vmatpush1.bf16.msra.mxu0 0
        %1439 = vmatprep.mubr.bf16.mxu0 0
        %1440 = vmatmul.mubr.bf16.gmra.mrb[0].mxu0 %v1402
        %v1441 = vpop.f32.mrb[0].mxu0
        %v1442 = vadd.f32 0.0, %v1441
        %v1443 = vpop.f32.mrb[0].mxu0
        %v1444 = vpop.f32.mrb[0].mxu0
        %v1445 = vadd.f32 0.0, %v1444
        %v1446 = vpop.f32.mrb[0].mxu0
        %1447 = vdwg.mxu0
        %v1448 = vadd.f32 %v1390, %v1442
        %v1449 = vadd.f32 %v1391, %v1445
        %s1450 = scalar_lea.vmem %s1, 80
        %v1451 = vld [vmem:[%s1450] sm:$0xf]
        %v1452 = vrot.slane %v1107, 3
        %v1453 = vrot.slane %v1108, 3
        %v1454 = vsel %vm619, %v1452, %v1453
        %v1456 = vsel %vm290, %v1454, 0
        %v1459 = vsel %vm294, %v1451, 0
        %1461 = vmatprep.subr.bf16.mxu0 0
        %1462 = vmatpush1.bf16.msra.mxu0 %v1459
        %1463 = vmatprep.subr.bf16.mxu0 0
        %1464 = vmatpush1.bf16.msra.mxu0 0
        %1465 = vmatprep.subr.bf16.mxu0 0
        %1466 = vmatpush1.bf16.msra.mxu0 0
        %1467 = vmatprep.subr.bf16.mxu0 0
        %1468 = vmatpush1.bf16.msra.mxu0 0
        %1469 = vmatprep.subr.bf16.mxu0 0
        %1470 = vmatpush1.bf16.msra.mxu0 0
        %1471 = vmatprep.subr.bf16.mxu0 0
        %1472 = vmatpush1.bf16.msra.mxu0 0
        %1473 = vmatprep.subr.bf16.mxu0 0
        %1474 = vmatpush1.bf16.msra.mxu0 0
        %1475 = vmatprep.subr.bf16.mxu0 0
        %1476 = vmatpush1.bf16.msra.mxu0 0
        %1477 = vmatprep.subr.bf16.mxu0 0
        %1478 = vmatpush1.bf16.msra.mxu0 0
        %1479 = vmatprep.subr.bf16.mxu0 0
        %1480 = vmatpush1.bf16.msra.mxu0 0
        %1481 = vmatprep.subr.bf16.mxu0 0
        %1482 = vmatpush1.bf16.msra.mxu0 0
        %1483 = vmatprep.subr.bf16.mxu0 0
        %1484 = vmatpush1.bf16.msra.mxu0 0
        %1485 = vmatprep.subr.bf16.mxu0 0
        %1486 = vmatpush1.bf16.msra.mxu0 0
        %1487 = vmatprep.subr.bf16.mxu0 0
        %1488 = vmatpush1.bf16.msra.mxu0 0
        %1489 = vmatprep.subr.bf16.mxu0 0
        %1490 = vmatpush1.bf16.msra.mxu0 0
        %1491 = vmatprep.subr.bf16.mxu0 0
        %1492 = vmatpush1.bf16.msra.mxu0 0
        %1493 = vmatprep.mubr.bf16.mxu0 0
        %1494 = vmatmul.mubr.bf16.gmra.mrb[0].mxu0 %v1456
        %v1495 = vpop.f32.mrb[0].mxu0
        %v1496 = vadd.f32 0.0, %v1495
        %v1497 = vpop.f32.mrb[0].mxu0
        %v1498 = vpop.f32.mrb[0].mxu0
        %v1499 = vadd.f32 0.0, %v1498
        %v1500 = vpop.f32.mrb[0].mxu0
        %1501 = vdwg.mxu0
        %v1502 = vadd.f32 %v1448, %v1496
        %v1503 = vadd.f32 %v1449, %v1499
        %s1504 = sadd.s32 %s235, 3
        %s1505 = smul.u32 %s1504, 3
        %s1506 = smul.addr %s1505, 4
        %s1507 = scalar_lea.vmem %s224, %s1506
        %v1508 = vld [vmem:[%s1507] sm:$0xf]
        %v1509 = vld [vmem:[%s1507 + $0x4] sm:$0xf]
        %v1510 = vld [vmem:[%s1507 + $0x8] sm:$0x7]
        %v1511 = vunpack.c.l.bf16 %v1508
        %v1512 = vunpack.c.l.bf16 %v1509
        %v1513 = vunpack.c.l.bf16 %v1510
        %v1514 = vmul.f32 %v1511, %v254
        %v1515 = vmul.f32 %v1512, %v254
        %v1516 = vmul.f32 %v1513, %v254
        %v1517 = vadd.f32 %v1514, %v264
        %v1518 = vadd.f32 %v1515, %v264
        %v1519 = vadd.f32 %v1516, %v264
        %v1520 = vmax.f32 %v1517, 0.0
        %v1521 = vmax.f32 %v1518, 0.0
        %v1522 = vmax.f32 %v1519, 0.0
        %v1523 = vpack.c.bf16 %v1521, %v1520
        %v1524 = vpack.c.bf16 %v1522, %v1522
        %s1525 = scalar_lea.vmem %s1, 84
        %v1526 = vld [vmem:[%s1525] sm:$0xf]
        %v1528 = vsel %vm290, %v1523, 0
        %v1531 = vsel %vm294, %v1526, 0
        %1533 = vmatprep.subr.bf16.mxu0 0
        %1534 = vmatpush1.bf16.msra.mxu0 %v1531
        %1535 = vmatprep.subr.bf16.mxu0 0
        %1536 = vmatpush1.bf16.msra.mxu0 0
        %1537 = vmatprep.subr.bf16.mxu0 0
        %1538 = vmatpush1.bf16.msra.mxu0 0
        %1539 = vmatprep.subr.bf16.mxu0 0
        %1540 = vmatpush1.bf16.msra.mxu0 0
        %1541 = vmatprep.subr.bf16.mxu0 0
        %1542 = vmatpush1.bf16.msra.mxu0 0
        %1543 = vmatprep.subr.bf16.mxu0 0
        %1544 = vmatpush1.bf16.msra.mxu0 0
        %1545 = vmatprep.subr.bf16.mxu0 0
        %1546 = vmatpush1.bf16.msra.mxu0 0
        %1547 = vmatprep.subr.bf16.mxu0 0
        %1548 = vmatpush1.bf16.msra.mxu0 0
        %1549 = vmatprep.subr.bf16.mxu0 0
        %1550 = vmatpush1.bf16.msra.mxu0 0
        %1551 = vmatprep.subr.bf16.mxu0 0
        %1552 = vmatpush1.bf16.msra.mxu0 0
        %1553 = vmatprep.subr.bf16.mxu0 0
        %1554 = vmatpush1.bf16.msra.mxu0 0
        %1555 = vmatprep.subr.bf16.mxu0 0
        %1556 = vmatpush1.bf16.msra.mxu0 0
        %1557 = vmatprep.subr.bf16.mxu0 0
        %1558 = vmatpush1.bf16.msra.mxu0 0
        %1559 = vmatprep.subr.bf16.mxu0 0
        %1560 = vmatpush1.bf16.msra.mxu0 0
        %1561 = vmatprep.subr.bf16.mxu0 0
        %1562 = vmatpush1.bf16.msra.mxu0 0
        %1563 = vmatprep.subr.bf16.mxu0 0
        %1564 = vmatpush1.bf16.msra.mxu0 0
        %1565 = vmatprep.mubr.bf16.mxu0 0
        %1566 = vmatmul.mubr.bf16.gmra.mrb[0].mxu0 %v1528
        %v1567 = vpop.f32.mrb[0].mxu0
        %v1568 = vadd.f32 0.0, %v1567
        %v1569 = vpop.f32.mrb[0].mxu0
        %v1570 = vpop.f32.mrb[0].mxu0
        %v1571 = vadd.f32 0.0, %v1570
        %v1572 = vpop.f32.mrb[0].mxu0
        %1573 = vdwg.mxu0
        %v1574 = vadd.f32 %v1502, %v1568
        %v1575 = vadd.f32 %v1503, %v1571
        %s1576 = scalar_lea.vmem %s1, 88
        %v1577 = vld [vmem:[%s1576] sm:$0xf]
        %v1578 = vshrl.u32 %v1523, 16
        %v1580 = vshll.u32 %v1523, 16
        %v1582 = vrot.slane %v1580, 1
        %v1583 = vor.u32 %v1578, %v1582
        %v1585 = vshll.u32 %v1524, 16
        %v1587 = vrot.slane %v1585, 1
        %v1588 = vsel %vm277, %v1583, %v1587
        %v1590 = vsel %vm290, %v1588, 0
        %v1593 = vsel %vm294, %v1577, 0
        %1595 = vmatprep.subr.bf16.mxu0 0
        %1596 = vmatpush1.bf16.msra.mxu0 %v1593
        %1597 = vmatprep.subr.bf16.mxu0 0
        %1598 = vmatpush1.bf16.msra.mxu0 0
        %1599 = vmatprep.subr.bf16.mxu0 0
        %1600 = vmatpush1.bf16.msra.mxu0 0
        %1601 = vmatprep.subr.bf16.mxu0 0
        %1602 = vmatpush1.bf16.msra.mxu0 0
        %1603 = vmatprep.subr.bf16.mxu0 0
        %1604 = vmatpush1.bf16.msra.mxu0 0
        %1605 = vmatprep.subr.bf16.mxu0 0
        %1606 = vmatpush1.bf16.msra.mxu0 0
        %1607 = vmatprep.subr.bf16.mxu0 0
        %1608 = vmatpush1.bf16.msra.mxu0 0
        %1609 = vmatprep.subr.bf16.mxu0 0
        %1610 = vmatpush1.bf16.msra.mxu0 0
        %1611 = vmatprep.subr.bf16.mxu0 0
        %1612 = vmatpush1.bf16.msra.mxu0 0
        %1613 = vmatprep.subr.bf16.mxu0 0
        %1614 = vmatpush1.bf16.msra.mxu0 0
        %1615 = vmatprep.subr.bf16.mxu0 0
        %1616 = vmatpush1.bf16.msra.mxu0 0
        %1617 = vmatprep.subr.bf16.mxu0 0
        %1618 = vmatpush1.bf16.msra.mxu0 0
        %1619 = vmatprep.subr.bf16.mxu0 0
        %1620 = vmatpush1.bf16.msra.mxu0 0
        %1621 = vmatprep.subr.bf16.mxu0 0
        %1622 = vmatpush1.bf16.msra.mxu0 0
        %1623 = vmatprep.subr.bf16.mxu0 0
        %1624 = vmatpush1.bf16.msra.mxu0 0
        %1625 = vmatprep.subr.bf16.mxu0 0
        %1626 = vmatpush1.bf16.msra.mxu0 0
        %1627 = vmatprep.mubr.bf16.mxu0 0
        %1628 = vmatmul.mubr.bf16.gmra.mrb[0].mxu0 %v1590
        %v1629 = vpop.f32.mrb[0].mxu0
        %v1630 = vadd.f32 0.0, %v1629
        %v1631 = vpop.f32.mrb[0].mxu0
        %v1632 = vpop.f32.mrb[0].mxu0
        %v1633 = vadd.f32 0.0, %v1632
        %v1634 = vpop.f32.mrb[0].mxu0
        %1635 = vdwg.mxu0
        %v1636 = vadd.f32 %v1574, %v1630
        %v1637 = vadd.f32 %v1575, %v1633
        %s1638 = scalar_lea.vmem %s1, 92
        %v1639 = vld [vmem:[%s1638] sm:$0xf]
        %v1642 = vrot.slane %v1523, 1
        %v1643 = vrot.slane %v1524, 1
        %v1644 = vsel %vm389, %v1642, %v1643
        %v1646 = vsel %vm290, %v1644, 0
        %v1649 = vsel %vm294, %v1639, 0
        %1651 = vmatprep.subr.bf16.mxu0 0
        %1652 = vmatpush1.bf16.msra.mxu0 %v1649
        %1653 = vmatprep.subr.bf16.mxu0 0
        %1654 = vmatpush1.bf16.msra.mxu0 0
        %1655 = vmatprep.subr.bf16.mxu0 0
        %1656 = vmatpush1.bf16.msra.mxu0 0
        %1657 = vmatprep.subr.bf16.mxu0 0
        %1658 = vmatpush1.bf16.msra.mxu0 0
        %1659 = vmatprep.subr.bf16.mxu0 0
        %1660 = vmatpush1.bf16.msra.mxu0 0
        %1661 = vmatprep.subr.bf16.mxu0 0
        %1662 = vmatpush1.bf16.msra.mxu0 0
        %1663 = vmatprep.subr.bf16.mxu0 0
        %1664 = vmatpush1.bf16.msra.mxu0 0
        %1665 = vmatprep.subr.bf16.mxu0 0
        %1666 = vmatpush1.bf16.msra.mxu0 0
        %1667 = vmatprep.subr.bf16.mxu0 0
        %1668 = vmatpush1.bf16.msra.mxu0 0
        %1669 = vmatprep.subr.bf16.mxu0 0
        %1670 = vmatpush1.bf16.msra.mxu0 0
        %1671 = vmatprep.subr.bf16.mxu0 0
        %1672 = vmatpush1.bf16.msra.mxu0 0
        %1673 = vmatprep.subr.bf16.mxu0 0
        %1674 = vmatpush1.bf16.msra.mxu0 0
        %1675 = vmatprep.subr.bf16.mxu0 0
        %1676 = vmatpush1.bf16.msra.mxu0 0
        %1677 = vmatprep.subr.bf16.mxu0 0
        %1678 = vmatpush1.bf16.msra.mxu0 0
        %1679 = vmatprep.subr.bf16.mxu0 0
        %1680 = vmatpush1.bf16.msra.mxu0 0
        %1681 = vmatprep.subr.bf16.mxu0 0
        %1682 = vmatpush1.bf16.msra.mxu0 0
        %1683 = vmatprep.mubr.bf16.mxu0 0
        %1684 = vmatmul.mubr.bf16.gmra.mrb[0].mxu0 %v1646
        %v1685 = vpop.f32.mrb[0].mxu0
        %v1686 = vadd.f32 0.0, %v1685
        %v1687 = vpop.f32.mrb[0].mxu0
        %v1688 = vpop.f32.mrb[0].mxu0
        %v1689 = vadd.f32 0.0, %v1688
        %v1690 = vpop.f32.mrb[0].mxu0
        %1691 = vdwg.mxu0
        %v1692 = vadd.f32 %v1636, %v1686
        %v1693 = vadd.f32 %v1637, %v1689
        %s1694 = scalar_lea.vmem %s1, 96
        %v1695 = vld [vmem:[%s1694] sm:$0xf]
        %v1696 = vrot.slane %v1578, 1
        %v1697 = vrot.slane %v1580, 2
        %v1698 = vor.u32 %v1696, %v1697
        %v1699 = vshrl.u32 %v1524, 16
        %v1701 = vrot.slane %v1699, 1
        %v1702 = vrot.slane %v1585, 2
        %v1703 = vor.u32 %v1701, %v1702
        %v1704 = vsel %vm444, %v1698, %v1703
        %v1706 = vsel %vm290, %v1704, 0
        %v1709 = vsel %vm294, %v1695, 0
        %1711 = vmatprep.subr.bf16.mxu0 0
        %1712 = vmatpush1.bf16.msra.mxu0 %v1709
        %1713 = vmatprep.subr.bf16.mxu0 0
        %1714 = vmatpush1.bf16.msra.mxu0 0
        %1715 = vmatprep.subr.bf16.mxu0 0
        %1716 = vmatpush1.bf16.msra.mxu0 0
        %1717 = vmatprep.subr.bf16.mxu0 0
        %1718 = vmatpush1.bf16.msra.mxu0 0
        %1719 = vmatprep.subr.bf16.mxu0 0
        %1720 = vmatpush1.bf16.msra.mxu0 0
        %1721 = vmatprep.subr.bf16.mxu0 0
        %1722 = vmatpush1.bf16.msra.mxu0 0
        %1723 = vmatprep.subr.bf16.mxu0 0
        %1724 = vmatpush1.bf16.msra.mxu0 0
        %1725 = vmatprep.subr.bf16.mxu0 0
        %1726 = vmatpush1.bf16.msra.mxu0 0
        %1727 = vmatprep.subr.bf16.mxu0 0
        %1728 = vmatpush1.bf16.msra.mxu0 0
        %1729 = vmatprep.subr.bf16.mxu0 0
        %1730 = vmatpush1.bf16.msra.mxu0 0
        %1731 = vmatprep.subr.bf16.mxu0 0
        %1732 = vmatpush1.bf16.msra.mxu0 0
        %1733 = vmatprep.subr.bf16.mxu0 0
        %1734 = vmatpush1.bf16.msra.mxu0 0
        %1735 = vmatprep.subr.bf16.mxu0 0
        %1736 = vmatpush1.bf16.msra.mxu0 0
        %1737 = vmatprep.subr.bf16.mxu0 0
        %1738 = vmatpush1.bf16.msra.mxu0 0
        %1739 = vmatprep.subr.bf16.mxu0 0
        %1740 = vmatpush1.bf16.msra.mxu0 0
        %1741 = vmatprep.subr.bf16.mxu0 0
        %1742 = vmatpush1.bf16.msra.mxu0 0
        %1743 = vmatprep.mubr.bf16.mxu0 0
        %1744 = vmatmul.mubr.bf16.gmra.mrb[0].mxu0 %v1706
        %v1745 = vpop.f32.mrb[0].mxu0
        %v1746 = vadd.f32 0.0, %v1745
        %v1747 = vpop.f32.mrb[0].mxu0
        %v1748 = vpop.f32.mrb[0].mxu0
        %v1749 = vadd.f32 0.0, %v1748
        %v1750 = vpop.f32.mrb[0].mxu0
        %1751 = vdwg.mxu0
        %v1752 = vadd.f32 %v1692, %v1746
        %v1753 = vadd.f32 %v1693, %v1749
        %s1754 = scalar_lea.vmem %s1, 100
        %v1755 = vld [vmem:[%s1754] sm:$0xf]
        %v1756 = vrot.slane %v1523, 2
        %v1757 = vrot.slane %v1524, 2
        %v1758 = vsel %vm505, %v1756, %v1757
        %v1760 = vsel %vm290, %v1758, 0
        %v1763 = vsel %vm294, %v1755, 0
        %1765 = vmatprep.subr.bf16.mxu0 0
        %1766 = vmatpush1.bf16.msra.mxu0 %v1763
        %1767 = vmatprep.subr.bf16.mxu0 0
        %1768 = vmatpush1.bf16.msra.mxu0 0
        %1769 = vmatprep.subr.bf16.mxu0 0
        %1770 = vmatpush1.bf16.msra.mxu0 0
        %1771 = vmatprep.subr.bf16.mxu0 0
        %1772 = vmatpush1.bf16.msra.mxu0 0
        %1773 = vmatprep.subr.bf16.mxu0 0
        %1774 = vmatpush1.bf16.msra.mxu0 0
        %1775 = vmatprep.subr.bf16.mxu0 0
        %1776 = vmatpush1.bf16.msra.mxu0 0
        %1777 = vmatprep.subr.bf16.mxu0 0
        %1778 = vmatpush1.bf16.msra.mxu0 0
        %1779 = vmatprep.subr.bf16.mxu0 0
        %1780 = vmatpush1.bf16.msra.mxu0 0
        %1781 = vmatprep.subr.bf16.mxu0 0
        %1782 = vmatpush1.bf16.msra.mxu0 0
        %1783 = vmatprep.subr.bf16.mxu0 0
        %1784 = vmatpush1.bf16.msra.mxu0 0
        %1785 = vmatprep.subr.bf16.mxu0 0
        %1786 = vmatpush1.bf16.msra.mxu0 0
        %1787 = vmatprep.subr.bf16.mxu0 0
        %1788 = vmatpush1.bf16.msra.mxu0 0
        %1789 = vmatprep.subr.bf16.mxu0 0
        %1790 = vmatpush1.bf16.msra.mxu0 0
        %1791 = vmatprep.subr.bf16.mxu0 0
        %1792 = vmatpush1.bf16.msra.mxu0 0
        %1793 = vmatprep.subr.bf16.mxu0 0
        %1794 = vmatpush1.bf16.msra.mxu0 0
        %1795 = vmatprep.subr.bf16.mxu0 0
        %1796 = vmatpush1.bf16.msra.mxu0 0
        %1797 = vmatprep.mubr.bf16.mxu0 0
        %1798 = vmatmul.mubr.bf16.gmra.mrb[0].mxu0 %v1760
        %v1799 = vpop.f32.mrb[0].mxu0
        %v1800 = vadd.f32 0.0, %v1799
        %v1801 = vpop.f32.mrb[0].mxu0
        %v1802 = vpop.f32.mrb[0].mxu0
        %v1803 = vadd.f32 0.0, %v1802
        %v1804 = vpop.f32.mrb[0].mxu0
        %1805 = vdwg.mxu0
        %v1806 = vadd.f32 %v1752, %v1800
        %v1807 = vadd.f32 %v1753, %v1803
        %s1808 = scalar_lea.vmem %s1, 104
        %v1809 = vld [vmem:[%s1808] sm:$0xf]
        %v1810 = vrot.slane %v1578, 2
        %v1811 = vrot.slane %v1580, 3
        %v1812 = vor.u32 %v1810, %v1811
        %v1813 = vrot.slane %v1699, 2
        %v1814 = vrot.slane %v1585, 3
        %v1815 = vor.u32 %v1813, %v1814
        %v1816 = vsel %vm560, %v1812, %v1815
        %v1818 = vsel %vm290, %v1816, 0
        %v1821 = vsel %vm294, %v1809, 0
        %1823 = vmatprep.subr.bf16.mxu0 0
        %1824 = vmatpush1.bf16.msra.mxu0 %v1821
        %1825 = vmatprep.subr.bf16.mxu0 0
        %1826 = vmatpush1.bf16.msra.mxu0 0
        %1827 = vmatprep.subr.bf16.mxu0 0
        %1828 = vmatpush1.bf16.msra.mxu0 0
        %1829 = vmatprep.subr.bf16.mxu0 0
        %1830 = vmatpush1.bf16.msra.mxu0 0
        %1831 = vmatprep.subr.bf16.mxu0 0
        %1832 = vmatpush1.bf16.msra.mxu0 0
        %1833 = vmatprep.subr.bf16.mxu0 0
        %1834 = vmatpush1.bf16.msra.mxu0 0
        %1835 = vmatprep.subr.bf16.mxu0 0
        %1836 = vmatpush1.bf16.msra.mxu0 0
        %1837 = vmatprep.subr.bf16.mxu0 0
        %1838 = vmatpush1.bf16.msra.mxu0 0
        %1839 = vmatprep.subr.bf16.mxu0 0
        %1840 = vmatpush1.bf16.msra.mxu0 0
        %1841 = vmatprep.subr.bf16.mxu0 0
        %1842 = vmatpush1.bf16.msra.mxu0 0
        %1843 = vmatprep.subr.bf16.mxu0 0
        %1844 = vmatpush1.bf16.msra.mxu0 0
        %1845 = vmatprep.subr.bf16.mxu0 0
        %1846 = vmatpush1.bf16.msra.mxu0 0
        %1847 = vmatprep.subr.bf16.mxu0 0
        %1848 = vmatpush1.bf16.msra.mxu0 0
        %1849 = vmatprep.subr.bf16.mxu0 0
        %1850 = vmatpush1.bf16.msra.mxu0 0
        %1851 = vmatprep.subr.bf16.mxu0 0
        %1852 = vmatpush1.bf16.msra.mxu0 0
        %1853 = vmatprep.subr.bf16.mxu0 0
        %1854 = vmatpush1.bf16.msra.mxu0 0
        %1855 = vmatprep.mubr.bf16.mxu0 0
        %1856 = vmatmul.mubr.bf16.gmra.mrb[0].mxu0 %v1818
        %v1857 = vpop.f32.mrb[0].mxu0
        %v1858 = vadd.f32 0.0, %v1857
        %v1859 = vpop.f32.mrb[0].mxu0
        %v1860 = vpop.f32.mrb[0].mxu0
        %v1861 = vadd.f32 0.0, %v1860
        %v1862 = vpop.f32.mrb[0].mxu0
        %1863 = vdwg.mxu0
        %v1864 = vadd.f32 %v1806, %v1858
        %v1865 = vadd.f32 %v1807, %v1861
        %s1866 = scalar_lea.vmem %s1, 108
        %v1867 = vld [vmem:[%s1866] sm:$0xf]
        %v1868 = vrot.slane %v1523, 3
        %v1869 = vrot.slane %v1524, 3
        %v1870 = vsel %vm619, %v1868, %v1869
        %v1872 = vsel %vm290, %v1870, 0
        %v1875 = vsel %vm294, %v1867, 0
        %1877 = vmatprep.subr.bf16.mxu0 0
        %1878 = vmatpush1.bf16.msra.mxu0 %v1875
        %1879 = vmatprep.subr.bf16.mxu0 0
        %1880 = vmatpush1.bf16.msra.mxu0 0
        %1881 = vmatprep.subr.bf16.mxu0 0
        %1882 = vmatpush1.bf16.msra.mxu0 0
        %1883 = vmatprep.subr.bf16.mxu0 0
        %1884 = vmatpush1.bf16.msra.mxu0 0
        %1885 = vmatprep.subr.bf16.mxu0 0
        %1886 = vmatpush1.bf16.msra.mxu0 0
        %1887 = vmatprep.subr.bf16.mxu0 0
        %1888 = vmatpush1.bf16.msra.mxu0 0
        %1889 = vmatprep.subr.bf16.mxu0 0
        %1890 = vmatpush1.bf16.msra.mxu0 0
        %1891 = vmatprep.subr.bf16.mxu0 0
        %1892 = vmatpush1.bf16.msra.mxu0 0
        %1893 = vmatprep.subr.bf16.mxu0 0
        %1894 = vmatpush1.bf16.msra.mxu0 0
        %1895 = vmatprep.subr.bf16.mxu0 0
        %1896 = vmatpush1.bf16.msra.mxu0 0
        %1897 = vmatprep.subr.bf16.mxu0 0
        %1898 = vmatpush1.bf16.msra.mxu0 0
        %1899 = vmatprep.subr.bf16.mxu0 0
        %1900 = vmatpush1.bf16.msra.mxu0 0
        %1901 = vmatprep.subr.bf16.mxu0 0
        %1902 = vmatpush1.bf16.msra.mxu0 0
        %1903 = vmatprep.subr.bf16.mxu0 0
        %1904 = vmatpush1.bf16.msra.mxu0 0
        %1905 = vmatprep.subr.bf16.mxu0 0
        %1906 = vmatpush1.bf16.msra.mxu0 0
        %1907 = vmatprep.subr.bf16.mxu0 0
        %1908 = vmatpush1.bf16.msra.mxu0 0
        %1909 = vmatprep.mubr.bf16.mxu0 0
        %1910 = vmatmul.mubr.bf16.gmra.mrb[0].mxu0 %v1872
        %v1911 = vpop.f32.mrb[0].mxu0
        %v1912 = vadd.f32 0.0, %v1911
        %v1913 = vpop.f32.mrb[0].mxu0
        %v1914 = vpop.f32.mrb[0].mxu0
        %v1915 = vadd.f32 0.0, %v1914
        %v1916 = vpop.f32.mrb[0].mxu0
        %1917 = vdwg.mxu0
        %v1918 = vadd.f32 %v1864, %v1912
        %v1919 = vadd.f32 %v1865, %v1915
        %s1920 = sadd.s32 %s235, 4
        %s1921 = smul.u32 %s1920, 3
        %s1922 = smul.addr %s1921, 4
        %s1923 = scalar_lea.vmem %s224, %s1922
        %v1924 = vld [vmem:[%s1923] sm:$0xf]
        %v1925 = vld [vmem:[%s1923 + $0x4] sm:$0xf]
        %v1926 = vld [vmem:[%s1923 + $0x8] sm:$0x7]
        %v1927 = vunpack.c.l.bf16 %v1924
        %v1928 = vunpack.c.l.bf16 %v1925
        %v1929 = vunpack.c.l.bf16 %v1926
        %v1930 = vmul.f32 %v1927, %v254
        %v1931 = vmul.f32 %v1928, %v254
        %v1932 = vmul.f32 %v1929, %v254
        %v1933 = vadd.f32 %v1930, %v264
        %v1934 = vadd.f32 %v1931, %v264
        %v1935 = vadd.f32 %v1932, %v264
        %v1936 = vmax.f32 %v1933, 0.0
        %v1937 = vmax.f32 %v1934, 0.0
        %v1938 = vmax.f32 %v1935, 0.0
        %v1939 = vpack.c.bf16 %v1937, %v1936
        %v1940 = vpack.c.bf16 %v1938, %v1938
        %s1941 = scalar_lea.vmem %s1, 112
        %v1942 = vld [vmem:[%s1941] sm:$0xf]
        %v1944 = vsel %vm290, %v1939, 0
        %v1947 = vsel %vm294, %v1942, 0
        %1949 = vmatprep.subr.bf16.mxu0 0
        %1950 = vmatpush1.bf16.msra.mxu0 %v1947
        %1951 = vmatprep.subr.bf16.mxu0 0
        %1952 = vmatpush1.bf16.msra.mxu0 0
        %1953 = vmatprep.subr.bf16.mxu0 0
        %1954 = vmatpush1.bf16.msra.mxu0 0
        %1955 = vmatprep.subr.bf16.mxu0 0
        %1956 = vmatpush1.bf16.msra.mxu0 0
        %1957 = vmatprep.subr.bf16.mxu0 0
        %1958 = vmatpush1.bf16.msra.mxu0 0
        %1959 = vmatprep.subr.bf16.mxu0 0
        %1960 = vmatpush1.bf16.msra.mxu0 0
        %1961 = vmatprep.subr.bf16.mxu0 0
        %1962 = vmatpush1.bf16.msra.mxu0 0
        %1963 = vmatprep.subr.bf16.mxu0 0
        %1964 = vmatpush1.bf16.msra.mxu0 0
        %1965 = vmatprep.subr.bf16.mxu0 0
        %1966 = vmatpush1.bf16.msra.mxu0 0
        %1967 = vmatprep.subr.bf16.mxu0 0
        %1968 = vmatpush1.bf16.msra.mxu0 0
        %1969 = vmatprep.subr.bf16.mxu0 0
        %1970 = vmatpush1.bf16.msra.mxu0 0
        %1971 = vmatprep.subr.bf16.mxu0 0
        %1972 = vmatpush1.bf16.msra.mxu0 0
        %1973 = vmatprep.subr.bf16.mxu0 0
        %1974 = vmatpush1.bf16.msra.mxu0 0
        %1975 = vmatprep.subr.bf16.mxu0 0
        %1976 = vmatpush1.bf16.msra.mxu0 0
        %1977 = vmatprep.subr.bf16.mxu0 0
        %1978 = vmatpush1.bf16.msra.mxu0 0
        %1979 = vmatprep.subr.bf16.mxu0 0
        %1980 = vmatpush1.bf16.msra.mxu0 0
        %1981 = vmatprep.mubr.bf16.mxu0 0
        %1982 = vmatmul.mubr.bf16.gmra.mrb[0].mxu0 %v1944
        %v1983 = vpop.f32.mrb[0].mxu0
        %v1984 = vadd.f32 0.0, %v1983
        %v1985 = vpop.f32.mrb[0].mxu0
        %v1986 = vpop.f32.mrb[0].mxu0
        %v1987 = vadd.f32 0.0, %v1986
        %v1988 = vpop.f32.mrb[0].mxu0
        %1989 = vdwg.mxu0
        %v1990 = vadd.f32 %v1918, %v1984
        %v1991 = vadd.f32 %v1919, %v1987
        %s1992 = scalar_lea.vmem %s1, 116
        %v1993 = vld [vmem:[%s1992] sm:$0xf]
        %v1994 = vshrl.u32 %v1939, 16
        %v1996 = vshll.u32 %v1939, 16
        %v1998 = vrot.slane %v1996, 1
        %v1999 = vor.u32 %v1994, %v1998
        %v2001 = vshll.u32 %v1940, 16
        %v2003 = vrot.slane %v2001, 1
        %v2004 = vsel %vm277, %v1999, %v2003
        %v2006 = vsel %vm290, %v2004, 0
        %v2009 = vsel %vm294, %v1993, 0
        %2011 = vmatprep.subr.bf16.mxu0 0
        %2012 = vmatpush1.bf16.msra.mxu0 %v2009
        %2013 = vmatprep.subr.bf16.mxu0 0
        %2014 = vmatpush1.bf16.msra.mxu0 0
        %2015 = vmatprep.subr.bf16.mxu0 0
        %2016 = vmatpush1.bf16.msra.mxu0 0
        %2017 = vmatprep.subr.bf16.mxu0 0
        %2018 = vmatpush1.bf16.msra.mxu0 0
        %2019 = vmatprep.subr.bf16.mxu0 0
        %2020 = vmatpush1.bf16.msra.mxu0 0
        %2021 = vmatprep.subr.bf16.mxu0 0
        %2022 = vmatpush1.bf16.msra.mxu0 0
        %2023 = vmatprep.subr.bf16.mxu0 0
        %2024 = vmatpush1.bf16.msra.mxu0 0
        %2025 = vmatprep.subr.bf16.mxu0 0
        %2026 = vmatpush1.bf16.msra.mxu0 0
        %2027 = vmatprep.subr.bf16.mxu0 0
        %2028 = vmatpush1.bf16.msra.mxu0 0
        %2029 = vmatprep.subr.bf16.mxu0 0
        %2030 = vmatpush1.bf16.msra.mxu0 0
        %2031 = vmatprep.subr.bf16.mxu0 0
        %2032 = vmatpush1.bf16.msra.mxu0 0
        %2033 = vmatprep.subr.bf16.mxu0 0
        %2034 = vmatpush1.bf16.msra.mxu0 0
        %2035 = vmatprep.subr.bf16.mxu0 0
        %2036 = vmatpush1.bf16.msra.mxu0 0
        %2037 = vmatprep.subr.bf16.mxu0 0
        %2038 = vmatpush1.bf16.msra.mxu0 0
        %2039 = vmatprep.subr.bf16.mxu0 0
        %2040 = vmatpush1.bf16.msra.mxu0 0
        %2041 = vmatprep.subr.bf16.mxu0 0
        %2042 = vmatpush1.bf16.msra.mxu0 0
        %2043 = vmatprep.mubr.bf16.mxu0 0
        %2044 = vmatmul.mubr.bf16.gmra.mrb[0].mxu0 %v2006
        %v2045 = vpop.f32.mrb[0].mxu0
        %v2046 = vadd.f32 0.0, %v2045
        %v2047 = vpop.f32.mrb[0].mxu0
        %v2048 = vpop.f32.mrb[0].mxu0
        %v2049 = vadd.f32 0.0, %v2048
        %v2050 = vpop.f32.mrb[0].mxu0
        %2051 = vdwg.mxu0
        %v2052 = vadd.f32 %v1990, %v2046
        %v2053 = vadd.f32 %v1991, %v2049
        %s2054 = scalar_lea.vmem %s1, 120
        %v2055 = vld [vmem:[%s2054] sm:$0xf]
        %v2058 = vrot.slane %v1939, 1
        %v2059 = vrot.slane %v1940, 1
        %v2060 = vsel %vm389, %v2058, %v2059
        %v2062 = vsel %vm290, %v2060, 0
        %v2065 = vsel %vm294, %v2055, 0
        %2067 = vmatprep.subr.bf16.mxu0 0
        %2068 = vmatpush1.bf16.msra.mxu0 %v2065
        %2069 = vmatprep.subr.bf16.mxu0 0
        %2070 = vmatpush1.bf16.msra.mxu0 0
        %2071 = vmatprep.subr.bf16.mxu0 0
        %2072 = vmatpush1.bf16.msra.mxu0 0
        %2073 = vmatprep.subr.bf16.mxu0 0
        %2074 = vmatpush1.bf16.msra.mxu0 0
        %2075 = vmatprep.subr.bf16.mxu0 0
        %2076 = vmatpush1.bf16.msra.mxu0 0
        %2077 = vmatprep.subr.bf16.mxu0 0
        %2078 = vmatpush1.bf16.msra.mxu0 0
        %2079 = vmatprep.subr.bf16.mxu0 0
        %2080 = vmatpush1.bf16.msra.mxu0 0
        %2081 = vmatprep.subr.bf16.mxu0 0
        %2082 = vmatpush1.bf16.msra.mxu0 0
        %2083 = vmatprep.subr.bf16.mxu0 0
        %2084 = vmatpush1.bf16.msra.mxu0 0
        %2085 = vmatprep.subr.bf16.mxu0 0
        %2086 = vmatpush1.bf16.msra.mxu0 0
        %2087 = vmatprep.subr.bf16.mxu0 0
        %2088 = vmatpush1.bf16.msra.mxu0 0
        %2089 = vmatprep.subr.bf16.mxu0 0
        %2090 = vmatpush1.bf16.msra.mxu0 0
        %2091 = vmatprep.subr.bf16.mxu0 0
        %2092 = vmatpush1.bf16.msra.mxu0 0
        %2093 = vmatprep.subr.bf16.mxu0 0
        %2094 = vmatpush1.bf16.msra.mxu0 0
        %2095 = vmatprep.subr.bf16.mxu0 0
        %2096 = vmatpush1.bf16.msra.mxu0 0
        %2097 = vmatprep.subr.bf16.mxu0 0
        %2098 = vmatpush1.bf16.msra.mxu0 0
        %2099 = vmatprep.mubr.bf16.mxu0 0
        %2100 = vmatmul.mubr.bf16.gmra.mrb[0].mxu0 %v2062
        %v2101 = vpop.f32.mrb[0].mxu0
        %v2102 = vadd.f32 0.0, %v2101
        %v2103 = vpop.f32.mrb[0].mxu0
        %v2104 = vpop.f32.mrb[0].mxu0
        %v2105 = vadd.f32 0.0, %v2104
        %v2106 = vpop.f32.mrb[0].mxu0
        %2107 = vdwg.mxu0
        %v2108 = vadd.f32 %v2052, %v2102
        %v2109 = vadd.f32 %v2053, %v2105
        %s2110 = scalar_lea.vmem %s1, 124
        %v2111 = vld [vmem:[%s2110] sm:$0xf]
        %v2112 = vrot.slane %v1994, 1
        %v2113 = vrot.slane %v1996, 2
        %v2114 = vor.u32 %v2112, %v2113
        %v2115 = vshrl.u32 %v1940, 16
        %v2117 = vrot.slane %v2115, 1
        %v2118 = vrot.slane %v2001, 2
        %v2119 = vor.u32 %v2117, %v2118
        %v2120 = vsel %vm444, %v2114, %v2119
        %v2122 = vsel %vm290, %v2120, 0
        %v2125 = vsel %vm294, %v2111, 0
        %2127 = vmatprep.subr.bf16.mxu0 0
        %2128 = vmatpush1.bf16.msra.mxu0 %v2125
        %2129 = vmatprep.subr.bf16.mxu0 0
        %2130 = vmatpush1.bf16.msra.mxu0 0
        %2131 = vmatprep.subr.bf16.mxu0 0
        %2132 = vmatpush1.bf16.msra.mxu0 0
        %2133 = vmatprep.subr.bf16.mxu0 0
        %2134 = vmatpush1.bf16.msra.mxu0 0
        %2135 = vmatprep.subr.bf16.mxu0 0
        %2136 = vmatpush1.bf16.msra.mxu0 0
        %2137 = vmatprep.subr.bf16.mxu0 0
        %2138 = vmatpush1.bf16.msra.mxu0 0
        %2139 = vmatprep.subr.bf16.mxu0 0
        %2140 = vmatpush1.bf16.msra.mxu0 0
        %2141 = vmatprep.subr.bf16.mxu0 0
        %2142 = vmatpush1.bf16.msra.mxu0 0
        %2143 = vmatprep.subr.bf16.mxu0 0
        %2144 = vmatpush1.bf16.msra.mxu0 0
        %2145 = vmatprep.subr.bf16.mxu0 0
        %2146 = vmatpush1.bf16.msra.mxu0 0
        %2147 = vmatprep.subr.bf16.mxu0 0
        %2148 = vmatpush1.bf16.msra.mxu0 0
        %2149 = vmatprep.subr.bf16.mxu0 0
        %2150 = vmatpush1.bf16.msra.mxu0 0
        %2151 = vmatprep.subr.bf16.mxu0 0
        %2152 = vmatpush1.bf16.msra.mxu0 0
        %2153 = vmatprep.subr.bf16.mxu0 0
        %2154 = vmatpush1.bf16.msra.mxu0 0
        %2155 = vmatprep.subr.bf16.mxu0 0
        %2156 = vmatpush1.bf16.msra.mxu0 0
        %2157 = vmatprep.subr.bf16.mxu0 0
        %2158 = vmatpush1.bf16.msra.mxu0 0
        %2159 = vmatprep.mubr.bf16.mxu0 0
        %2160 = vmatmul.mubr.bf16.gmra.mrb[0].mxu0 %v2122
        %v2161 = vpop.f32.mrb[0].mxu0
        %v2162 = vadd.f32 0.0, %v2161
        %v2163 = vpop.f32.mrb[0].mxu0
        %v2164 = vpop.f32.mrb[0].mxu0
        %v2165 = vadd.f32 0.0, %v2164
        %v2166 = vpop.f32.mrb[0].mxu0
        %2167 = vdwg.mxu0
        %v2168 = vadd.f32 %v2108, %v2162
        %v2169 = vadd.f32 %v2109, %v2165
        %s2170 = scalar_lea.vmem %s1, 128
        %v2171 = vld [vmem:[%s2170] sm:$0xf]
        %v2172 = vrot.slane %v1939, 2
        %v2173 = vrot.slane %v1940, 2
        %v2174 = vsel %vm505, %v2172, %v2173
        %v2176 = vsel %vm290, %v2174, 0
        %v2179 = vsel %vm294, %v2171, 0
        %2181 = vmatprep.subr.bf16.mxu0 0
        %2182 = vmatpush1.bf16.msra.mxu0 %v2179
        %2183 = vmatprep.subr.bf16.mxu0 0
        %2184 = vmatpush1.bf16.msra.mxu0 0
        %2185 = vmatprep.subr.bf16.mxu0 0
        %2186 = vmatpush1.bf16.msra.mxu0 0
        %2187 = vmatprep.subr.bf16.mxu0 0
        %2188 = vmatpush1.bf16.msra.mxu0 0
        %2189 = vmatprep.subr.bf16.mxu0 0
        %2190 = vmatpush1.bf16.msra.mxu0 0
        %2191 = vmatprep.subr.bf16.mxu0 0
        %2192 = vmatpush1.bf16.msra.mxu0 0
        %2193 = vmatprep.subr.bf16.mxu0 0
        %2194 = vmatpush1.bf16.msra.mxu0 0
        %2195 = vmatprep.subr.bf16.mxu0 0
        %2196 = vmatpush1.bf16.msra.mxu0 0
        %2197 = vmatprep.subr.bf16.mxu0 0
        %2198 = vmatpush1.bf16.msra.mxu0 0
        %2199 = vmatprep.subr.bf16.mxu0 0
        %2200 = vmatpush1.bf16.msra.mxu0 0
        %2201 = vmatprep.subr.bf16.mxu0 0
        %2202 = vmatpush1.bf16.msra.mxu0 0
        %2203 = vmatprep.subr.bf16.mxu0 0
        %2204 = vmatpush1.bf16.msra.mxu0 0
        %2205 = vmatprep.subr.bf16.mxu0 0
        %2206 = vmatpush1.bf16.msra.mxu0 0
        %2207 = vmatprep.subr.bf16.mxu0 0
        %2208 = vmatpush1.bf16.msra.mxu0 0
        %2209 = vmatprep.subr.bf16.mxu0 0
        %2210 = vmatpush1.bf16.msra.mxu0 0
        %2211 = vmatprep.subr.bf16.mxu0 0
        %2212 = vmatpush1.bf16.msra.mxu0 0
        %2213 = vmatprep.mubr.bf16.mxu0 0
        %2214 = vmatmul.mubr.bf16.gmra.mrb[0].mxu0 %v2176
        %v2215 = vpop.f32.mrb[0].mxu0
        %v2216 = vadd.f32 0.0, %v2215
        %v2217 = vpop.f32.mrb[0].mxu0
        %v2218 = vpop.f32.mrb[0].mxu0
        %v2219 = vadd.f32 0.0, %v2218
        %v2220 = vpop.f32.mrb[0].mxu0
        %2221 = vdwg.mxu0
        %v2222 = vadd.f32 %v2168, %v2216
        %v2223 = vadd.f32 %v2169, %v2219
        %s2224 = scalar_lea.vmem %s1, 132
        %v2225 = vld [vmem:[%s2224] sm:$0xf]
        %v2226 = vrot.slane %v1994, 2
        %v2227 = vrot.slane %v1996, 3
        %v2228 = vor.u32 %v2226, %v2227
        %v2229 = vrot.slane %v2115, 2
        %v2230 = vrot.slane %v2001, 3
        %v2231 = vor.u32 %v2229, %v2230
        %v2232 = vsel %vm560, %v2228, %v2231
        %v2234 = vsel %vm290, %v2232, 0
        %v2237 = vsel %vm294, %v2225, 0
        %2239 = vmatprep.subr.bf16.mxu0 0
        %2240 = vmatpush1.bf16.msra.mxu0 %v2237
        %2241 = vmatprep.subr.bf16.mxu0 0
        %2242 = vmatpush1.bf16.msra.mxu0 0
        %2243 = vmatprep.subr.bf16.mxu0 0
        %2244 = vmatpush1.bf16.msra.mxu0 0
        %2245 = vmatprep.subr.bf16.mxu0 0
        %2246 = vmatpush1.bf16.msra.mxu0 0
        %2247 = vmatprep.subr.bf16.mxu0 0
        %2248 = vmatpush1.bf16.msra.mxu0 0
        %2249 = vmatprep.subr.bf16.mxu0 0
        %2250 = vmatpush1.bf16.msra.mxu0 0
        %2251 = vmatprep.subr.bf16.mxu0 0
        %2252 = vmatpush1.bf16.msra.mxu0 0
        %2253 = vmatprep.subr.bf16.mxu0 0
        %2254 = vmatpush1.bf16.msra.mxu0 0
        %2255 = vmatprep.subr.bf16.mxu0 0
        %2256 = vmatpush1.bf16.msra.mxu0 0
        %2257 = vmatprep.subr.bf16.mxu0 0
        %2258 = vmatpush1.bf16.msra.mxu0 0
        %2259 = vmatprep.subr.bf16.mxu0 0
        %2260 = vmatpush1.bf16.msra.mxu0 0
        %2261 = vmatprep.subr.bf16.mxu0 0
        %2262 = vmatpush1.bf16.msra.mxu0 0
        %2263 = vmatprep.subr.bf16.mxu0 0
        %2264 = vmatpush1.bf16.msra.mxu0 0
        %2265 = vmatprep.subr.bf16.mxu0 0
        %2266 = vmatpush1.bf16.msra.mxu0 0
        %2267 = vmatprep.subr.bf16.mxu0 0
        %2268 = vmatpush1.bf16.msra.mxu0 0
        %2269 = vmatprep.subr.bf16.mxu0 0
        %2270 = vmatpush1.bf16.msra.mxu0 0
        %2271 = vmatprep.mubr.bf16.mxu0 0
        %2272 = vmatmul.mubr.bf16.gmra.mrb[0].mxu0 %v2234
        %v2273 = vpop.f32.mrb[0].mxu0
        %v2274 = vadd.f32 0.0, %v2273
        %v2275 = vpop.f32.mrb[0].mxu0
        %v2276 = vpop.f32.mrb[0].mxu0
        %v2277 = vadd.f32 0.0, %v2276
        %v2278 = vpop.f32.mrb[0].mxu0
        %2279 = vdwg.mxu0
        %v2280 = vadd.f32 %v2222, %v2274
        %v2281 = vadd.f32 %v2223, %v2277
        %s2282 = scalar_lea.vmem %s1, 136
        %v2283 = vld [vmem:[%s2282] sm:$0xf]
        %v2284 = vrot.slane %v1939, 3
        %v2285 = vrot.slane %v1940, 3
        %v2286 = vsel %vm619, %v2284, %v2285
        %v2288 = vsel %vm290, %v2286, 0
        %v2291 = vsel %vm294, %v2283, 0
        %2293 = vmatprep.subr.bf16.mxu0 0
        %2294 = vmatpush1.bf16.msra.mxu0 %v2291
        %2295 = vmatprep.subr.bf16.mxu0 0
        %2296 = vmatpush1.bf16.msra.mxu0 0
        %2297 = vmatprep.subr.bf16.mxu0 0
        %2298 = vmatpush1.bf16.msra.mxu0 0
        %2299 = vmatprep.subr.bf16.mxu0 0
        %2300 = vmatpush1.bf16.msra.mxu0 0
        %2301 = vmatprep.subr.bf16.mxu0 0
        %2302 = vmatpush1.bf16.msra.mxu0 0
        %2303 = vmatprep.subr.bf16.mxu0 0
        %2304 = vmatpush1.bf16.msra.mxu0 0
        %2305 = vmatprep.subr.bf16.mxu0 0
        %2306 = vmatpush1.bf16.msra.mxu0 0
        %2307 = vmatprep.subr.bf16.mxu0 0
        %2308 = vmatpush1.bf16.msra.mxu0 0
        %2309 = vmatprep.subr.bf16.mxu0 0
        %2310 = vmatpush1.bf16.msra.mxu0 0
        %2311 = vmatprep.subr.bf16.mxu0 0
        %2312 = vmatpush1.bf16.msra.mxu0 0
        %2313 = vmatprep.subr.bf16.mxu0 0
        %2314 = vmatpush1.bf16.msra.mxu0 0
        %2315 = vmatprep.subr.bf16.mxu0 0
        %2316 = vmatpush1.bf16.msra.mxu0 0
        %2317 = vmatprep.subr.bf16.mxu0 0
        %2318 = vmatpush1.bf16.msra.mxu0 0
        %2319 = vmatprep.subr.bf16.mxu0 0
        %2320 = vmatpush1.bf16.msra.mxu0 0
        %2321 = vmatprep.subr.bf16.mxu0 0
        %2322 = vmatpush1.bf16.msra.mxu0 0
        %2323 = vmatprep.subr.bf16.mxu0 0
        %2324 = vmatpush1.bf16.msra.mxu0 0
        %2325 = vmatprep.mubr.bf16.mxu0 0
        %2326 = vmatmul.mubr.bf16.gmra.mrb[0].mxu0 %v2288
        %v2327 = vpop.f32.mrb[0].mxu0
        %v2328 = vadd.f32 0.0, %v2327
        %v2329 = vpop.f32.mrb[0].mxu0
        %v2330 = vpop.f32.mrb[0].mxu0
        %v2331 = vadd.f32 0.0, %v2330
        %v2332 = vpop.f32.mrb[0].mxu0
        %2333 = vdwg.mxu0
        %v2334 = vadd.f32 %v2280, %v2328
        %v2335 = vadd.f32 %v2281, %v2331
        %s2336 = sadd.s32 %s235, 5
        %s2337 = smul.u32 %s2336, 3
        %s2338 = smul.addr %s2337, 4
        %s2339 = scalar_lea.vmem %s224, %s2338
        %v2340 = vld [vmem:[%s2339] sm:$0xf]
        %v2341 = vld [vmem:[%s2339 + $0x4] sm:$0xf]
        %v2342 = vld [vmem:[%s2339 + $0x8] sm:$0x7]
        %v2343 = vunpack.c.l.bf16 %v2340
        %v2344 = vunpack.c.l.bf16 %v2341
        %v2345 = vunpack.c.l.bf16 %v2342
        %v2346 = vmul.f32 %v2343, %v254
        %v2347 = vmul.f32 %v2344, %v254
        %v2348 = vmul.f32 %v2345, %v254
        %v2349 = vadd.f32 %v2346, %v264
        %v2350 = vadd.f32 %v2347, %v264
        %v2351 = vadd.f32 %v2348, %v264
        %v2352 = vmax.f32 %v2349, 0.0
        %v2353 = vmax.f32 %v2350, 0.0
        %v2354 = vmax.f32 %v2351, 0.0
        %v2355 = vpack.c.bf16 %v2353, %v2352
        %v2356 = vpack.c.bf16 %v2354, %v2354
        %s2357 = scalar_lea.vmem %s1, 140
        %v2358 = vld [vmem:[%s2357] sm:$0xf]
        %v2360 = vsel %vm290, %v2355, 0
        %v2363 = vsel %vm294, %v2358, 0
        %2365 = vmatprep.subr.bf16.mxu0 0
        %2366 = vmatpush1.bf16.msra.mxu0 %v2363
        %2367 = vmatprep.subr.bf16.mxu0 0
        %2368 = vmatpush1.bf16.msra.mxu0 0
        %2369 = vmatprep.subr.bf16.mxu0 0
        %2370 = vmatpush1.bf16.msra.mxu0 0
        %2371 = vmatprep.subr.bf16.mxu0 0
        %2372 = vmatpush1.bf16.msra.mxu0 0
        %2373 = vmatprep.subr.bf16.mxu0 0
        %2374 = vmatpush1.bf16.msra.mxu0 0
        %2375 = vmatprep.subr.bf16.mxu0 0
        %2376 = vmatpush1.bf16.msra.mxu0 0
        %2377 = vmatprep.subr.bf16.mxu0 0
        %2378 = vmatpush1.bf16.msra.mxu0 0
        %2379 = vmatprep.subr.bf16.mxu0 0
        %2380 = vmatpush1.bf16.msra.mxu0 0
        %2381 = vmatprep.subr.bf16.mxu0 0
        %2382 = vmatpush1.bf16.msra.mxu0 0
        %2383 = vmatprep.subr.bf16.mxu0 0
        %2384 = vmatpush1.bf16.msra.mxu0 0
        %2385 = vmatprep.subr.bf16.mxu0 0
        %2386 = vmatpush1.bf16.msra.mxu0 0
        %2387 = vmatprep.subr.bf16.mxu0 0
        %2388 = vmatpush1.bf16.msra.mxu0 0
        %2389 = vmatprep.subr.bf16.mxu0 0
        %2390 = vmatpush1.bf16.msra.mxu0 0
        %2391 = vmatprep.subr.bf16.mxu0 0
        %2392 = vmatpush1.bf16.msra.mxu0 0
        %2393 = vmatprep.subr.bf16.mxu0 0
        %2394 = vmatpush1.bf16.msra.mxu0 0
        %2395 = vmatprep.subr.bf16.mxu0 0
        %2396 = vmatpush1.bf16.msra.mxu0 0
        %2397 = vmatprep.mubr.bf16.mxu0 0
        %2398 = vmatmul.mubr.bf16.gmra.mrb[0].mxu0 %v2360
        %v2399 = vpop.f32.mrb[0].mxu0
        %v2400 = vadd.f32 0.0, %v2399
        %v2401 = vpop.f32.mrb[0].mxu0
        %v2402 = vpop.f32.mrb[0].mxu0
        %v2403 = vadd.f32 0.0, %v2402
        %v2404 = vpop.f32.mrb[0].mxu0
        %2405 = vdwg.mxu0
        %v2406 = vadd.f32 %v2334, %v2400
        %v2407 = vadd.f32 %v2335, %v2403
        %s2408 = scalar_lea.vmem %s1, 144
        %v2409 = vld [vmem:[%s2408] sm:$0xf]
        %v2410 = vshrl.u32 %v2355, 16
        %v2412 = vshll.u32 %v2355, 16
        %v2414 = vrot.slane %v2412, 1
        %v2415 = vor.u32 %v2410, %v2414
        %v2417 = vshll.u32 %v2356, 16
        %v2419 = vrot.slane %v2417, 1
        %v2420 = vsel %vm277, %v2415, %v2419
        %v2422 = vsel %vm290, %v2420, 0
        %v2425 = vsel %vm294, %v2409, 0
        %2427 = vmatprep.subr.bf16.mxu0 0
        %2428 = vmatpush1.bf16.msra.mxu0 %v2425
        %2429 = vmatprep.subr.bf16.mxu0 0
        %2430 = vmatpush1.bf16.msra.mxu0 0
        %2431 = vmatprep.subr.bf16.mxu0 0
        %2432 = vmatpush1.bf16.msra.mxu0 0
        %2433 = vmatprep.subr.bf16.mxu0 0
        %2434 = vmatpush1.bf16.msra.mxu0 0
        %2435 = vmatprep.subr.bf16.mxu0 0
        %2436 = vmatpush1.bf16.msra.mxu0 0
        %2437 = vmatprep.subr.bf16.mxu0 0
        %2438 = vmatpush1.bf16.msra.mxu0 0
        %2439 = vmatprep.subr.bf16.mxu0 0
        %2440 = vmatpush1.bf16.msra.mxu0 0
        %2441 = vmatprep.subr.bf16.mxu0 0
        %2442 = vmatpush1.bf16.msra.mxu0 0
        %2443 = vmatprep.subr.bf16.mxu0 0
        %2444 = vmatpush1.bf16.msra.mxu0 0
        %2445 = vmatprep.subr.bf16.mxu0 0
        %2446 = vmatpush1.bf16.msra.mxu0 0
        %2447 = vmatprep.subr.bf16.mxu0 0
        %2448 = vmatpush1.bf16.msra.mxu0 0
        %2449 = vmatprep.subr.bf16.mxu0 0
        %2450 = vmatpush1.bf16.msra.mxu0 0
        %2451 = vmatprep.subr.bf16.mxu0 0
        %2452 = vmatpush1.bf16.msra.mxu0 0
        %2453 = vmatprep.subr.bf16.mxu0 0
        %2454 = vmatpush1.bf16.msra.mxu0 0
        %2455 = vmatprep.subr.bf16.mxu0 0
        %2456 = vmatpush1.bf16.msra.mxu0 0
        %2457 = vmatprep.subr.bf16.mxu0 0
        %2458 = vmatpush1.bf16.msra.mxu0 0
        %2459 = vmatprep.mubr.bf16.mxu0 0
        %2460 = vmatmul.mubr.bf16.gmra.mrb[0].mxu0 %v2422
        %v2461 = vpop.f32.mrb[0].mxu0
        %v2462 = vadd.f32 0.0, %v2461
        %v2463 = vpop.f32.mrb[0].mxu0
        %v2464 = vpop.f32.mrb[0].mxu0
        %v2465 = vadd.f32 0.0, %v2464
        %v2466 = vpop.f32.mrb[0].mxu0
        %2467 = vdwg.mxu0
        %v2468 = vadd.f32 %v2406, %v2462
        %v2469 = vadd.f32 %v2407, %v2465
        %s2470 = scalar_lea.vmem %s1, 148
        %v2471 = vld [vmem:[%s2470] sm:$0xf]
        %v2474 = vrot.slane %v2355, 1
        %v2475 = vrot.slane %v2356, 1
        %v2476 = vsel %vm389, %v2474, %v2475
        %v2478 = vsel %vm290, %v2476, 0
        %v2481 = vsel %vm294, %v2471, 0
        %2483 = vmatprep.subr.bf16.mxu0 0
        %2484 = vmatpush1.bf16.msra.mxu0 %v2481
        %2485 = vmatprep.subr.bf16.mxu0 0
        %2486 = vmatpush1.bf16.msra.mxu0 0
        %2487 = vmatprep.subr.bf16.mxu0 0
        %2488 = vmatpush1.bf16.msra.mxu0 0
        %2489 = vmatprep.subr.bf16.mxu0 0
        %2490 = vmatpush1.bf16.msra.mxu0 0
        %2491 = vmatprep.subr.bf16.mxu0 0
        %2492 = vmatpush1.bf16.msra.mxu0 0
        %2493 = vmatprep.subr.bf16.mxu0 0
        %2494 = vmatpush1.bf16.msra.mxu0 0
        %2495 = vmatprep.subr.bf16.mxu0 0
        %2496 = vmatpush1.bf16.msra.mxu0 0
        %2497 = vmatprep.subr.bf16.mxu0 0
        %2498 = vmatpush1.bf16.msra.mxu0 0
        %2499 = vmatprep.subr.bf16.mxu0 0
        %2500 = vmatpush1.bf16.msra.mxu0 0
        %2501 = vmatprep.subr.bf16.mxu0 0
        %2502 = vmatpush1.bf16.msra.mxu0 0
        %2503 = vmatprep.subr.bf16.mxu0 0
        %2504 = vmatpush1.bf16.msra.mxu0 0
        %2505 = vmatprep.subr.bf16.mxu0 0
        %2506 = vmatpush1.bf16.msra.mxu0 0
        %2507 = vmatprep.subr.bf16.mxu0 0
        %2508 = vmatpush1.bf16.msra.mxu0 0
        %2509 = vmatprep.subr.bf16.mxu0 0
        %2510 = vmatpush1.bf16.msra.mxu0 0
        %2511 = vmatprep.subr.bf16.mxu0 0
        %2512 = vmatpush1.bf16.msra.mxu0 0
        %2513 = vmatprep.subr.bf16.mxu0 0
        %2514 = vmatpush1.bf16.msra.mxu0 0
        %2515 = vmatprep.mubr.bf16.mxu0 0
        %2516 = vmatmul.mubr.bf16.gmra.mrb[0].mxu0 %v2478
        %v2517 = vpop.f32.mrb[0].mxu0
        %v2518 = vadd.f32 0.0, %v2517
        %v2519 = vpop.f32.mrb[0].mxu0
        %v2520 = vpop.f32.mrb[0].mxu0
        %v2521 = vadd.f32 0.0, %v2520
        %v2522 = vpop.f32.mrb[0].mxu0
        %2523 = vdwg.mxu0
        %v2524 = vadd.f32 %v2468, %v2518
        %v2525 = vadd.f32 %v2469, %v2521
        %s2526 = scalar_lea.vmem %s1, 152
        %v2527 = vld [vmem:[%s2526] sm:$0xf]
        %v2528 = vrot.slane %v2410, 1
        %v2529 = vrot.slane %v2412, 2
        %v2530 = vor.u32 %v2528, %v2529
        %v2531 = vshrl.u32 %v2356, 16
        %v2533 = vrot.slane %v2531, 1
        %v2534 = vrot.slane %v2417, 2
        %v2535 = vor.u32 %v2533, %v2534
        %v2536 = vsel %vm444, %v2530, %v2535
        %v2538 = vsel %vm290, %v2536, 0
        %v2541 = vsel %vm294, %v2527, 0
        %2543 = vmatprep.subr.bf16.mxu0 0
        %2544 = vmatpush1.bf16.msra.mxu0 %v2541
        %2545 = vmatprep.subr.bf16.mxu0 0
        %2546 = vmatpush1.bf16.msra.mxu0 0
        %2547 = vmatprep.subr.bf16.mxu0 0
        %2548 = vmatpush1.bf16.msra.mxu0 0
        %2549 = vmatprep.subr.bf16.mxu0 0
        %2550 = vmatpush1.bf16.msra.mxu0 0
        %2551 = vmatprep.subr.bf16.mxu0 0
        %2552 = vmatpush1.bf16.msra.mxu0 0
        %2553 = vmatprep.subr.bf16.mxu0 0
        %2554 = vmatpush1.bf16.msra.mxu0 0
        %2555 = vmatprep.subr.bf16.mxu0 0
        %2556 = vmatpush1.bf16.msra.mxu0 0
        %2557 = vmatprep.subr.bf16.mxu0 0
        %2558 = vmatpush1.bf16.msra.mxu0 0
        %2559 = vmatprep.subr.bf16.mxu0 0
        %2560 = vmatpush1.bf16.msra.mxu0 0
        %2561 = vmatprep.subr.bf16.mxu0 0
        %2562 = vmatpush1.bf16.msra.mxu0 0
        %2563 = vmatprep.subr.bf16.mxu0 0
        %2564 = vmatpush1.bf16.msra.mxu0 0
        %2565 = vmatprep.subr.bf16.mxu0 0
        %2566 = vmatpush1.bf16.msra.mxu0 0
        %2567 = vmatprep.subr.bf16.mxu0 0
        %2568 = vmatpush1.bf16.msra.mxu0 0
        %2569 = vmatprep.subr.bf16.mxu0 0
        %2570 = vmatpush1.bf16.msra.mxu0 0
        %2571 = vmatprep.subr.bf16.mxu0 0
        %2572 = vmatpush1.bf16.msra.mxu0 0
        %2573 = vmatprep.subr.bf16.mxu0 0
        %2574 = vmatpush1.bf16.msra.mxu0 0
        %2575 = vmatprep.mubr.bf16.mxu0 0
        %2576 = vmatmul.mubr.bf16.gmra.mrb[0].mxu0 %v2538
        %v2577 = vpop.f32.mrb[0].mxu0
        %v2578 = vadd.f32 0.0, %v2577
        %v2579 = vpop.f32.mrb[0].mxu0
        %v2580 = vpop.f32.mrb[0].mxu0
        %v2581 = vadd.f32 0.0, %v2580
        %v2582 = vpop.f32.mrb[0].mxu0
        %2583 = vdwg.mxu0
        %v2584 = vadd.f32 %v2524, %v2578
        %v2585 = vadd.f32 %v2525, %v2581
        %s2586 = scalar_lea.vmem %s1, 156
        %v2587 = vld [vmem:[%s2586] sm:$0xf]
        %v2588 = vrot.slane %v2355, 2
        %v2589 = vrot.slane %v2356, 2
        %v2590 = vsel %vm505, %v2588, %v2589
        %v2592 = vsel %vm290, %v2590, 0
        %v2595 = vsel %vm294, %v2587, 0
        %2597 = vmatprep.subr.bf16.mxu0 0
        %2598 = vmatpush1.bf16.msra.mxu0 %v2595
        %2599 = vmatprep.subr.bf16.mxu0 0
        %2600 = vmatpush1.bf16.msra.mxu0 0
        %2601 = vmatprep.subr.bf16.mxu0 0
        %2602 = vmatpush1.bf16.msra.mxu0 0
        %2603 = vmatprep.subr.bf16.mxu0 0
        %2604 = vmatpush1.bf16.msra.mxu0 0
        %2605 = vmatprep.subr.bf16.mxu0 0
        %2606 = vmatpush1.bf16.msra.mxu0 0
        %2607 = vmatprep.subr.bf16.mxu0 0
        %2608 = vmatpush1.bf16.msra.mxu0 0
        %2609 = vmatprep.subr.bf16.mxu0 0
        %2610 = vmatpush1.bf16.msra.mxu0 0
        %2611 = vmatprep.subr.bf16.mxu0 0
        %2612 = vmatpush1.bf16.msra.mxu0 0
        %2613 = vmatprep.subr.bf16.mxu0 0
        %2614 = vmatpush1.bf16.msra.mxu0 0
        %2615 = vmatprep.subr.bf16.mxu0 0
        %2616 = vmatpush1.bf16.msra.mxu0 0
        %2617 = vmatprep.subr.bf16.mxu0 0
        %2618 = vmatpush1.bf16.msra.mxu0 0
        %2619 = vmatprep.subr.bf16.mxu0 0
        %2620 = vmatpush1.bf16.msra.mxu0 0
        %2621 = vmatprep.subr.bf16.mxu0 0
        %2622 = vmatpush1.bf16.msra.mxu0 0
        %2623 = vmatprep.subr.bf16.mxu0 0
        %2624 = vmatpush1.bf16.msra.mxu0 0
        %2625 = vmatprep.subr.bf16.mxu0 0
        %2626 = vmatpush1.bf16.msra.mxu0 0
        %2627 = vmatprep.subr.bf16.mxu0 0
        %2628 = vmatpush1.bf16.msra.mxu0 0
        %2629 = vmatprep.mubr.bf16.mxu0 0
        %2630 = vmatmul.mubr.bf16.gmra.mrb[0].mxu0 %v2592
        %v2631 = vpop.f32.mrb[0].mxu0
        %v2632 = vadd.f32 0.0, %v2631
        %v2633 = vpop.f32.mrb[0].mxu0
        %v2634 = vpop.f32.mrb[0].mxu0
        %v2635 = vadd.f32 0.0, %v2634
        %v2636 = vpop.f32.mrb[0].mxu0
        %2637 = vdwg.mxu0
        %v2638 = vadd.f32 %v2584, %v2632
        %v2639 = vadd.f32 %v2585, %v2635
        %s2640 = scalar_lea.vmem %s1, 160
        %v2641 = vld [vmem:[%s2640] sm:$0xf]
        %v2642 = vrot.slane %v2410, 2
        %v2643 = vrot.slane %v2412, 3
        %v2644 = vor.u32 %v2642, %v2643
        %v2645 = vrot.slane %v2531, 2
        %v2646 = vrot.slane %v2417, 3
        %v2647 = vor.u32 %v2645, %v2646
        %v2648 = vsel %vm560, %v2644, %v2647
        %v2650 = vsel %vm290, %v2648, 0
        %v2653 = vsel %vm294, %v2641, 0
        %2655 = vmatprep.subr.bf16.mxu0 0
        %2656 = vmatpush1.bf16.msra.mxu0 %v2653
        %2657 = vmatprep.subr.bf16.mxu0 0
        %2658 = vmatpush1.bf16.msra.mxu0 0
        %2659 = vmatprep.subr.bf16.mxu0 0
        %2660 = vmatpush1.bf16.msra.mxu0 0
        %2661 = vmatprep.subr.bf16.mxu0 0
        %2662 = vmatpush1.bf16.msra.mxu0 0
        %2663 = vmatprep.subr.bf16.mxu0 0
        %2664 = vmatpush1.bf16.msra.mxu0 0
        %2665 = vmatprep.subr.bf16.mxu0 0
        %2666 = vmatpush1.bf16.msra.mxu0 0
        %2667 = vmatprep.subr.bf16.mxu0 0
        %2668 = vmatpush1.bf16.msra.mxu0 0
        %2669 = vmatprep.subr.bf16.mxu0 0
        %2670 = vmatpush1.bf16.msra.mxu0 0
        %2671 = vmatprep.subr.bf16.mxu0 0
        %2672 = vmatpush1.bf16.msra.mxu0 0
        %2673 = vmatprep.subr.bf16.mxu0 0
        %2674 = vmatpush1.bf16.msra.mxu0 0
        %2675 = vmatprep.subr.bf16.mxu0 0
        %2676 = vmatpush1.bf16.msra.mxu0 0
        %2677 = vmatprep.subr.bf16.mxu0 0
        %2678 = vmatpush1.bf16.msra.mxu0 0
        %2679 = vmatprep.subr.bf16.mxu0 0
        %2680 = vmatpush1.bf16.msra.mxu0 0
        %2681 = vmatprep.subr.bf16.mxu0 0
        %2682 = vmatpush1.bf16.msra.mxu0 0
        %2683 = vmatprep.subr.bf16.mxu0 0
        %2684 = vmatpush1.bf16.msra.mxu0 0
        %2685 = vmatprep.subr.bf16.mxu0 0
        %2686 = vmatpush1.bf16.msra.mxu0 0
        %2687 = vmatprep.mubr.bf16.mxu0 0
        %2688 = vmatmul.mubr.bf16.gmra.mrb[0].mxu0 %v2650
        %v2689 = vpop.f32.mrb[0].mxu0
        %v2690 = vadd.f32 0.0, %v2689
        %v2691 = vpop.f32.mrb[0].mxu0
        %v2692 = vpop.f32.mrb[0].mxu0
        %v2693 = vadd.f32 0.0, %v2692
        %v2694 = vpop.f32.mrb[0].mxu0
        %2695 = vdwg.mxu0
        %v2696 = vadd.f32 %v2638, %v2690
        %v2697 = vadd.f32 %v2639, %v2693
        %s2698 = scalar_lea.vmem %s1, 164
        %v2699 = vld [vmem:[%s2698] sm:$0xf]
        %v2700 = vrot.slane %v2355, 3
        %v2701 = vrot.slane %v2356, 3
        %v2702 = vsel %vm619, %v2700, %v2701
        %v2704 = vsel %vm290, %v2702, 0
        %v2707 = vsel %vm294, %v2699, 0
        %2709 = vmatprep.subr.bf16.mxu0 0
        %2710 = vmatpush1.bf16.msra.mxu0 %v2707
        %2711 = vmatprep.subr.bf16.mxu0 0
        %2712 = vmatpush1.bf16.msra.mxu0 0
        %2713 = vmatprep.subr.bf16.mxu0 0
        %2714 = vmatpush1.bf16.msra.mxu0 0
        %2715 = vmatprep.subr.bf16.mxu0 0
        %2716 = vmatpush1.bf16.msra.mxu0 0
        %2717 = vmatprep.subr.bf16.mxu0 0
        %2718 = vmatpush1.bf16.msra.mxu0 0
        %2719 = vmatprep.subr.bf16.mxu0 0
        %2720 = vmatpush1.bf16.msra.mxu0 0
        %2721 = vmatprep.subr.bf16.mxu0 0
        %2722 = vmatpush1.bf16.msra.mxu0 0
        %2723 = vmatprep.subr.bf16.mxu0 0
        %2724 = vmatpush1.bf16.msra.mxu0 0
        %2725 = vmatprep.subr.bf16.mxu0 0
        %2726 = vmatpush1.bf16.msra.mxu0 0
        %2727 = vmatprep.subr.bf16.mxu0 0
        %2728 = vmatpush1.bf16.msra.mxu0 0
        %2729 = vmatprep.subr.bf16.mxu0 0
        %2730 = vmatpush1.bf16.msra.mxu0 0
        %2731 = vmatprep.subr.bf16.mxu0 0
        %2732 = vmatpush1.bf16.msra.mxu0 0
        %2733 = vmatprep.subr.bf16.mxu0 0
        %2734 = vmatpush1.bf16.msra.mxu0 0
        %2735 = vmatprep.subr.bf16.mxu0 0
        %2736 = vmatpush1.bf16.msra.mxu0 0
        %2737 = vmatprep.subr.bf16.mxu0 0
        %2738 = vmatpush1.bf16.msra.mxu0 0
        %2739 = vmatprep.subr.bf16.mxu0 0
        %2740 = vmatpush1.bf16.msra.mxu0 0
        %2741 = vmatprep.mubr.bf16.mxu0 0
        %2742 = vmatmul.mubr.bf16.gmra.mrb[0].mxu0 %v2704
        %v2743 = vpop.f32.mrb[0].mxu0
        %v2744 = vadd.f32 0.0, %v2743
        %v2745 = vpop.f32.mrb[0].mxu0
        %v2746 = vpop.f32.mrb[0].mxu0
        %v2747 = vadd.f32 0.0, %v2746
        %v2748 = vpop.f32.mrb[0].mxu0
        %2749 = vdwg.mxu0
        %v2750 = vadd.f32 %v2696, %v2744
        %v2751 = vadd.f32 %v2697, %v2747
        %s2752 = sadd.s32 %s235, 6
        %s2753 = smul.u32 %s2752, 3
        %s2754 = smul.addr %s2753, 4
        %s2755 = scalar_lea.vmem %s224, %s2754
        %v2756 = vld [vmem:[%s2755] sm:$0xf]
        %v2757 = vld [vmem:[%s2755 + $0x4] sm:$0xf]
        %v2758 = vld [vmem:[%s2755 + $0x8] sm:$0x7]
        %v2759 = vunpack.c.l.bf16 %v2756
        %v2760 = vunpack.c.l.bf16 %v2757
        %v2761 = vunpack.c.l.bf16 %v2758
        %v2762 = vmul.f32 %v2759, %v254
        %v2763 = vmul.f32 %v2760, %v254
        %v2764 = vmul.f32 %v2761, %v254
        %v2765 = vadd.f32 %v2762, %v264
        %v2766 = vadd.f32 %v2763, %v264
        %v2767 = vadd.f32 %v2764, %v264
        %v2768 = vmax.f32 %v2765, 0.0
        %v2769 = vmax.f32 %v2766, 0.0
        %v2770 = vmax.f32 %v2767, 0.0
        %v2771 = vpack.c.bf16 %v2769, %v2768
        %v2772 = vpack.c.bf16 %v2770, %v2770
        %s2773 = scalar_lea.vmem %s1, 168
        %v2774 = vld [vmem:[%s2773] sm:$0xf]
        %v2776 = vsel %vm290, %v2771, 0
        %v2779 = vsel %vm294, %v2774, 0
        %2781 = vmatprep.subr.bf16.mxu0 0
        %2782 = vmatpush1.bf16.msra.mxu0 %v2779
        %2783 = vmatprep.subr.bf16.mxu0 0
        %2784 = vmatpush1.bf16.msra.mxu0 0
        %2785 = vmatprep.subr.bf16.mxu0 0
        %2786 = vmatpush1.bf16.msra.mxu0 0
        %2787 = vmatprep.subr.bf16.mxu0 0
        %2788 = vmatpush1.bf16.msra.mxu0 0
        %2789 = vmatprep.subr.bf16.mxu0 0
        %2790 = vmatpush1.bf16.msra.mxu0 0
        %2791 = vmatprep.subr.bf16.mxu0 0
        %2792 = vmatpush1.bf16.msra.mxu0 0
        %2793 = vmatprep.subr.bf16.mxu0 0
        %2794 = vmatpush1.bf16.msra.mxu0 0
        %2795 = vmatprep.subr.bf16.mxu0 0
        %2796 = vmatpush1.bf16.msra.mxu0 0
        %2797 = vmatprep.subr.bf16.mxu0 0
        %2798 = vmatpush1.bf16.msra.mxu0 0
        %2799 = vmatprep.subr.bf16.mxu0 0
        %2800 = vmatpush1.bf16.msra.mxu0 0
        %2801 = vmatprep.subr.bf16.mxu0 0
        %2802 = vmatpush1.bf16.msra.mxu0 0
        %2803 = vmatprep.subr.bf16.mxu0 0
        %2804 = vmatpush1.bf16.msra.mxu0 0
        %2805 = vmatprep.subr.bf16.mxu0 0
        %2806 = vmatpush1.bf16.msra.mxu0 0
        %2807 = vmatprep.subr.bf16.mxu0 0
        %2808 = vmatpush1.bf16.msra.mxu0 0
        %2809 = vmatprep.subr.bf16.mxu0 0
        %2810 = vmatpush1.bf16.msra.mxu0 0
        %2811 = vmatprep.subr.bf16.mxu0 0
        %2812 = vmatpush1.bf16.msra.mxu0 0
        %2813 = vmatprep.mubr.bf16.mxu0 0
        %2814 = vmatmul.mubr.bf16.gmra.mrb[0].mxu0 %v2776
        %v2815 = vpop.f32.mrb[0].mxu0
        %v2816 = vadd.f32 0.0, %v2815
        %v2817 = vpop.f32.mrb[0].mxu0
        %v2818 = vpop.f32.mrb[0].mxu0
        %v2819 = vadd.f32 0.0, %v2818
        %v2820 = vpop.f32.mrb[0].mxu0
        %2821 = vdwg.mxu0
        %v2822 = vadd.f32 %v2750, %v2816
        %v2823 = vadd.f32 %v2751, %v2819
        %s2824 = scalar_lea.vmem %s1, 172
        %v2825 = vld [vmem:[%s2824] sm:$0xf]
        %v2826 = vshrl.u32 %v2771, 16
        %v2828 = vshll.u32 %v2771, 16
        %v2830 = vrot.slane %v2828, 1
        %v2831 = vor.u32 %v2826, %v2830
        %v2833 = vshll.u32 %v2772, 16
        %v2835 = vrot.slane %v2833, 1
        %v2836 = vsel %vm277, %v2831, %v2835
        %v2838 = vsel %vm290, %v2836, 0
        %v2841 = vsel %vm294, %v2825, 0
        %2843 = vmatprep.subr.bf16.mxu0 0
        %2844 = vmatpush1.bf16.msra.mxu0 %v2841
        %2845 = vmatprep.subr.bf16.mxu0 0
        %2846 = vmatpush1.bf16.msra.mxu0 0
        %2847 = vmatprep.subr.bf16.mxu0 0
        %2848 = vmatpush1.bf16.msra.mxu0 0
        %2849 = vmatprep.subr.bf16.mxu0 0
        %2850 = vmatpush1.bf16.msra.mxu0 0
        %2851 = vmatprep.subr.bf16.mxu0 0
        %2852 = vmatpush1.bf16.msra.mxu0 0
        %2853 = vmatprep.subr.bf16.mxu0 0
        %2854 = vmatpush1.bf16.msra.mxu0 0
        %2855 = vmatprep.subr.bf16.mxu0 0
        %2856 = vmatpush1.bf16.msra.mxu0 0
        %2857 = vmatprep.subr.bf16.mxu0 0
        %2858 = vmatpush1.bf16.msra.mxu0 0
        %2859 = vmatprep.subr.bf16.mxu0 0
        %2860 = vmatpush1.bf16.msra.mxu0 0
        %2861 = vmatprep.subr.bf16.mxu0 0
        %2862 = vmatpush1.bf16.msra.mxu0 0
        %2863 = vmatprep.subr.bf16.mxu0 0
        %2864 = vmatpush1.bf16.msra.mxu0 0
        %2865 = vmatprep.subr.bf16.mxu0 0
        %2866 = vmatpush1.bf16.msra.mxu0 0
        %2867 = vmatprep.subr.bf16.mxu0 0
        %2868 = vmatpush1.bf16.msra.mxu0 0
        %2869 = vmatprep.subr.bf16.mxu0 0
        %2870 = vmatpush1.bf16.msra.mxu0 0
        %2871 = vmatprep.subr.bf16.mxu0 0
        %2872 = vmatpush1.bf16.msra.mxu0 0
        %2873 = vmatprep.subr.bf16.mxu0 0
        %2874 = vmatpush1.bf16.msra.mxu0 0
        %2875 = vmatprep.mubr.bf16.mxu0 0
        %2876 = vmatmul.mubr.bf16.gmra.mrb[0].mxu0 %v2838
        %v2877 = vpop.f32.mrb[0].mxu0
        %v2878 = vadd.f32 0.0, %v2877
        %v2879 = vpop.f32.mrb[0].mxu0
        %v2880 = vpop.f32.mrb[0].mxu0
        %v2881 = vadd.f32 0.0, %v2880
        %v2882 = vpop.f32.mrb[0].mxu0
        %2883 = vdwg.mxu0
        %v2884 = vadd.f32 %v2822, %v2878
        %v2885 = vadd.f32 %v2823, %v2881
        %s2886 = scalar_lea.vmem %s1, 176
        %v2887 = vld [vmem:[%s2886] sm:$0xf]
        %v2890 = vrot.slane %v2771, 1
        %v2891 = vrot.slane %v2772, 1
        %v2892 = vsel %vm389, %v2890, %v2891
        %v2894 = vsel %vm290, %v2892, 0
        %v2897 = vsel %vm294, %v2887, 0
        %2899 = vmatprep.subr.bf16.mxu0 0
        %2900 = vmatpush1.bf16.msra.mxu0 %v2897
        %2901 = vmatprep.subr.bf16.mxu0 0
        %2902 = vmatpush1.bf16.msra.mxu0 0
        %2903 = vmatprep.subr.bf16.mxu0 0
        %2904 = vmatpush1.bf16.msra.mxu0 0
        %2905 = vmatprep.subr.bf16.mxu0 0
        %2906 = vmatpush1.bf16.msra.mxu0 0
        %2907 = vmatprep.subr.bf16.mxu0 0
        %2908 = vmatpush1.bf16.msra.mxu0 0
        %2909 = vmatprep.subr.bf16.mxu0 0
        %2910 = vmatpush1.bf16.msra.mxu0 0
        %2911 = vmatprep.subr.bf16.mxu0 0
        %2912 = vmatpush1.bf16.msra.mxu0 0
        %2913 = vmatprep.subr.bf16.mxu0 0
        %2914 = vmatpush1.bf16.msra.mxu0 0
        %2915 = vmatprep.subr.bf16.mxu0 0
        %2916 = vmatpush1.bf16.msra.mxu0 0
        %2917 = vmatprep.subr.bf16.mxu0 0
        %2918 = vmatpush1.bf16.msra.mxu0 0
        %2919 = vmatprep.subr.bf16.mxu0 0
        %2920 = vmatpush1.bf16.msra.mxu0 0
        %2921 = vmatprep.subr.bf16.mxu0 0
        %2922 = vmatpush1.bf16.msra.mxu0 0
        %2923 = vmatprep.subr.bf16.mxu0 0
        %2924 = vmatpush1.bf16.msra.mxu0 0
        %2925 = vmatprep.subr.bf16.mxu0 0
        %2926 = vmatpush1.bf16.msra.mxu0 0
        %2927 = vmatprep.subr.bf16.mxu0 0
        %2928 = vmatpush1.bf16.msra.mxu0 0
        %2929 = vmatprep.subr.bf16.mxu0 0
        %2930 = vmatpush1.bf16.msra.mxu0 0
        %2931 = vmatprep.mubr.bf16.mxu0 0
        %2932 = vmatmul.mubr.bf16.gmra.mrb[0].mxu0 %v2894
        %v2933 = vpop.f32.mrb[0].mxu0
        %v2934 = vadd.f32 0.0, %v2933
        %v2935 = vpop.f32.mrb[0].mxu0
        %v2936 = vpop.f32.mrb[0].mxu0
        %v2937 = vadd.f32 0.0, %v2936
        %v2938 = vpop.f32.mrb[0].mxu0
        %2939 = vdwg.mxu0
        %v2940 = vadd.f32 %v2884, %v2934
        %v2941 = vadd.f32 %v2885, %v2937
        %s2942 = scalar_lea.vmem %s1, 180
        %v2943 = vld [vmem:[%s2942] sm:$0xf]
        %v2944 = vrot.slane %v2826, 1
        %v2945 = vrot.slane %v2828, 2
        %v2946 = vor.u32 %v2944, %v2945
        %v2947 = vshrl.u32 %v2772, 16
        %v2949 = vrot.slane %v2947, 1
        %v2950 = vrot.slane %v2833, 2
        %v2951 = vor.u32 %v2949, %v2950
        %v2952 = vsel %vm444, %v2946, %v2951
        %v2954 = vsel %vm290, %v2952, 0
        %v2957 = vsel %vm294, %v2943, 0
        %2959 = vmatprep.subr.bf16.mxu0 0
        %2960 = vmatpush1.bf16.msra.mxu0 %v2957
        %2961 = vmatprep.subr.bf16.mxu0 0
        %2962 = vmatpush1.bf16.msra.mxu0 0
        %2963 = vmatprep.subr.bf16.mxu0 0
        %2964 = vmatpush1.bf16.msra.mxu0 0
        %2965 = vmatprep.subr.bf16.mxu0 0
        %2966 = vmatpush1.bf16.msra.mxu0 0
        %2967 = vmatprep.subr.bf16.mxu0 0
        %2968 = vmatpush1.bf16.msra.mxu0 0
        %2969 = vmatprep.subr.bf16.mxu0 0
        %2970 = vmatpush1.bf16.msra.mxu0 0
        %2971 = vmatprep.subr.bf16.mxu0 0
        %2972 = vmatpush1.bf16.msra.mxu0 0
        %2973 = vmatprep.subr.bf16.mxu0 0
        %2974 = vmatpush1.bf16.msra.mxu0 0
        %2975 = vmatprep.subr.bf16.mxu0 0
        %2976 = vmatpush1.bf16.msra.mxu0 0
        %2977 = vmatprep.subr.bf16.mxu0 0
        %2978 = vmatpush1.bf16.msra.mxu0 0
        %2979 = vmatprep.subr.bf16.mxu0 0
        %2980 = vmatpush1.bf16.msra.mxu0 0
        %2981 = vmatprep.subr.bf16.mxu0 0
        %2982 = vmatpush1.bf16.msra.mxu0 0
        %2983 = vmatprep.subr.bf16.mxu0 0
        %2984 = vmatpush1.bf16.msra.mxu0 0
        %2985 = vmatprep.subr.bf16.mxu0 0
        %2986 = vmatpush1.bf16.msra.mxu0 0
        %2987 = vmatprep.subr.bf16.mxu0 0
        %2988 = vmatpush1.bf16.msra.mxu0 0
        %2989 = vmatprep.subr.bf16.mxu0 0
        %2990 = vmatpush1.bf16.msra.mxu0 0
        %2991 = vmatprep.mubr.bf16.mxu0 0
        %2992 = vmatmul.mubr.bf16.gmra.mrb[0].mxu0 %v2954
        %v2993 = vpop.f32.mrb[0].mxu0
        %v2994 = vadd.f32 0.0, %v2993
        %v2995 = vpop.f32.mrb[0].mxu0
        %v2996 = vpop.f32.mrb[0].mxu0
        %v2997 = vadd.f32 0.0, %v2996
        %v2998 = vpop.f32.mrb[0].mxu0
        %2999 = vdwg.mxu0
        %v3000 = vadd.f32 %v2940, %v2994
        %v3001 = vadd.f32 %v2941, %v2997
        %s3002 = scalar_lea.vmem %s1, 184
        %v3003 = vld [vmem:[%s3002] sm:$0xf]
        %v3004 = vrot.slane %v2771, 2
        %v3005 = vrot.slane %v2772, 2
        %v3006 = vsel %vm505, %v3004, %v3005
        %v3008 = vsel %vm290, %v3006, 0
        %v3011 = vsel %vm294, %v3003, 0
        %3013 = vmatprep.subr.bf16.mxu0 0
        %3014 = vmatpush1.bf16.msra.mxu0 %v3011
        %3015 = vmatprep.subr.bf16.mxu0 0
        %3016 = vmatpush1.bf16.msra.mxu0 0
        %3017 = vmatprep.subr.bf16.mxu0 0
        %3018 = vmatpush1.bf16.msra.mxu0 0
        %3019 = vmatprep.subr.bf16.mxu0 0
        %3020 = vmatpush1.bf16.msra.mxu0 0
        %3021 = vmatprep.subr.bf16.mxu0 0
        %3022 = vmatpush1.bf16.msra.mxu0 0
        %3023 = vmatprep.subr.bf16.mxu0 0
        %3024 = vmatpush1.bf16.msra.mxu0 0
        %3025 = vmatprep.subr.bf16.mxu0 0
        %3026 = vmatpush1.bf16.msra.mxu0 0
        %3027 = vmatprep.subr.bf16.mxu0 0
        %3028 = vmatpush1.bf16.msra.mxu0 0
        %3029 = vmatprep.subr.bf16.mxu0 0
        %3030 = vmatpush1.bf16.msra.mxu0 0
        %3031 = vmatprep.subr.bf16.mxu0 0
        %3032 = vmatpush1.bf16.msra.mxu0 0
        %3033 = vmatprep.subr.bf16.mxu0 0
        %3034 = vmatpush1.bf16.msra.mxu0 0
        %3035 = vmatprep.subr.bf16.mxu0 0
        %3036 = vmatpush1.bf16.msra.mxu0 0
        %3037 = vmatprep.subr.bf16.mxu0 0
        %3038 = vmatpush1.bf16.msra.mxu0 0
        %3039 = vmatprep.subr.bf16.mxu0 0
        %3040 = vmatpush1.bf16.msra.mxu0 0
        %3041 = vmatprep.subr.bf16.mxu0 0
        %3042 = vmatpush1.bf16.msra.mxu0 0
        %3043 = vmatprep.subr.bf16.mxu0 0
        %3044 = vmatpush1.bf16.msra.mxu0 0
        %3045 = vmatprep.mubr.bf16.mxu0 0
        %3046 = vmatmul.mubr.bf16.gmra.mrb[0].mxu0 %v3008
        %v3047 = vpop.f32.mrb[0].mxu0
        %v3048 = vadd.f32 0.0, %v3047
        %v3049 = vpop.f32.mrb[0].mxu0
        %v3050 = vpop.f32.mrb[0].mxu0
        %v3051 = vadd.f32 0.0, %v3050
        %v3052 = vpop.f32.mrb[0].mxu0
        %3053 = vdwg.mxu0
        %v3054 = vadd.f32 %v3000, %v3048
        %v3055 = vadd.f32 %v3001, %v3051
        %s3056 = scalar_lea.vmem %s1, 188
        %v3057 = vld [vmem:[%s3056] sm:$0xf]
        %v3058 = vrot.slane %v2826, 2
        %v3059 = vrot.slane %v2828, 3
        %v3060 = vor.u32 %v3058, %v3059
        %v3061 = vrot.slane %v2947, 2
        %v3062 = vrot.slane %v2833, 3
        %v3063 = vor.u32 %v3061, %v3062
        %v3064 = vsel %vm560, %v3060, %v3063
        %v3066 = vsel %vm290, %v3064, 0
        %v3069 = vsel %vm294, %v3057, 0
        %3071 = vmatprep.subr.bf16.mxu0 0
        %3072 = vmatpush1.bf16.msra.mxu0 %v3069
        %3073 = vmatprep.subr.bf16.mxu0 0
        %3074 = vmatpush1.bf16.msra.mxu0 0
        %3075 = vmatprep.subr.bf16.mxu0 0
        %3076 = vmatpush1.bf16.msra.mxu0 0
        %3077 = vmatprep.subr.bf16.mxu0 0
        %3078 = vmatpush1.bf16.msra.mxu0 0
        %3079 = vmatprep.subr.bf16.mxu0 0
        %3080 = vmatpush1.bf16.msra.mxu0 0
        %3081 = vmatprep.subr.bf16.mxu0 0
        %3082 = vmatpush1.bf16.msra.mxu0 0
        %3083 = vmatprep.subr.bf16.mxu0 0
        %3084 = vmatpush1.bf16.msra.mxu0 0
        %3085 = vmatprep.subr.bf16.mxu0 0
        %3086 = vmatpush1.bf16.msra.mxu0 0
        %3087 = vmatprep.subr.bf16.mxu0 0
        %3088 = vmatpush1.bf16.msra.mxu0 0
        %3089 = vmatprep.subr.bf16.mxu0 0
        %3090 = vmatpush1.bf16.msra.mxu0 0
        %3091 = vmatprep.subr.bf16.mxu0 0
        %3092 = vmatpush1.bf16.msra.mxu0 0
        %3093 = vmatprep.subr.bf16.mxu0 0
        %3094 = vmatpush1.bf16.msra.mxu0 0
        %3095 = vmatprep.subr.bf16.mxu0 0
        %3096 = vmatpush1.bf16.msra.mxu0 0
        %3097 = vmatprep.subr.bf16.mxu0 0
        %3098 = vmatpush1.bf16.msra.mxu0 0
        %3099 = vmatprep.subr.bf16.mxu0 0
        %3100 = vmatpush1.bf16.msra.mxu0 0
        %3101 = vmatprep.subr.bf16.mxu0 0
        %3102 = vmatpush1.bf16.msra.mxu0 0
        %3103 = vmatprep.mubr.bf16.mxu0 0
        %3104 = vmatmul.mubr.bf16.gmra.mrb[0].mxu0 %v3066
        %v3105 = vpop.f32.mrb[0].mxu0
        %v3106 = vadd.f32 0.0, %v3105
        %v3107 = vpop.f32.mrb[0].mxu0
        %v3108 = vpop.f32.mrb[0].mxu0
        %v3109 = vadd.f32 0.0, %v3108
        %v3110 = vpop.f32.mrb[0].mxu0
        %3111 = vdwg.mxu0
        %v3112 = vadd.f32 %v3054, %v3106
        %v3113 = vadd.f32 %v3055, %v3109
        %s3114 = scalar_lea.vmem %s1, 192
        %v3115 = vld [vmem:[%s3114] sm:$0xf]
        %v3116 = vrot.slane %v2771, 3
        %v3117 = vrot.slane %v2772, 3
        %v3118 = vsel %vm619, %v3116, %v3117
        %v3120 = vsel %vm290, %v3118, 0
        %v3123 = vsel %vm294, %v3115, 0
        %3125 = vmatprep.subr.bf16.mxu0 0
        %3126 = vmatpush1.bf16.msra.mxu0 %v3123
        %3127 = vmatprep.subr.bf16.mxu0 0
        %3128 = vmatpush1.bf16.msra.mxu0 0
        %3129 = vmatprep.subr.bf16.mxu0 0
        %3130 = vmatpush1.bf16.msra.mxu0 0
        %3131 = vmatprep.subr.bf16.mxu0 0
        %3132 = vmatpush1.bf16.msra.mxu0 0
        %3133 = vmatprep.subr.bf16.mxu0 0
        %3134 = vmatpush1.bf16.msra.mxu0 0
        %3135 = vmatprep.subr.bf16.mxu0 0
        %3136 = vmatpush1.bf16.msra.mxu0 0
        %3137 = vmatprep.subr.bf16.mxu0 0
        %3138 = vmatpush1.bf16.msra.mxu0 0
        %3139 = vmatprep.subr.bf16.mxu0 0
        %3140 = vmatpush1.bf16.msra.mxu0 0
        %3141 = vmatprep.subr.bf16.mxu0 0
        %3142 = vmatpush1.bf16.msra.mxu0 0
        %3143 = vmatprep.subr.bf16.mxu0 0
        %3144 = vmatpush1.bf16.msra.mxu0 0
        %3145 = vmatprep.subr.bf16.mxu0 0
        %3146 = vmatpush1.bf16.msra.mxu0 0
        %3147 = vmatprep.subr.bf16.mxu0 0
        %3148 = vmatpush1.bf16.msra.mxu0 0
        %3149 = vmatprep.subr.bf16.mxu0 0
        %3150 = vmatpush1.bf16.msra.mxu0 0
        %3151 = vmatprep.subr.bf16.mxu0 0
        %3152 = vmatpush1.bf16.msra.mxu0 0
        %3153 = vmatprep.subr.bf16.mxu0 0
        %3154 = vmatpush1.bf16.msra.mxu0 0
        %3155 = vmatprep.subr.bf16.mxu0 0
        %3156 = vmatpush1.bf16.msra.mxu0 0
        %3157 = vmatprep.mubr.bf16.mxu0 0
        %3158 = vmatmul.mubr.bf16.gmra.mrb[0].mxu0 %v3120
        %v3159 = vpop.f32.mrb[0].mxu0
        %v3160 = vadd.f32 0.0, %v3159
        %v3161 = vpop.f32.mrb[0].mxu0
        %v3162 = vpop.f32.mrb[0].mxu0
        %v3163 = vadd.f32 0.0, %v3162
        %v3164 = vpop.f32.mrb[0].mxu0
        %3165 = vdwg.mxu0
        %v3166 = vadd.f32 %v3112, %v3160
        %v3167 = vadd.f32 %v3113, %v3163
        %v3168 = vld [vmem:[%s4] sm:$0x1]
        %v3170 = vlaneseq
        %v3171 = vshrl.u32 %v3170, 7
        %v3172 = vsub.s32 0, %v3171
        %v3173 = vrot.slane %v3168, %v3172
        %v3175 = vadd.f32 %v3166, %v3173
        %v3176 = vadd.f32 %v3167, %v3173
        %v3177 = vtanh.pop %v3175
        %v3178 = vtanh.pop %v3176
        %v3179 = vpack.c.bf16 %v3178, %v3177
        %v3181 = vunpack.c.l.b16 %v3179
        %v3182 = vunpack.c.h.b16 %v3179
        %v3183 = vpack.c.b16 %v3181, %v3181
        %v3184 = vpack.c.b16 %v3182, %v3182
        %s3187 = smul.u32 %s235, 2
        %s3188 = smul.addr %s3187, 4
        %s3189 = scalar_lea.vmem %s231, %s3188
        %3190 = vst [vmem:[%s3189] sm:$0xf] %v3183
        %3191 = vst [vmem:[%s3189 + $0x4] sm:$0xf] %v3184
      $region45: #{_lambda_.5} parent=39 // loop_footer
        %s239 = sadd.s32 1, %s235
      $region46: #{_lambda_.5} parent=39 // loop_footer_branch
        %234 = sbr.rel target = $region42
      $region47: #{_lambda_.5} parent=39 // loop_exit
        _
      %s3192 = smul.u32 16, %s16
      %p3193 = scmp.lt.s32.totalorder %s3192, 31
      %s3194 = scalar_select %p3193, %s3192, 31
      %s3195 = smul.addr %s3194, 2
      %s3196 = smul.addr %s3195, 4
      %s3197 = scalar_lea.vmem %s5, %s3196
      // Predicated region
      $region48: #{_lambda_.5} parent=39 // pred_check
        %p3198 = pneg %p144
      $region49: #{_lambda_.5} parent=39 // pred_check_branch
        %3200 = sbr.rel (%p3198) target = $region51
      $region50: #{_lambda_.5} parent=39 // pred_region
        %s3201 = smul.u32 16, %s16
      $region51: #{_lambda_.5} parent=39 // pred_fallthru
        _
    $region40: #{_lambda_.5} parent=5 // pred_fallthru
      _
    %p3202 = scmp.le.s32.totalorder 2, %s11
    // Predicated region
    $region52: #{_lambda_.5} parent=5 // pred_check
      %p3203 = pneg %p3202
    $region53: #{_lambda_.5} parent=5 // pred_check_branch
      %3205 = sbr.rel (%p3203) target = $region55
    $region54: #{_lambda_.5} parent=5 // pred_region
      %s3206 = ssub.s32 %s11, 2
      // Predicated region
      $region56: #{_lambda_.5} parent=54 // pred_check
        %p3207 = pneg %p150
      $region57: #{_lambda_.5} parent=54 // pred_check_branch
        %3209 = sbr.rel (%p3207) target = $region59
      $region58: #{_lambda_.5} parent=54 // pred_region
        %s3210 = smul.u32 16, %s17
        %p3211 = scmp.lt.s32.totalorder %s3210, 31
        %s3212 = scalar_select %p3211, %s3210, 31
        %s3213 = smul.addr %s3212, 2
        %s3214 = smul.addr %s3213, 4
        %s3215 = scalar_lea.vmem %s5, %s3214
      $region59: #{_lambda_.5} parent=54 // pred_fallthru
        _
    $region55: #{_lambda_.5} parent=5 // pred_fallthru
      _
  $region6: #{_lambda_.5} parent=0 // loop_footer
    %s15 = sadd.s32 1, %s11
  $region7: #{_lambda_.5} parent=0 // loop_footer_branch
    %10 = sbr.rel target = $region3
  $region8: #{_lambda_.5} parent=0 // loop_exit
    _

</llo_original>
